<compile_context>
chip_gen: v7x
topology: tpu7x:2x2x1
jax: 0.10.0
libtpu: 0.0.40
codegen_flags: <defaults>
</compile_context>

<pallas_src>
import functools

import jax
import jax.numpy as jnp
import numpy as np
from jax.experimental import pallas as pl
from jax.experimental.pallas import tpu as pltpu

HIDDEN = 32          # hidden_size
SEQ = 8              # seq_len
INTEREST = 4         # interest_num
ROUTING = 3          # routing_times
NCAP = INTEREST * HIDDEN     # 128 -- lane-dense working width

_HI = jax.lax.Precision.HIGHEST   # only used by the pure-JAX reference


def _round_up(x, m):
    return (x + m - 1) // m * m


def _split_bf16(v):
    """f32 -> (hi, lo) bf16 pair with hi + lo capturing ~16 mantissa bits of v."""
    hi = v.astype(jnp.bfloat16)
    lo = (v - hi.astype(jnp.float32)).astype(jnp.bfloat16)
    return hi, lo


def capsule_kernel(item_ref, mask_ref, w_hi_ref, w_lo_ref, g_ref, out_ref):
    # item_ref: (Bb, S*H) lane-dense f32; mask_ref: (Bb, S) f32;
    # w_hi_ref/w_lo_ref: (S*H, S*N) bf16 hi/lo block-diagonal bilinear weight;
    # g_ref: (N, N) bf16 0/1 capsule-group matrix; out_ref: (Bb, N) f32 lane-dense.
    Bb = item_ref.shape[0]
    S = mask_ref.shape[1]
    N = g_ref.shape[0]

    G = g_ref[...]                                   # (128, 128), exact in bf16

    def gdot(v):
        # v @ G as a 2-pass bf16 hi/lo split (G exact in bf16, f32 accumulation):
        # per-capsule lane-group sums broadcast back across each capsule's H lanes.
        hi, lo = _split_bf16(v)
        return (jnp.dot(hi, G, preferred_element_type=jnp.float32)
                + jnp.dot(lo, G, preferred_element_type=jnp.float32))

    # --- Fused bilinear map (hot path): one lane-dense K=256 MXU matmul, 3 bf16 passes. ---
    x = item_ref[...]                                # (Bb, 256) f32
    x_hi, x_lo = _split_bf16(x)
    hat_all = (jnp.dot(x_hi, w_hi_ref[...], preferred_element_type=jnp.float32)
               + jnp.dot(x_hi, w_lo_ref[...], preferred_element_type=jnp.float32)
               + jnp.dot(x_lo, w_hi_ref[...], preferred_element_type=jnp.float32))
    # Lane-aligned (multiple-of-128) slices of a value: free vreg selection.
    hat = [hat_all[:, s * N:(s + 1) * N] for s in range(S)]        # S x (Bb, 128)

    # Mask keep-factor (torch.where(mask == 0, 0, .)): one (Bb, 1) column per seq
    # position, lane-broadcast against the (Bb, 128) slabs.
    msk = mask_ref[...]                              # (Bb, S)
    keepm = jnp.where(msk == 0.0, 0.0, 1.0)
    keep = [keepm[:, s:s + 1] for s in range(S)]     # S x (Bb, 1)

    inv_seq = jnp.float32(1.0 / S)
    cw = None                                        # routing logits (zeros at iter 0)
    ic = None

    for it in range(ROUTING):
        if it == 0:
            # Peeled iteration: softmax(zeros) over seq is exactly uniform; apply the
            # mask WITHOUT renormalizing, exactly like the reference.
            sm = [keep[s] * inv_seq for s in range(S)]
        else:
            # Slab-wise softmax over the seq axis (pure VPU/EUP, no cross-lane work),
            # then zero masked positions without renormalizing.
            cmax = cw[0]
            for s in range(1, S):
                cmax = jnp.maximum(cmax, cw[s])
            es = [jnp.exp(cw[s] - cmax) for s in range(S)]
            denom = es[0]
            for s in range(1, S):
                denom = denom + es[s]
            # EUP approx reciprocal + one Newton step (~f32 accuracy, frees the VPU).
            inv = pl.reciprocal(denom, approx=True)
            inv = inv * (2.0 - denom * inv)
            sm = [es[s] * inv * keep[s] for s in range(S)]

        # interest_capsule[b, i*H + h] = sum_s sm[s][b, .] * hat[s][b, .]
        ic = sm[0] * hat[0]
        for s in range(1, S):
            ic = ic + sm[s] * hat[s]

        # squash: per-capsule squared norm broadcast over its H lanes via G (MXU).
        cap_norm = gdot(ic * ic)                                   # (Bb, 128)
        scalar = cap_norm / (1.0 + cap_norm) * jax.lax.rsqrt(cap_norm + 1e-9)
        ic = scalar * ic

        if it < ROUTING - 1:
            # Batched delta-logit update: ONE (S*Bb, 128)@(128, 128) G matmul per
            # iteration (sublane-aligned concat; G pushed to the MXU once).
            prod = jnp.concatenate([hat[s] * ic for s in range(S)], axis=0)
            delta_all = gdot(prod)                                 # (S*Bb, 128)
            delta = [delta_all[s * Bb:(s + 1) * Bb, :] for s in range(S)]
            cw = delta if cw is None else [cw[s] + delta[s] for s in range(S)]

    out_ref[...] = ic.astype(out_ref.dtype)


@functools.partial(jax.jit, static_argnames=("block_b",))
def capsule_network(item_eb, mask, w, *, block_b=256):
    """item_eb: (B, S, H) f32, mask: (B, S) {0,1}, w: (1, S, I*H, H) f32 -> (B, I, H)."""
    B, S, H = item_eb.shape
    N = INTEREST * HIDDEN

    # --- block sizing -------------------------------------------------------
    B8 = _round_up(B, 8)
    blk = max(8, (int(block_b) // 8) * 8)
    blk = min(blk, 1024)   # don't blow the VMEM budget (v7x has 64 MiB physical)
    # Cap the block so the grid has >=4 steps when the batch allows it: with
    # dimension_semantics=("parallel",) this lets v7x's two TensorCores split the
    # batch and gives DMA/compute overlap on every generation.
    blk = min(blk, max(8, _round_up((B8 + 3) // 4, 8)))
    Bb = min(blk, B8)
    Bp = _round_up(B, Bb)

    item_f = item_eb.astype(jnp.float32)
    mask_f = mask.astype(jnp.float32)
    if Bp != B:   # padded rows (zero item, zero mask) squash to exactly 0; dropped below
        item_f = jnp.pad(item_f, ((0, Bp - B), (0, 0), (0, 0)))
        mask_f = jnp.pad(mask_f, ((0, Bp - B), (0, 0)))

    # Lane-dense items: contiguous (free) reshape -- no HBM transpose pass.
    item_flat = item_f.reshape(Pp_rows := Bp, S * H)                # (Bp, 256)

    # Block-diagonal bilinear weight (built once, VMEM-resident, bf16 hi/lo):
    #   W_bd[s*H + h, s*N + n] = w[0, s, n, h]; zero off the seq diagonal.
    w_t = jnp.transpose(w[0].astype(jnp.float32), (0, 2, 1))        # (S, H, N) = (8, 32, 128)
    eye_s = jnp.eye(S, dtype=jnp.float32)
    w_bd = jnp.einsum("shn,st->shtn", w_t, eye_s).reshape(S * H, S * N)   # (256, 1024)
    w_hi = w_bd.astype(jnp.bfloat16)
    w_lo = (w_bd - w_hi.astype(jnp.float32)).astype(jnp.bfloat16)

    # Capsule-group block-diagonal 0/1 matrix (exact in bf16), built host-side once
    # and passed with a constant index_map instead of rebuilding iotas per grid step.
    lane = np.arange(N)
    g = jnp.asarray((lane[:, None] // HIDDEN) == (lane[None, :] // HIDDEN),
                    dtype=jnp.bfloat16)                             # (128, 128)

    grid_spec = pltpu.PrefetchScalarGridSpec(
        num_scalar_prefetch=0,
        grid=(Bp // Bb,),
        in_specs=[
            pl.BlockSpec((Bb, S * H), lambda b: (b, 0)),      # items, lane-dense (Bb, 256)
            pl.BlockSpec((Bb, S), lambda b: (b, 0)),          # mask
            pl.BlockSpec((S * H, S * N), lambda b: (0, 0)),   # W_hi, VMEM-resident
            pl.BlockSpec((S * H, S * N), lambda b: (0, 0)),   # W_lo, VMEM-resident
            pl.BlockSpec((N, N), lambda b: (0, 0)),           # G,    VMEM-resident
        ],
        out_specs=pl.BlockSpec((Bb, N), lambda b: (b, 0)),    # lane-dense (Bb, 128) output
    )
    out_flat = pl.pallas_call(
        capsule_kernel,
        out_shape=jax.ShapeDtypeStruct((Bp, N), jnp.float32),
        grid_spec=grid_spec,
        compiler_params=pltpu.CompilerParams(
            dimension_semantics=("parallel",),     # batch blocks independent -> v7x megacore
            vmem_limit_bytes=32 * 1024 * 1024,     # headroom over v5e's 16 MiB default; < v7x 64 MiB
        ),
    )(item_flat, mask_f, w_hi, w_lo, g)

    return out_flat[:B].reshape(B, INTEREST, HIDDEN)


def capsule_network_ref(item_eb, mask, w):
    """Pure-JAX mirror of the PyTorch forward (bilinear_type=2, relu_layer=False)."""
    B, S, H = item_eb.shape
    I = INTEREST
    u = item_eb[:, :, None, :]                                   # (B, S, 1, H)
    hat = jnp.sum(w[:, :S, :, :] * u, axis=3)                    # (B, S, I*H)
    hat = hat.reshape(B, S, I, H).transpose(0, 2, 1, 3)          # (B, I, S, H)
    cw = jnp.zeros((B, I, S), jnp.float32)
    am = jnp.broadcast_to(mask[:, None, :], (B, I, S))
    ic = None
    for i in range(ROUTING):
        sm = jax.nn.softmax(cw, axis=-1)
        sm = jnp.where(am == 0, 0.0, sm)
        smu = sm[:, :, None, :]                                  # (B, I, 1, S)
        ic = jnp.matmul(smu, hat, precision=_HI)                 # (B, I, 1, H)
        cn = jnp.sum(jnp.square(ic), -1, keepdims=True)
        sf = cn / (1.0 + cn) / jnp.sqrt(cn + 1e-9)
        ic = sf * ic
        if i < ROUTING - 1:
            dw = jnp.matmul(hat, jnp.swapaxes(ic, 2, 3), precision=_HI).reshape(B, I, S)
            cw = cw + dw
    return ic.reshape(B, I, H)


# TODO(synk): bilinear_type 0/1 (Linear projection) and the optional relu_layer
# Linear+ReLU head are not exercised by the default config and are not implemented.

if __name__ == "__main__":
    key = jax.random.PRNGKey(0)
    k1, k2, k3, k4, k5, k6 = jax.random.split(key, 6)

    # Shared deterministic weight: PyTorch parameter self.w of shape (1, S, I*H, H).
    w = 0.1 * jax.random.normal(k2, (1, SEQ, INTEREST * HIDDEN, HIDDEN), dtype=jnp.float32)

    # Case 1: tiny batch (exercises padding up to the 8-row sublane minimum, grid=1).
    B = 2
    item_eb = jax.random.normal(k1, (B, SEQ, HIDDEN), dtype=jnp.float32)
    mask = (jnp.arange(SEQ)[None, :] < jnp.array([[6], [8]])).astype(jnp.float32)

    out = jax.block_until_ready(capsule_network(item_eb, mask, w))
    ref = jax.block_until_ready(capsule_network_ref(item_eb, mask, w))
    assert out.shape == (B, INTEREST, HIDDEN)
    assert np.allclose(np.asarray(out), np.asarray(ref), atol=5e-4, rtol=5e-4), (
        float(np.max(np.abs(np.asarray(out) - np.asarray(ref)))))

    # Case 2: multi-block grid with explicit tiny blocks (B=20, 8-row blocks -> grid of 3).
    B2 = 20
    item2 = jax.random.normal(k3, (B2, SEQ, HIDDEN), dtype=jnp.float32)
    lens = jax.random.randint(k4, (B2, 1), 1, SEQ + 1)
    mask2 = (jnp.arange(SEQ)[None, :] < lens).astype(jnp.float32)
    out2 = jax.block_until_ready(capsule_network(item2, mask2, w, block_b=8))
    ref2 = jax.block_until_ready(capsule_network_ref(item2, mask2, w))
    assert np.allclose(np.asarray(out2), np.asarray(ref2), atol=5e-4, rtol=5e-4), (
        float(np.max(np.abs(np.asarray(out2) - np.asarray(ref2)))))

    # Case 3: default block sizing path (auto-cap to >=4 grid steps, batch padding).
    B3 = 40
    item3 = jax.random.normal(k5, (B3, SEQ, HIDDEN), dtype=jnp.float32)
    lens3 = jax.random.randint(k6, (B3, 1), 1, SEQ + 1)
    mask3 = (jnp.arange(SEQ)[None, :] < lens3).astype(jnp.float32)
    out3 = jax.block_until_ready(capsule_network(item3, mask3, w))
    ref3 = jax.block_until_ready(capsule_network_ref(item3, mask3, w))
    assert np.allclose(np.asarray(out3), np.asarray(ref3), atol=5e-4, rtol=5e-4), (
        float(np.max(np.abs(np.asarray(out3) - np.asarray(ref3)))))

    print("KERNEL_OK")
</pallas_src>

<mosaic_0001>
module attributes {stable_mosaic.version = 11 : i64} {
  func.func @capsule_kernel(%arg0: i32, %arg1: memref<8x256xf32, #tpu.memory_space<vmem>>, %arg2: memref<8x8xf32, #tpu.memory_space<vmem>>, %arg3: memref<256x1024xbf16, #tpu.memory_space<vmem>>, %arg4: memref<256x1024xbf16, #tpu.memory_space<vmem>>, %arg5: memref<128x128xbf16, #tpu.memory_space<vmem>>, %arg6: memref<8x128xf32, #tpu.memory_space<vmem>>) attributes {dimension_semantics = [#tpu.dimension_semantics<parallel>], iteration_bounds = array<i64: 1>, scalar_prefetch = 0 : i64, scratch_operands = 0 : i64, tpu.core_type = #tpu.core_type<tc>, window_params = [{transform_indices = @transform_0, window_bounds = array<i64: 8, 256>}, {transform_indices = @transform_1, window_bounds = array<i64: 8, 8>}, {pipeline_mode = #tpu.pipeline_mode<synchronous>, transform_indices = @transform_2, window_bounds = array<i64: 256, 1024>}, {pipeline_mode = #tpu.pipeline_mode<synchronous>, transform_indices = @transform_3, window_bounds = array<i64: 256, 1024>}, {pipeline_mode = #tpu.pipeline_mode<synchronous>, transform_indices = @transform_4, window_bounds = array<i64: 128, 128>}, {transform_indices = @transform_5, window_bounds = array<i64: 8, 128>}]} {
    %c0 = arith.constant 0 : index
    %c0_0 = arith.constant 0 : index
    %0 = vector.load %arg5[%c0, %c0_0] : memref<128x128xbf16, #tpu.memory_space<vmem>>, vector<128x128xbf16>
    %c0_1 = arith.constant 0 : index
    %c0_2 = arith.constant 0 : index
    %1 = vector.load %arg1[%c0_1, %c0_2] : memref<8x256xf32, #tpu.memory_space<vmem>>, vector<8x256xf32>
    %2 = arith.truncf %1 : vector<8x256xf32> to vector<8x256xbf16>
    %3 = arith.extf %2 : vector<8x256xbf16> to vector<8x256xf32>
    %4 = arith.subf %1, %3 : vector<8x256xf32>
    %5 = arith.truncf %4 : vector<8x256xf32> to vector<8x256xbf16>
    %c0_3 = arith.constant 0 : index
    %c0_4 = arith.constant 0 : index
    %6 = vector.load %arg3[%c0_3, %c0_4] : memref<256x1024xbf16, #tpu.memory_space<vmem>>, vector<256x1024xbf16>
    %cst = arith.constant dense<0.000000e+00> : vector<8x1024xf32>
    %7 = tpu.matmul %2, %6, %cst {dimension_numbers = #tpu.dot_dimension_numbers<[1], [0], [0], [1], [0, 0, 1, 1], [], []>} : vector<8x256xbf16>, vector<256x1024xbf16>, vector<8x1024xf32> -> vector<8x1024xf32>
    %c0_5 = arith.constant 0 : index
    %c0_6 = arith.constant 0 : index
    %8 = vector.load %arg4[%c0_5, %c0_6] : memref<256x1024xbf16, #tpu.memory_space<vmem>>, vector<256x1024xbf16>
    %cst_7 = arith.constant dense<0.000000e+00> : vector<8x1024xf32>
    %9 = tpu.matmul %2, %8, %cst_7 {dimension_numbers = #tpu.dot_dimension_numbers<[1], [0], [0], [1], [0, 0, 1, 1], [], []>} : vector<8x256xbf16>, vector<256x1024xbf16>, vector<8x1024xf32> -> vector<8x1024xf32>
    %10 = arith.addf %7, %9 : vector<8x1024xf32>
    %c0_8 = arith.constant 0 : index
    %c0_9 = arith.constant 0 : index
    %11 = vector.load %arg3[%c0_8, %c0_9] : memref<256x1024xbf16, #tpu.memory_space<vmem>>, vector<256x1024xbf16>
    %cst_10 = arith.constant dense<0.000000e+00> : vector<8x1024xf32>
    %12 = tpu.matmul %5, %11, %cst_10 {dimension_numbers = #tpu.dot_dimension_numbers<[1], [0], [0], [1], [0, 0, 1, 1], [], []>} : vector<8x256xbf16>, vector<256x1024xbf16>, vector<8x1024xf32> -> vector<8x1024xf32>
    %13 = arith.addf %10, %12 : vector<8x1024xf32>
    %14 = vector.extract_strided_slice %13 {offsets = [0, 0], sizes = [8, 128], strides = [1, 1]} : vector<8x1024xf32> to vector<8x128xf32>
    %15 = vector.extract_strided_slice %13 {offsets = [0, 128], sizes = [8, 128], strides = [1, 1]} : vector<8x1024xf32> to vector<8x128xf32>
    %16 = vector.extract_strided_slice %13 {offsets = [0, 256], sizes = [8, 128], strides = [1, 1]} : vector<8x1024xf32> to vector<8x128xf32>
    %17 = vector.extract_strided_slice %13 {offsets = [0, 384], sizes = [8, 128], strides = [1, 1]} : vector<8x1024xf32> to vector<8x128xf32>
    %18 = vector.extract_strided_slice %13 {offsets = [0, 512], sizes = [8, 128], strides = [1, 1]} : vector<8x1024xf32> to vector<8x128xf32>
    %19 = vector.extract_strided_slice %13 {offsets = [0, 640], sizes = [8, 128], strides = [1, 1]} : vector<8x1024xf32> to vector<8x128xf32>
    %20 = vector.extract_strided_slice %13 {offsets = [0, 768], sizes = [8, 128], strides = [1, 1]} : vector<8x1024xf32> to vector<8x128xf32>
    %21 = vector.extract_strided_slice %13 {offsets = [0, 896], sizes = [8, 128], strides = [1, 1]} : vector<8x1024xf32> to vector<8x128xf32>
    %c0_11 = arith.constant 0 : index
    %c0_12 = arith.constant 0 : index
    %22 = vector.load %arg2[%c0_11, %c0_12] : memref<8x8xf32, #tpu.memory_space<vmem>>, vector<8x8xf32>
    %cst_13 = arith.constant 0.000000e+00 : f32
    %23 = vector.broadcast %cst_13 : f32 to vector<8x8xf32>
    %24 = arith.cmpf oeq, %22, %23 : vector<8x8xf32>
    %cst_14 = arith.constant 0.000000e+00 : f32
    %cst_15 = arith.constant 1.000000e+00 : f32
    %25 = vector.broadcast %cst_14 : f32 to vector<8x8xf32>
    %26 = vector.broadcast %cst_15 : f32 to vector<8x8xf32>
    %27 = arith.select %24, %25, %26 : vector<8x8xi1>, vector<8x8xf32>
    %28 = vector.extract_strided_slice %27 {offsets = [0, 0], sizes = [8, 1], strides = [1, 1]} : vector<8x8xf32> to vector<8x1xf32>
    %29 = vector.extract_strided_slice %27 {offsets = [0, 1], sizes = [8, 1], strides = [1, 1]} : vector<8x8xf32> to vector<8x1xf32>
    %30 = vector.extract_strided_slice %27 {offsets = [0, 2], sizes = [8, 1], strides = [1, 1]} : vector<8x8xf32> to vector<8x1xf32>
    %31 = vector.extract_strided_slice %27 {offsets = [0, 3], sizes = [8, 1], strides = [1, 1]} : vector<8x8xf32> to vector<8x1xf32>
    %32 = vector.extract_strided_slice %27 {offsets = [0, 4], sizes = [8, 1], strides = [1, 1]} : vector<8x8xf32> to vector<8x1xf32>
    %33 = vector.extract_strided_slice %27 {offsets = [0, 5], sizes = [8, 1], strides = [1, 1]} : vector<8x8xf32> to vector<8x1xf32>
    %34 = vector.extract_strided_slice %27 {offsets = [0, 6], sizes = [8, 1], strides = [1, 1]} : vector<8x8xf32> to vector<8x1xf32>
    %35 = vector.extract_strided_slice %27 {offsets = [0, 7], sizes = [8, 1], strides = [1, 1]} : vector<8x8xf32> to vector<8x1xf32>
    %cst_16 = arith.constant 1.250000e-01 : f32
    %36 = vector.broadcast %cst_16 : f32 to vector<8x1xf32>
    %37 = arith.mulf %28, %36 : vector<8x1xf32>
    %cst_17 = arith.constant 1.250000e-01 : f32
    %38 = vector.broadcast %cst_17 : f32 to vector<8x1xf32>
    %39 = arith.mulf %29, %38 : vector<8x1xf32>
    %cst_18 = arith.constant 1.250000e-01 : f32
    %40 = vector.broadcast %cst_18 : f32 to vector<8x1xf32>
    %41 = arith.mulf %30, %40 : vector<8x1xf32>
    %cst_19 = arith.constant 1.250000e-01 : f32
    %42 = vector.broadcast %cst_19 : f32 to vector<8x1xf32>
    %43 = arith.mulf %31, %42 : vector<8x1xf32>
    %cst_20 = arith.constant 1.250000e-01 : f32
    %44 = vector.broadcast %cst_20 : f32 to vector<8x1xf32>
    %45 = arith.mulf %32, %44 : vector<8x1xf32>
    %cst_21 = arith.constant 1.250000e-01 : f32
    %46 = vector.broadcast %cst_21 : f32 to vector<8x1xf32>
    %47 = arith.mulf %33, %46 : vector<8x1xf32>
    %cst_22 = arith.constant 1.250000e-01 : f32
    %48 = vector.broadcast %cst_22 : f32 to vector<8x1xf32>
    %49 = arith.mulf %34, %48 : vector<8x1xf32>
    %cst_23 = arith.constant 1.250000e-01 : f32
    %50 = vector.broadcast %cst_23 : f32 to vector<8x1xf32>
    %51 = arith.mulf %35, %50 : vector<8x1xf32>
    %52 = vector.broadcast %37 : vector<8x1xf32> to vector<8x128xf32>
    %53 = arith.mulf %52, %14 : vector<8x128xf32>
    %54 = vector.broadcast %39 : vector<8x1xf32> to vector<8x128xf32>
    %55 = arith.mulf %54, %15 : vector<8x128xf32>
    %56 = arith.addf %53, %55 : vector<8x128xf32>
    %57 = vector.broadcast %41 : vector<8x1xf32> to vector<8x128xf32>
    %58 = arith.mulf %57, %16 : vector<8x128xf32>
    %59 = arith.addf %56, %58 : vector<8x128xf32>
    %60 = vector.broadcast %43 : vector<8x1xf32> to vector<8x128xf32>
    %61 = arith.mulf %60, %17 : vector<8x128xf32>
    %62 = arith.addf %59, %61 : vector<8x128xf32>
    %63 = vector.broadcast %45 : vector<8x1xf32> to vector<8x128xf32>
    %64 = arith.mulf %63, %18 : vector<8x128xf32>
    %65 = arith.addf %62, %64 : vector<8x128xf32>
    %66 = vector.broadcast %47 : vector<8x1xf32> to vector<8x128xf32>
    %67 = arith.mulf %66, %19 : vector<8x128xf32>
    %68 = arith.addf %65, %67 : vector<8x128xf32>
    %69 = vector.broadcast %49 : vector<8x1xf32> to vector<8x128xf32>
    %70 = arith.mulf %69, %20 : vector<8x128xf32>
    %71 = arith.addf %68, %70 : vector<8x128xf32>
    %72 = vector.broadcast %51 : vector<8x1xf32> to vector<8x128xf32>
    %73 = arith.mulf %72, %21 : vector<8x128xf32>
    %74 = arith.addf %71, %73 : vector<8x128xf32>
    %75 = arith.mulf %74, %74 : vector<8x128xf32>
    %76 = arith.truncf %75 : vector<8x128xf32> to vector<8x128xbf16>
    %77 = arith.extf %76 : vector<8x128xbf16> to vector<8x128xf32>
    %78 = arith.subf %75, %77 : vector<8x128xf32>
    %79 = arith.truncf %78 : vector<8x128xf32> to vector<8x128xbf16>
    %cst_24 = arith.constant dense<0.000000e+00> : vector<8x128xf32>
    %80 = tpu.matmul %76, %0, %cst_24 {dimension_numbers = #tpu.dot_dimension_numbers<[1], [0], [0], [1], [0, 0, 1, 1], [], []>} : vector<8x128xbf16>, vector<128x128xbf16>, vector<8x128xf32> -> vector<8x128xf32>
    %cst_25 = arith.constant dense<0.000000e+00> : vector<8x128xf32>
    %81 = tpu.matmul %79, %0, %cst_25 {dimension_numbers = #tpu.dot_dimension_numbers<[1], [0], [0], [1], [0, 0, 1, 1], [], []>} : vector<8x128xbf16>, vector<128x128xbf16>, vector<8x128xf32> -> vector<8x128xf32>
    %82 = arith.addf %80, %81 : vector<8x128xf32>
    %cst_26 = arith.constant 1.000000e+00 : f32
    %83 = vector.broadcast %cst_26 : f32 to vector<8x128xf32>
    %84 = arith.addf %83, %82 : vector<8x128xf32>
    %85 = arith.divf %82, %84 : vector<8x128xf32>
    %cst_27 = arith.constant 9.99999971E-10 : f32
    %86 = vector.broadcast %cst_27 : f32 to vector<8x128xf32>
    %87 = arith.addf %82, %86 : vector<8x128xf32>
    %88 = math.rsqrt %87 : vector<8x128xf32>
    %89 = arith.mulf %85, %88 : vector<8x128xf32>
    %90 = arith.mulf %89, %74 : vector<8x128xf32>
    %91 = arith.mulf %14, %90 : vector<8x128xf32>
    %92 = arith.mulf %15, %90 : vector<8x128xf32>
    %93 = arith.mulf %16, %90 : vector<8x128xf32>
    %94 = arith.mulf %17, %90 : vector<8x128xf32>
    %95 = arith.mulf %18, %90 : vector<8x128xf32>
    %96 = arith.mulf %19, %90 : vector<8x128xf32>
    %97 = arith.mulf %20, %90 : vector<8x128xf32>
    %98 = arith.mulf %21, %90 : vector<8x128xf32>
    %99 = tpu.concatenate %91, %92, %93, %94, %95, %96, %97, %98 in 0 : vector<8x128xf32>, vector<8x128xf32>, vector<8x128xf32>, vector<8x128xf32>, vector<8x128xf32>, vector<8x128xf32>, vector<8x128xf32>, vector<8x128xf32> -> vector<64x128xf32>
    %100 = arith.truncf %99 : vector<64x128xf32> to vector<64x128xbf16>
    %101 = arith.extf %100 : vector<64x128xbf16> to vector<64x128xf32>
    %102 = arith.subf %99, %101 : vector<64x128xf32>
    %103 = arith.truncf %102 : vector<64x128xf32> to vector<64x128xbf16>
    %cst_28 = arith.constant dense<0.000000e+00> : vector<64x128xf32>
    %104 = tpu.matmul %100, %0, %cst_28 {dimension_numbers = #tpu.dot_dimension_numbers<[1], [0], [0], [1], [0, 0, 1, 1], [], []>} : vector<64x128xbf16>, vector<128x128xbf16>, vector<64x128xf32> -> vector<64x128xf32>
    %cst_29 = arith.constant dense<0.000000e+00> : vector<64x128xf32>
    %105 = tpu.matmul %103, %0, %cst_29 {dimension_numbers = #tpu.dot_dimension_numbers<[1], [0], [0], [1], [0, 0, 1, 1], [], []>} : vector<64x128xbf16>, vector<128x128xbf16>, vector<64x128xf32> -> vector<64x128xf32>
    %106 = arith.addf %104, %105 : vector<64x128xf32>
    %107 = vector.extract_strided_slice %106 {offsets = [0, 0], sizes = [8, 128], strides = [1, 1]} : vector<64x128xf32> to vector<8x128xf32>
    %108 = vector.extract_strided_slice %106 {offsets = [8, 0], sizes = [8, 128], strides = [1, 1]} : vector<64x128xf32> to vector<8x128xf32>
    %109 = vector.extract_strided_slice %106 {offsets = [16, 0], sizes = [8, 128], strides = [1, 1]} : vector<64x128xf32> to vector<8x128xf32>
    %110 = vector.extract_strided_slice %106 {offsets = [24, 0], sizes = [8, 128], strides = [1, 1]} : vector<64x128xf32> to vector<8x128xf32>
    %111 = vector.extract_strided_slice %106 {offsets = [32, 0], sizes = [8, 128], strides = [1, 1]} : vector<64x128xf32> to vector<8x128xf32>
    %112 = vector.extract_strided_slice %106 {offsets = [40, 0], sizes = [8, 128], strides = [1, 1]} : vector<64x128xf32> to vector<8x128xf32>
    %113 = vector.extract_strided_slice %106 {offsets = [48, 0], sizes = [8, 128], strides = [1, 1]} : vector<64x128xf32> to vector<8x128xf32>
    %114 = vector.extract_strided_slice %106 {offsets = [56, 0], sizes = [8, 128], strides = [1, 1]} : vector<64x128xf32> to vector<8x128xf32>
    %115 = arith.maximumf %107, %108 : vector<8x128xf32>
    %116 = arith.maximumf %115, %109 : vector<8x128xf32>
    %117 = arith.maximumf %116, %110 : vector<8x128xf32>
    %118 = arith.maximumf %117, %111 : vector<8x128xf32>
    %119 = arith.maximumf %118, %112 : vector<8x128xf32>
    %120 = arith.maximumf %119, %113 : vector<8x128xf32>
    %121 = arith.maximumf %120, %114 : vector<8x128xf32>
    %122 = arith.subf %107, %121 : vector<8x128xf32>
    %123 = math.exp %122 : vector<8x128xf32>
    %124 = arith.subf %108, %121 : vector<8x128xf32>
    %125 = math.exp %124 : vector<8x128xf32>
    %126 = arith.subf %109, %121 : vector<8x128xf32>
    %127 = math.exp %126 : vector<8x128xf32>
    %128 = arith.subf %110, %121 : vector<8x128xf32>
    %129 = math.exp %128 : vector<8x128xf32>
    %130 = arith.subf %111, %121 : vector<8x128xf32>
    %131 = math.exp %130 : vector<8x128xf32>
    %132 = arith.subf %112, %121 : vector<8x128xf32>
    %133 = math.exp %132 : vector<8x128xf32>
    %134 = arith.subf %113, %121 : vector<8x128xf32>
    %135 = math.exp %134 : vector<8x128xf32>
    %136 = arith.subf %114, %121 : vector<8x128xf32>
    %137 = math.exp %136 : vector<8x128xf32>
    %138 = arith.addf %123, %125 : vector<8x128xf32>
    %139 = arith.addf %138, %127 : vector<8x128xf32>
    %140 = arith.addf %139, %129 : vector<8x128xf32>
    %141 = arith.addf %140, %131 : vector<8x128xf32>
    %142 = arith.addf %141, %133 : vector<8x128xf32>
    %143 = arith.addf %142, %135 : vector<8x128xf32>
    %144 = arith.addf %143, %137 : vector<8x128xf32>
    %145 = tpu.reciprocal %144 {approx = true} : vector<8x128xf32> -> vector<8x128xf32>
    %146 = arith.mulf %144, %145 : vector<8x128xf32>
    %cst_30 = arith.constant 2.000000e+00 : f32
    %147 = vector.broadcast %cst_30 : f32 to vector<8x128xf32>
    %148 = arith.subf %147, %146 : vector<8x128xf32>
    %149 = arith.mulf %145, %148 : vector<8x128xf32>
    %150 = arith.mulf %123, %149 : vector<8x128xf32>
    %151 = vector.broadcast %28 : vector<8x1xf32> to vector<8x128xf32>
    %152 = arith.mulf %150, %151 : vector<8x128xf32>
    %153 = arith.mulf %125, %149 : vector<8x128xf32>
    %154 = vector.broadcast %29 : vector<8x1xf32> to vector<8x128xf32>
    %155 = arith.mulf %153, %154 : vector<8x128xf32>
    %156 = arith.mulf %127, %149 : vector<8x128xf32>
    %157 = vector.broadcast %30 : vector<8x1xf32> to vector<8x128xf32>
    %158 = arith.mulf %156, %157 : vector<8x128xf32>
    %159 = arith.mulf %129, %149 : vector<8x128xf32>
    %160 = vector.broadcast %31 : vector<8x1xf32> to vector<8x128xf32>
    %161 = arith.mulf %159, %160 : vector<8x128xf32>
    %162 = arith.mulf %131, %149 : vector<8x128xf32>
    %163 = vector.broadcast %32 : vector<8x1xf32> to vector<8x128xf32>
    %164 = arith.mulf %162, %163 : vector<8x128xf32>
    %165 = arith.mulf %133, %149 : vector<8x128xf32>
    %166 = vector.broadcast %33 : vector<8x1xf32> to vector<8x128xf32>
    %167 = arith.mulf %165, %166 : vector<8x128xf32>
    %168 = arith.mulf %135, %149 : vector<8x128xf32>
    %169 = vector.broadcast %34 : vector<8x1xf32> to vector<8x128xf32>
    %170 = arith.mulf %168, %169 : vector<8x128xf32>
    %171 = arith.mulf %137, %149 : vector<8x128xf32>
    %172 = vector.broadcast %35 : vector<8x1xf32> to vector<8x128xf32>
    %173 = arith.mulf %171, %172 : vector<8x128xf32>
    %174 = arith.mulf %152, %14 : vector<8x128xf32>
    %175 = arith.mulf %155, %15 : vector<8x128xf32>
    %176 = arith.addf %174, %175 : vector<8x128xf32>
    %177 = arith.mulf %158, %16 : vector<8x128xf32>
    %178 = arith.addf %176, %177 : vector<8x128xf32>
    %179 = arith.mulf %161, %17 : vector<8x128xf32>
    %180 = arith.addf %178, %179 : vector<8x128xf32>
    %181 = arith.mulf %164, %18 : vector<8x128xf32>
    %182 = arith.addf %180, %181 : vector<8x128xf32>
    %183 = arith.mulf %167, %19 : vector<8x128xf32>
    %184 = arith.addf %182, %183 : vector<8x128xf32>
    %185 = arith.mulf %170, %20 : vector<8x128xf32>
    %186 = arith.addf %184, %185 : vector<8x128xf32>
    %187 = arith.mulf %173, %21 : vector<8x128xf32>
    %188 = arith.addf %186, %187 : vector<8x128xf32>
    %189 = arith.mulf %188, %188 : vector<8x128xf32>
    %190 = arith.truncf %189 : vector<8x128xf32> to vector<8x128xbf16>
    %191 = arith.extf %190 : vector<8x128xbf16> to vector<8x128xf32>
    %192 = arith.subf %189, %191 : vector<8x128xf32>
    %193 = arith.truncf %192 : vector<8x128xf32> to vector<8x128xbf16>
    %cst_31 = arith.constant dense<0.000000e+00> : vector<8x128xf32>
    %194 = tpu.matmul %190, %0, %cst_31 {dimension_numbers = #tpu.dot_dimension_numbers<[1], [0], [0], [1], [0, 0, 1, 1], [], []>} : vector<8x128xbf16>, vector<128x128xbf16>, vector<8x128xf32> -> vector<8x128xf32>
    %cst_32 = arith.constant dense<0.000000e+00> : vector<8x128xf32>
    %195 = tpu.matmul %193, %0, %cst_32 {dimension_numbers = #tpu.dot_dimension_numbers<[1], [0], [0], [1], [0, 0, 1, 1], [], []>} : vector<8x128xbf16>, vector<128x128xbf16>, vector<8x128xf32> -> vector<8x128xf32>
    %196 = arith.addf %194, %195 : vector<8x128xf32>
    %cst_33 = arith.constant 1.000000e+00 : f32
    %197 = vector.broadcast %cst_33 : f32 to vector<8x128xf32>
    %198 = arith.addf %197, %196 : vector<8x128xf32>
    %199 = arith.divf %196, %198 : vector<8x128xf32>
    %cst_34 = arith.constant 9.99999971E-10 : f32
    %200 = vector.broadcast %cst_34 : f32 to vector<8x128xf32>
    %201 = arith.addf %196, %200 : vector<8x128xf32>
    %202 = math.rsqrt %201 : vector<8x128xf32>
    %203 = arith.mulf %199, %202 : vector<8x128xf32>
    %204 = arith.mulf %203, %188 : vector<8x128xf32>
    %205 = arith.mulf %14, %204 : vector<8x128xf32>
    %206 = arith.mulf %15, %204 : vector<8x128xf32>
    %207 = arith.mulf %16, %204 : vector<8x128xf32>
    %208 = arith.mulf %17, %204 : vector<8x128xf32>
    %209 = arith.mulf %18, %204 : vector<8x128xf32>
    %210 = arith.mulf %19, %204 : vector<8x128xf32>
    %211 = arith.mulf %20, %204 : vector<8x128xf32>
    %212 = arith.mulf %21, %204 : vector<8x128xf32>
    %213 = tpu.concatenate %205, %206, %207, %208, %209, %210, %211, %212 in 0 : vector<8x128xf32>, vector<8x128xf32>, vector<8x128xf32>, vector<8x128xf32>, vector<8x128xf32>, vector<8x128xf32>, vector<8x128xf32>, vector<8x128xf32> -> vector<64x128xf32>
    %214 = arith.truncf %213 : vector<64x128xf32> to vector<64x128xbf16>
    %215 = arith.extf %214 : vector<64x128xbf16> to vector<64x128xf32>
    %216 = arith.subf %213, %215 : vector<64x128xf32>
    %217 = arith.truncf %216 : vector<64x128xf32> to vector<64x128xbf16>
    %cst_35 = arith.constant dense<0.000000e+00> : vector<64x128xf32>
    %218 = tpu.matmul %214, %0, %cst_35 {dimension_numbers = #tpu.dot_dimension_numbers<[1], [0], [0], [1], [0, 0, 1, 1], [], []>} : vector<64x128xbf16>, vector<128x128xbf16>, vector<64x128xf32> -> vector<64x128xf32>
    %cst_36 = arith.constant dense<0.000000e+00> : vector<64x128xf32>
    %219 = tpu.matmul %217, %0, %cst_36 {dimension_numbers = #tpu.dot_dimension_numbers<[1], [0], [0], [1], [0, 0, 1, 1], [], []>} : vector<64x128xbf16>, vector<128x128xbf16>, vector<64x128xf32> -> vector<64x128xf32>
    %220 = arith.addf %218, %219 : vector<64x128xf32>
    %221 = vector.extract_strided_slice %220 {offsets = [0, 0], sizes = [8, 128], strides = [1, 1]} : vector<64x128xf32> to vector<8x128xf32>
    %222 = vector.extract_strided_slice %220 {offsets = [8, 0], sizes = [8, 128], strides = [1, 1]} : vector<64x128xf32> to vector<8x128xf32>
    %223 = vector.extract_strided_slice %220 {offsets = [16, 0], sizes = [8, 128], strides = [1, 1]} : vector<64x128xf32> to vector<8x128xf32>
    %224 = vector.extract_strided_slice %220 {offsets = [24, 0], sizes = [8, 128], strides = [1, 1]} : vector<64x128xf32> to vector<8x128xf32>
    %225 = vector.extract_strided_slice %220 {offsets = [32, 0], sizes = [8, 128], strides = [1, 1]} : vector<64x128xf32> to vector<8x128xf32>
    %226 = vector.extract_strided_slice %220 {offsets = [40, 0], sizes = [8, 128], strides = [1, 1]} : vector<64x128xf32> to vector<8x128xf32>
    %227 = vector.extract_strided_slice %220 {offsets = [48, 0], sizes = [8, 128], strides = [1, 1]} : vector<64x128xf32> to vector<8x128xf32>
    %228 = vector.extract_strided_slice %220 {offsets = [56, 0], sizes = [8, 128], strides = [1, 1]} : vector<64x128xf32> to vector<8x128xf32>
    %229 = arith.addf %107, %221 : vector<8x128xf32>
    %230 = arith.addf %108, %222 : vector<8x128xf32>
    %231 = arith.addf %109, %223 : vector<8x128xf32>
    %232 = arith.addf %110, %224 : vector<8x128xf32>
    %233 = arith.addf %111, %225 : vector<8x128xf32>
    %234 = arith.addf %112, %226 : vector<8x128xf32>
    %235 = arith.addf %113, %227 : vector<8x128xf32>
    %236 = arith.addf %114, %228 : vector<8x128xf32>
    %237 = arith.maximumf %229, %230 : vector<8x128xf32>
    %238 = arith.maximumf %237, %231 : vector<8x128xf32>
    %239 = arith.maximumf %238, %232 : vector<8x128xf32>
    %240 = arith.maximumf %239, %233 : vector<8x128xf32>
    %241 = arith.maximumf %240, %234 : vector<8x128xf32>
    %242 = arith.maximumf %241, %235 : vector<8x128xf32>
    %243 = arith.maximumf %242, %236 : vector<8x128xf32>
    %244 = arith.subf %229, %243 : vector<8x128xf32>
    %245 = math.exp %244 : vector<8x128xf32>
    %246 = arith.subf %230, %243 : vector<8x128xf32>
    %247 = math.exp %246 : vector<8x128xf32>
    %248 = arith.subf %231, %243 : vector<8x128xf32>
    %249 = math.exp %248 : vector<8x128xf32>
    %250 = arith.subf %232, %243 : vector<8x128xf32>
    %251 = math.exp %250 : vector<8x128xf32>
    %252 = arith.subf %233, %243 : vector<8x128xf32>
    %253 = math.exp %252 : vector<8x128xf32>
    %254 = arith.subf %234, %243 : vector<8x128xf32>
    %255 = math.exp %254 : vector<8x128xf32>
    %256 = arith.subf %235, %243 : vector<8x128xf32>
    %257 = math.exp %256 : vector<8x128xf32>
    %258 = arith.subf %236, %243 : vector<8x128xf32>
    %259 = math.exp %258 : vector<8x128xf32>
    %260 = arith.addf %245, %247 : vector<8x128xf32>
    %261 = arith.addf %260, %249 : vector<8x128xf32>
    %262 = arith.addf %261, %251 : vector<8x128xf32>
    %263 = arith.addf %262, %253 : vector<8x128xf32>
    %264 = arith.addf %263, %255 : vector<8x128xf32>
    %265 = arith.addf %264, %257 : vector<8x128xf32>
    %266 = arith.addf %265, %259 : vector<8x128xf32>
    %267 = tpu.reciprocal %266 {approx = true} : vector<8x128xf32> -> vector<8x128xf32>
    %268 = arith.mulf %266, %267 : vector<8x128xf32>
    %cst_37 = arith.constant 2.000000e+00 : f32
    %269 = vector.broadcast %cst_37 : f32 to vector<8x128xf32>
    %270 = arith.subf %269, %268 : vector<8x128xf32>
    %271 = arith.mulf %267, %270 : vector<8x128xf32>
    %272 = arith.mulf %245, %271 : vector<8x128xf32>
    %273 = vector.broadcast %28 : vector<8x1xf32> to vector<8x128xf32>
    %274 = arith.mulf %272, %273 : vector<8x128xf32>
    %275 = arith.mulf %247, %271 : vector<8x128xf32>
    %276 = vector.broadcast %29 : vector<8x1xf32> to vector<8x128xf32>
    %277 = arith.mulf %275, %276 : vector<8x128xf32>
    %278 = arith.mulf %249, %271 : vector<8x128xf32>
    %279 = vector.broadcast %30 : vector<8x1xf32> to vector<8x128xf32>
    %280 = arith.mulf %278, %279 : vector<8x128xf32>
    %281 = arith.mulf %251, %271 : vector<8x128xf32>
    %282 = vector.broadcast %31 : vector<8x1xf32> to vector<8x128xf32>
    %283 = arith.mulf %281, %282 : vector<8x128xf32>
    %284 = arith.mulf %253, %271 : vector<8x128xf32>
    %285 = vector.broadcast %32 : vector<8x1xf32> to vector<8x128xf32>
    %286 = arith.mulf %284, %285 : vector<8x128xf32>
    %287 = arith.mulf %255, %271 : vector<8x128xf32>
    %288 = vector.broadcast %33 : vector<8x1xf32> to vector<8x128xf32>
    %289 = arith.mulf %287, %288 : vector<8x128xf32>
    %290 = arith.mulf %257, %271 : vector<8x128xf32>
    %291 = vector.broadcast %34 : vector<8x1xf32> to vector<8x128xf32>
    %292 = arith.mulf %290, %291 : vector<8x128xf32>
    %293 = arith.mulf %259, %271 : vector<8x128xf32>
    %294 = vector.broadcast %35 : vector<8x1xf32> to vector<8x128xf32>
    %295 = arith.mulf %293, %294 : vector<8x128xf32>
    %296 = arith.mulf %274, %14 : vector<8x128xf32>
    %297 = arith.mulf %277, %15 : vector<8x128xf32>
    %298 = arith.addf %296, %297 : vector<8x128xf32>
    %299 = arith.mulf %280, %16 : vector<8x128xf32>
    %300 = arith.addf %298, %299 : vector<8x128xf32>
    %301 = arith.mulf %283, %17 : vector<8x128xf32>
    %302 = arith.addf %300, %301 : vector<8x128xf32>
    %303 = arith.mulf %286, %18 : vector<8x128xf32>
    %304 = arith.addf %302, %303 : vector<8x128xf32>
    %305 = arith.mulf %289, %19 : vector<8x128xf32>
    %306 = arith.addf %304, %305 : vector<8x128xf32>
    %307 = arith.mulf %292, %20 : vector<8x128xf32>
    %308 = arith.addf %306, %307 : vector<8x128xf32>
    %309 = arith.mulf %295, %21 : vector<8x128xf32>
    %310 = arith.addf %308, %309 : vector<8x128xf32>
    %311 = arith.mulf %310, %310 : vector<8x128xf32>
    %312 = arith.truncf %311 : vector<8x128xf32> to vector<8x128xbf16>
    %313 = arith.extf %312 : vector<8x128xbf16> to vector<8x128xf32>
    %314 = arith.subf %311, %313 : vector<8x128xf32>
    %315 = arith.truncf %314 : vector<8x128xf32> to vector<8x128xbf16>
    %cst_38 = arith.constant dense<0.000000e+00> : vector<8x128xf32>
    %316 = tpu.matmul %312, %0, %cst_38 {dimension_numbers = #tpu.dot_dimension_numbers<[1], [0], [0], [1], [0, 0, 1, 1], [], []>} : vector<8x128xbf16>, vector<128x128xbf16>, vector<8x128xf32> -> vector<8x128xf32>
    %cst_39 = arith.constant dense<0.000000e+00> : vector<8x128xf32>
    %317 = tpu.matmul %315, %0, %cst_39 {dimension_numbers = #tpu.dot_dimension_numbers<[1], [0], [0], [1], [0, 0, 1, 1], [], []>} : vector<8x128xbf16>, vector<128x128xbf16>, vector<8x128xf32> -> vector<8x128xf32>
    %318 = arith.addf %316, %317 : vector<8x128xf32>
    %cst_40 = arith.constant 1.000000e+00 : f32
    %319 = vector.broadcast %cst_40 : f32 to vector<8x128xf32>
    %320 = arith.addf %319, %318 : vector<8x128xf32>
    %321 = arith.divf %318, %320 : vector<8x128xf32>
    %cst_41 = arith.constant 9.99999971E-10 : f32
    %322 = vector.broadcast %cst_41 : f32 to vector<8x128xf32>
    %323 = arith.addf %318, %322 : vector<8x128xf32>
    %324 = math.rsqrt %323 : vector<8x128xf32>
    %325 = arith.mulf %321, %324 : vector<8x128xf32>
    %326 = arith.mulf %325, %310 : vector<8x128xf32>
    %c0_42 = arith.constant 0 : index
    %c0_43 = arith.constant 0 : index
    %327 = vector.load %arg6[%c0_42, %c0_43] : memref<8x128xf32, #tpu.memory_space<vmem>>, vector<8x128xf32>
    tpu.vector_store %arg6[%c0_42, %c0_43], %326 {strides = array<i32>} : memref<8x128xf32, #tpu.memory_space<vmem>>, vector<8x128xf32>,
    return
  }
  func.func @transform_0(%arg0: i32) -> (i32, i32) {
    %c0_i32 = arith.constant 0 : i32
    %c0_i32_0 = arith.constant 0 : i32
    return %arg0, %c0_i32 : i32, i32
  }
  func.func @transform_1(%arg0: i32) -> (i32, i32) {
    %c0_i32 = arith.constant 0 : i32
    %c0_i32_0 = arith.constant 0 : i32
    return %arg0, %c0_i32 : i32, i32
  }
  func.func @transform_2(%arg0: i32) -> (i32, i32) {
    %c0_i32 = arith.constant 0 : i32
    %c0_i32_0 = arith.constant 0 : i32
    %c0_i32_1 = arith.constant 0 : i32
    return %c0_i32, %c0_i32_0 : i32, i32
  }
  func.func @transform_3(%arg0: i32) -> (i32, i32) {
    %c0_i32 = arith.constant 0 : i32
    %c0_i32_0 = arith.constant 0 : i32
    %c0_i32_1 = arith.constant 0 : i32
    return %c0_i32, %c0_i32_0 : i32, i32
  }
  func.func @transform_4(%arg0: i32) -> (i32, i32) {
    %c0_i32 = arith.constant 0 : i32
    %c0_i32_0 = arith.constant 0 : i32
    %c0_i32_1 = arith.constant 0 : i32
    return %c0_i32, %c0_i32_0 : i32, i32
  }
  func.func @transform_5(%arg0: i32) -> (i32, i32) {
    %c0_i32 = arith.constant 0 : i32
    %c0_i32_0 = arith.constant 0 : i32
    return %arg0, %c0_i32 : i32, i32
  }
}

</mosaic_0001>

<llo_original>
// kernel: capsule_network.1
$region0: #{capsule_network.1}
  #allocation0 [shape = 'u32[]', space=smem, size = 0x4, offset = 0x4, fixed_abs, tag = 'smem constant byte address 0x4 - core index']
  #allocation1 [shape = 'u32[144,128]{1,0:T(1,128)}', space=vmem, size = 0x12000, scoped, tag = 'internal scratch']
  %s0 = inlined_call_operand.vmem [shape: f32[8,256], index: 0, kind: input, shape index: {}]
  %s1 = inlined_call_operand.vmem [shape: f32[8,8], index: 1, kind: input, shape index: {}]
  %s2 = inlined_call_operand.vmem [shape: bf16[256,1024], index: 2, kind: input, shape index: {}]
  %s3 = inlined_call_operand.vmem [shape: bf16[256,1024], index: 3, kind: input, shape index: {}]
  %s4 = inlined_call_operand.vmem [shape: bf16[128,128], index: 4, kind: input, shape index: {}]
  %s5 = inlined_call_operand.vmem [shape: f32[8,128], index: 5, kind: output, shape index: {}]
  %s6 = sld [smem:[#allocation0]]
  $region30: #{capsule_network.1} parent=0
    _
  %s8 = ssub.s32 1, %s6
  %s9 = scalar_select 0, %s8, %s6
  // Predicated region
  $region2: #{capsule_network.1} parent=0 // pred_check
    _
  $region3: #{capsule_network.1} parent=0 // pred_check_branch
    %11 = sbr.rel (0) target = $region5
  $region4: #{capsule_network.1} parent=0 // pred_region
    _
  $region5: #{capsule_network.1} parent=0 // pred_fallthru
    _
  // Predicated region
  $region6: #{capsule_network.1} parent=0 // pred_check
    _
  $region7: #{capsule_network.1} parent=0 // pred_check_branch
    %13 = sbr.rel (0) target = $region9
  $region8: #{capsule_network.1} parent=0 // pred_region
    _
  $region9: #{capsule_network.1} parent=0 // pred_fallthru
    _
  // Predicated region
  $region10: #{capsule_network.1} parent=0 // pred_check
    _
  $region11: #{capsule_network.1} parent=0 // pred_check_branch
    %15 = sbr.rel (0) target = $region13
  $region12: #{capsule_network.1} parent=0 // pred_region
    _
  $region13: #{capsule_network.1} parent=0 // pred_fallthru
    _
  // Predicated region
  $region14: #{capsule_network.1} parent=0 // pred_check
    _
  $region15: #{capsule_network.1} parent=0 // pred_check_branch
    %17 = sbr.rel (0) target = $region17
  $region16: #{capsule_network.1} parent=0 // pred_region
    _
  $region17: #{capsule_network.1} parent=0 // pred_fallthru
    _
  // Predicated region
  $region18: #{capsule_network.1} parent=0 // pred_check
    _
  $region19: #{capsule_network.1} parent=0 // pred_check_branch
    %19 = sbr.rel (0) target = $region21
  $region20: #{capsule_network.1} parent=0 // pred_region
    _
  $region21: #{capsule_network.1} parent=0 // pred_fallthru
    _
  %v21 = vld [vmem:[%s4] sm:$0xf]
  %v22 = vld [vmem:[%s4 + $0x4] sm:$0xf]
  %v23 = vld [vmem:[%s4 + $0x8] sm:$0xf]
  %v24 = vld [vmem:[%s4 + $0xc] sm:$0xf]
  %v25 = vld [vmem:[%s4 + $0x10] sm:$0xf]
  %v26 = vld [vmem:[%s4 + $0x14] sm:$0xf]
  %v27 = vld [vmem:[%s4 + $0x18] sm:$0xf]
  %v28 = vld [vmem:[%s4 + $0x1c] sm:$0xf]
  %v29 = vld [vmem:[%s4 + $0x20] sm:$0xf]
  %v30 = vld [vmem:[%s4 + $0x24] sm:$0xf]
  %v31 = vld [vmem:[%s4 + $0x28] sm:$0xf]
  %v32 = vld [vmem:[%s4 + $0x2c] sm:$0xf]
  %v33 = vld [vmem:[%s4 + $0x30] sm:$0xf]
  %v34 = vld [vmem:[%s4 + $0x34] sm:$0xf]
  %v35 = vld [vmem:[%s4 + $0x38] sm:$0xf]
  %v36 = vld [vmem:[%s4 + $0x3c] sm:$0xf]
  %v37 = vld [vmem:[%s0] sm:$0xff]
  %v38 = vld [vmem:[%s0 + $0x8] sm:$0xff]
  %v39 = vpack.c.bf16 %v37, %v37
  %v40 = vpack.c.bf16 %v38, %v38
  %v41 = vunpack.c.l.bf16 %v39
  %v42 = vunpack.c.l.bf16 %v40
  %v43 = vsub.f32 %v37, %v41
  %v44 = vsub.f32 %v38, %v42
  %v45 = vpack.c.bf16 %v43, %v43
  %v46 = vpack.c.bf16 %v44, %v44
  %v47 = vld [vmem:[%s2] sm:$0xff]
  %v48 = vld [vmem:[%s2 + $0x8] sm:$0xff]
  %v49 = vld [vmem:[%s2 + $0x10] sm:$0xff]
  %v50 = vld [vmem:[%s2 + $0x18] sm:$0xff]
  %v51 = vld [vmem:[%s2 + $0x20] sm:$0xff]
  %v52 = vld [vmem:[%s2 + $0x28] sm:$0xff]
  %v53 = vld [vmem:[%s2 + $0x30] sm:$0xff]
  %v54 = vld [vmem:[%s2 + $0x38] sm:$0xff]
  %v55 = vld [vmem:[%s2 + $0x40] sm:$0xff]
  %v56 = vld [vmem:[%s2 + $0x48] sm:$0xff]
  %v57 = vld [vmem:[%s2 + $0x50] sm:$0xff]
  %v58 = vld [vmem:[%s2 + $0x58] sm:$0xff]
  %v59 = vld [vmem:[%s2 + $0x60] sm:$0xff]
  %v60 = vld [vmem:[%s2 + $0x68] sm:$0xff]
  %v61 = vld [vmem:[%s2 + $0x70] sm:$0xff]
  %v62 = vld [vmem:[%s2 + $0x78] sm:$0xff]
  %v63 = vld [vmem:[%s2 + $0x80] sm:$0xff]
  %v64 = vld [vmem:[%s2 + $0x88] sm:$0xff]
  %v65 = vld [vmem:[%s2 + $0x90] sm:$0xff]
  %v66 = vld [vmem:[%s2 + $0x98] sm:$0xff]
  %v67 = vld [vmem:[%s2 + $0xa0] sm:$0xff]
  %v68 = vld [vmem:[%s2 + $0xa8] sm:$0xff]
  %v69 = vld [vmem:[%s2 + $0xb0] sm:$0xff]
  %v70 = vld [vmem:[%s2 + $0xb8] sm:$0xff]
  %v71 = vld [vmem:[%s2 + $0xc0] sm:$0xff]
  %v72 = vld [vmem:[%s2 + $0xc8] sm:$0xff]
  %v73 = vld [vmem:[%s2 + $0xd0] sm:$0xff]
  %v74 = vld [vmem:[%s2 + $0xd8] sm:$0xff]
  %v75 = vld [vmem:[%s2 + $0xe0] sm:$0xff]
  %v76 = vld [vmem:[%s2 + $0xe8] sm:$0xff]
  %v77 = vld [vmem:[%s2 + $0xf0] sm:$0xff]
  %v78 = vld [vmem:[%s2 + $0xf8] sm:$0xff]
  %v79 = vld [vmem:[%s2 + $0x100] sm:$0xff]
  %v80 = vld [vmem:[%s2 + $0x108] sm:$0xff]
  %v81 = vld [vmem:[%s2 + $0x110] sm:$0xff]
  %v82 = vld [vmem:[%s2 + $0x118] sm:$0xff]
  %v83 = vld [vmem:[%s2 + $0x120] sm:$0xff]
  %v84 = vld [vmem:[%s2 + $0x128] sm:$0xff]
  %v85 = vld [vmem:[%s2 + $0x130] sm:$0xff]
  %v86 = vld [vmem:[%s2 + $0x138] sm:$0xff]
  %v87 = vld [vmem:[%s2 + $0x140] sm:$0xff]
  %v88 = vld [vmem:[%s2 + $0x148] sm:$0xff]
  %v89 = vld [vmem:[%s2 + $0x150] sm:$0xff]
  %v90 = vld [vmem:[%s2 + $0x158] sm:$0xff]
  %v91 = vld [vmem:[%s2 + $0x160] sm:$0xff]
  %v92 = vld [vmem:[%s2 + $0x168] sm:$0xff]
  %v93 = vld [vmem:[%s2 + $0x170] sm:$0xff]
  %v94 = vld [vmem:[%s2 + $0x178] sm:$0xff]
  %v95 = vld [vmem:[%s2 + $0x180] sm:$0xff]
  %v96 = vld [vmem:[%s2 + $0x188] sm:$0xff]
  %v97 = vld [vmem:[%s2 + $0x190] sm:$0xff]
  %v98 = vld [vmem:[%s2 + $0x198] sm:$0xff]
  %v99 = vld [vmem:[%s2 + $0x1a0] sm:$0xff]
  %v100 = vld [vmem:[%s2 + $0x1a8] sm:$0xff]
  %v101 = vld [vmem:[%s2 + $0x1b0] sm:$0xff]
  %v102 = vld [vmem:[%s2 + $0x1b8] sm:$0xff]
  %v103 = vld [vmem:[%s2 + $0x1c0] sm:$0xff]
  %v104 = vld [vmem:[%s2 + $0x1c8] sm:$0xff]
  %v105 = vld [vmem:[%s2 + $0x1d0] sm:$0xff]
  %v106 = vld [vmem:[%s2 + $0x1d8] sm:$0xff]
  %v107 = vld [vmem:[%s2 + $0x1e0] sm:$0xff]
  %v108 = vld [vmem:[%s2 + $0x1e8] sm:$0xff]
  %v109 = vld [vmem:[%s2 + $0x1f0] sm:$0xff]
  %v110 = vld [vmem:[%s2 + $0x1f8] sm:$0xff]
  %v111 = vld [vmem:[%s2 + $0x200] sm:$0xff]
  %v112 = vld [vmem:[%s2 + $0x208] sm:$0xff]
  %v113 = vld [vmem:[%s2 + $0x210] sm:$0xff]
  %v114 = vld [vmem:[%s2 + $0x218] sm:$0xff]
  %v115 = vld [vmem:[%s2 + $0x220] sm:$0xff]
  %v116 = vld [vmem:[%s2 + $0x228] sm:$0xff]
  %v117 = vld [vmem:[%s2 + $0x230] sm:$0xff]
  %v118 = vld [vmem:[%s2 + $0x238] sm:$0xff]
  %v119 = vld [vmem:[%s2 + $0x240] sm:$0xff]
  %v120 = vld [vmem:[%s2 + $0x248] sm:$0xff]
  %v121 = vld [vmem:[%s2 + $0x250] sm:$0xff]
  %v122 = vld [vmem:[%s2 + $0x258] sm:$0xff]
  %v123 = vld [vmem:[%s2 + $0x260] sm:$0xff]
  %v124 = vld [vmem:[%s2 + $0x268] sm:$0xff]
  %v125 = vld [vmem:[%s2 + $0x270] sm:$0xff]
  %v126 = vld [vmem:[%s2 + $0x278] sm:$0xff]
  %v127 = vld [vmem:[%s2 + $0x280] sm:$0xff]
  %v128 = vld [vmem:[%s2 + $0x288] sm:$0xff]
  %v129 = vld [vmem:[%s2 + $0x290] sm:$0xff]
  %v130 = vld [vmem:[%s2 + $0x298] sm:$0xff]
  %v131 = vld [vmem:[%s2 + $0x2a0] sm:$0xff]
  %v132 = vld [vmem:[%s2 + $0x2a8] sm:$0xff]
  %v133 = vld [vmem:[%s2 + $0x2b0] sm:$0xff]
  %v134 = vld [vmem:[%s2 + $0x2b8] sm:$0xff]
  %v135 = vld [vmem:[%s2 + $0x2c0] sm:$0xff]
  %v136 = vld [vmem:[%s2 + $0x2c8] sm:$0xff]
  %v137 = vld [vmem:[%s2 + $0x2d0] sm:$0xff]
  %v138 = vld [vmem:[%s2 + $0x2d8] sm:$0xff]
  %v139 = vld [vmem:[%s2 + $0x2e0] sm:$0xff]
  %v140 = vld [vmem:[%s2 + $0x2e8] sm:$0xff]
  %v141 = vld [vmem:[%s2 + $0x2f0] sm:$0xff]
  %v142 = vld [vmem:[%s2 + $0x2f8] sm:$0xff]
  %v143 = vld [vmem:[%s2 + $0x300] sm:$0xff]
  %v144 = vld [vmem:[%s2 + $0x308] sm:$0xff]
  %v145 = vld [vmem:[%s2 + $0x310] sm:$0xff]
  %v146 = vld [vmem:[%s2 + $0x318] sm:$0xff]
  %v147 = vld [vmem:[%s2 + $0x320] sm:$0xff]
  %v148 = vld [vmem:[%s2 + $0x328] sm:$0xff]
  %v149 = vld [vmem:[%s2 + $0x330] sm:$0xff]
  %v150 = vld [vmem:[%s2 + $0x338] sm:$0xff]
  %v151 = vld [vmem:[%s2 + $0x340] sm:$0xff]
  %v152 = vld [vmem:[%s2 + $0x348] sm:$0xff]
  %v153 = vld [vmem:[%s2 + $0x350] sm:$0xff]
  %v154 = vld [vmem:[%s2 + $0x358] sm:$0xff]
  %v155 = vld [vmem:[%s2 + $0x360] sm:$0xff]
  %v156 = vld [vmem:[%s2 + $0x368] sm:$0xff]
  %v157 = vld [vmem:[%s2 + $0x370] sm:$0xff]
  %v158 = vld [vmem:[%s2 + $0x378] sm:$0xff]
  %v159 = vld [vmem:[%s2 + $0x380] sm:$0xff]
  %v160 = vld [vmem:[%s2 + $0x388] sm:$0xff]
  %v161 = vld [vmem:[%s2 + $0x390] sm:$0xff]
  %v162 = vld [vmem:[%s2 + $0x398] sm:$0xff]
  %v163 = vld [vmem:[%s2 + $0x3a0] sm:$0xff]
  %v164 = vld [vmem:[%s2 + $0x3a8] sm:$0xff]
  %v165 = vld [vmem:[%s2 + $0x3b0] sm:$0xff]
  %v166 = vld [vmem:[%s2 + $0x3b8] sm:$0xff]
  %v167 = vld [vmem:[%s2 + $0x3c0] sm:$0xff]
  %v168 = vld [vmem:[%s2 + $0x3c8] sm:$0xff]
  %v169 = vld [vmem:[%s2 + $0x3d0] sm:$0xff]
  %v170 = vld [vmem:[%s2 + $0x3d8] sm:$0xff]
  %v171 = vld [vmem:[%s2 + $0x3e0] sm:$0xff]
  %v172 = vld [vmem:[%s2 + $0x3e8] sm:$0xff]
  %v173 = vld [vmem:[%s2 + $0x3f0] sm:$0xff]
  %v174 = vld [vmem:[%s2 + $0x3f8] sm:$0xff]
  %v175 = vld [vmem:[%s3] sm:$0xff]
  %v176 = vld [vmem:[%s3 + $0x8] sm:$0xff]
  %v177 = vld [vmem:[%s3 + $0x10] sm:$0xff]
  %v178 = vld [vmem:[%s3 + $0x18] sm:$0xff]
  %v179 = vld [vmem:[%s3 + $0x20] sm:$0xff]
  %v180 = vld [vmem:[%s3 + $0x28] sm:$0xff]
  %v181 = vld [vmem:[%s3 + $0x30] sm:$0xff]
  %v182 = vld [vmem:[%s3 + $0x38] sm:$0xff]
  %v183 = vld [vmem:[%s3 + $0x40] sm:$0xff]
  %v184 = vld [vmem:[%s3 + $0x48] sm:$0xff]
  %v185 = vld [vmem:[%s3 + $0x50] sm:$0xff]
  %v186 = vld [vmem:[%s3 + $0x58] sm:$0xff]
  %v187 = vld [vmem:[%s3 + $0x60] sm:$0xff]
  %v188 = vld [vmem:[%s3 + $0x68] sm:$0xff]
  %v189 = vld [vmem:[%s3 + $0x70] sm:$0xff]
  %v190 = vld [vmem:[%s3 + $0x78] sm:$0xff]
  %v191 = vld [vmem:[%s3 + $0x80] sm:$0xff]
  %v192 = vld [vmem:[%s3 + $0x88] sm:$0xff]
  %v193 = vld [vmem:[%s3 + $0x90] sm:$0xff]
  %v194 = vld [vmem:[%s3 + $0x98] sm:$0xff]
  %v195 = vld [vmem:[%s3 + $0xa0] sm:$0xff]
  %v196 = vld [vmem:[%s3 + $0xa8] sm:$0xff]
  %v197 = vld [vmem:[%s3 + $0xb0] sm:$0xff]
  %v198 = vld [vmem:[%s3 + $0xb8] sm:$0xff]
  %v199 = vld [vmem:[%s3 + $0xc0] sm:$0xff]
  %v200 = vld [vmem:[%s3 + $0xc8] sm:$0xff]
  %v201 = vld [vmem:[%s3 + $0xd0] sm:$0xff]
  %v202 = vld [vmem:[%s3 + $0xd8] sm:$0xff]
  %v203 = vld [vmem:[%s3 + $0xe0] sm:$0xff]
  %v204 = vld [vmem:[%s3 + $0xe8] sm:$0xff]
  %v205 = vld [vmem:[%s3 + $0xf0] sm:$0xff]
  %v206 = vld [vmem:[%s3 + $0xf8] sm:$0xff]
  %v207 = vld [vmem:[%s3 + $0x100] sm:$0xff]
  %v208 = vld [vmem:[%s3 + $0x108] sm:$0xff]
  %v209 = vld [vmem:[%s3 + $0x110] sm:$0xff]
  %v210 = vld [vmem:[%s3 + $0x118] sm:$0xff]
  %v211 = vld [vmem:[%s3 + $0x120] sm:$0xff]
  %v212 = vld [vmem:[%s3 + $0x128] sm:$0xff]
  %v213 = vld [vmem:[%s3 + $0x130] sm:$0xff]
  %v214 = vld [vmem:[%s3 + $0x138] sm:$0xff]
  %v215 = vld [vmem:[%s3 + $0x140] sm:$0xff]
  %v216 = vld [vmem:[%s3 + $0x148] sm:$0xff]
  %v217 = vld [vmem:[%s3 + $0x150] sm:$0xff]
  %v218 = vld [vmem:[%s3 + $0x158] sm:$0xff]
  %v219 = vld [vmem:[%s3 + $0x160] sm:$0xff]
  %v220 = vld [vmem:[%s3 + $0x168] sm:$0xff]
  %v221 = vld [vmem:[%s3 + $0x170] sm:$0xff]
  %v222 = vld [vmem:[%s3 + $0x178] sm:$0xff]
  %v223 = vld [vmem:[%s3 + $0x180] sm:$0xff]
  %v224 = vld [vmem:[%s3 + $0x188] sm:$0xff]
  %v225 = vld [vmem:[%s3 + $0x190] sm:$0xff]
  %v226 = vld [vmem:[%s3 + $0x198] sm:$0xff]
  %v227 = vld [vmem:[%s3 + $0x1a0] sm:$0xff]
  %v228 = vld [vmem:[%s3 + $0x1a8] sm:$0xff]
  %v229 = vld [vmem:[%s3 + $0x1b0] sm:$0xff]
  %v230 = vld [vmem:[%s3 + $0x1b8] sm:$0xff]
  %v231 = vld [vmem:[%s3 + $0x1c0] sm:$0xff]
  %v232 = vld [vmem:[%s3 + $0x1c8] sm:$0xff]
  %v233 = vld [vmem:[%s3 + $0x1d0] sm:$0xff]
  %v234 = vld [vmem:[%s3 + $0x1d8] sm:$0xff]
  %v235 = vld [vmem:[%s3 + $0x1e0] sm:$0xff]
  %v236 = vld [vmem:[%s3 + $0x1e8] sm:$0xff]
  %v237 = vld [vmem:[%s3 + $0x1f0] sm:$0xff]
  %v238 = vld [vmem:[%s3 + $0x1f8] sm:$0xff]
  %v239 = vld [vmem:[%s3 + $0x200] sm:$0xff]
  %v240 = vld [vmem:[%s3 + $0x208] sm:$0xff]
  %v241 = vld [vmem:[%s3 + $0x210] sm:$0xff]
  %v242 = vld [vmem:[%s3 + $0x218] sm:$0xff]
  %v243 = vld [vmem:[%s3 + $0x220] sm:$0xff]
  %v244 = vld [vmem:[%s3 + $0x228] sm:$0xff]
  %v245 = vld [vmem:[%s3 + $0x230] sm:$0xff]
  %v246 = vld [vmem:[%s3 + $0x238] sm:$0xff]
  %v247 = vld [vmem:[%s3 + $0x240] sm:$0xff]
  %v248 = vld [vmem:[%s3 + $0x248] sm:$0xff]
  %v249 = vld [vmem:[%s3 + $0x250] sm:$0xff]
  %v250 = vld [vmem:[%s3 + $0x258] sm:$0xff]
  %v251 = vld [vmem:[%s3 + $0x260] sm:$0xff]
  %v252 = vld [vmem:[%s3 + $0x268] sm:$0xff]
  %v253 = vld [vmem:[%s3 + $0x270] sm:$0xff]
  %v254 = vld [vmem:[%s3 + $0x278] sm:$0xff]
  %v255 = vld [vmem:[%s3 + $0x280] sm:$0xff]
  %v256 = vld [vmem:[%s3 + $0x288] sm:$0xff]
  %v257 = vld [vmem:[%s3 + $0x290] sm:$0xff]
  %v258 = vld [vmem:[%s3 + $0x298] sm:$0xff]
  %v259 = vld [vmem:[%s3 + $0x2a0] sm:$0xff]
  %v260 = vld [vmem:[%s3 + $0x2a8] sm:$0xff]
  %v261 = vld [vmem:[%s3 + $0x2b0] sm:$0xff]
  %v262 = vld [vmem:[%s3 + $0x2b8] sm:$0xff]
  %v263 = vld [vmem:[%s3 + $0x2c0] sm:$0xff]
  %v264 = vld [vmem:[%s3 + $0x2c8] sm:$0xff]
  %v265 = vld [vmem:[%s3 + $0x2d0] sm:$0xff]
  %v266 = vld [vmem:[%s3 + $0x2d8] sm:$0xff]
  %v267 = vld [vmem:[%s3 + $0x2e0] sm:$0xff]
  %v268 = vld [vmem:[%s3 + $0x2e8] sm:$0xff]
  %v269 = vld [vmem:[%s3 + $0x2f0] sm:$0xff]
  %v270 = vld [vmem:[%s3 + $0x2f8] sm:$0xff]
  %v271 = vld [vmem:[%s3 + $0x300] sm:$0xff]
  %v272 = vld [vmem:[%s3 + $0x308] sm:$0xff]
  %v273 = vld [vmem:[%s3 + $0x310] sm:$0xff]
  %v274 = vld [vmem:[%s3 + $0x318] sm:$0xff]
  %v275 = vld [vmem:[%s3 + $0x320] sm:$0xff]
  %v276 = vld [vmem:[%s3 + $0x328] sm:$0xff]
  %v277 = vld [vmem:[%s3 + $0x330] sm:$0xff]
  %v278 = vld [vmem:[%s3 + $0x338] sm:$0xff]
  %v279 = vld [vmem:[%s3 + $0x340] sm:$0xff]
  %v280 = vld [vmem:[%s3 + $0x348] sm:$0xff]
  %v281 = vld [vmem:[%s3 + $0x350] sm:$0xff]
  %v282 = vld [vmem:[%s3 + $0x358] sm:$0xff]
  %v283 = vld [vmem:[%s3 + $0x360] sm:$0xff]
  %v284 = vld [vmem:[%s3 + $0x368] sm:$0xff]
  %v285 = vld [vmem:[%s3 + $0x370] sm:$0xff]
  %v286 = vld [vmem:[%s3 + $0x378] sm:$0xff]
  %v287 = vld [vmem:[%s3 + $0x380] sm:$0xff]
  %v288 = vld [vmem:[%s3 + $0x388] sm:$0xff]
  %v289 = vld [vmem:[%s3 + $0x390] sm:$0xff]
  %v290 = vld [vmem:[%s3 + $0x398] sm:$0xff]
  %v291 = vld [vmem:[%s3 + $0x3a0] sm:$0xff]
  %v292 = vld [vmem:[%s3 + $0x3a8] sm:$0xff]
  %v293 = vld [vmem:[%s3 + $0x3b0] sm:$0xff]
  %v294 = vld [vmem:[%s3 + $0x3b8] sm:$0xff]
  %v295 = vld [vmem:[%s3 + $0x3c0] sm:$0xff]
  %v296 = vld [vmem:[%s3 + $0x3c8] sm:$0xff]
  %v297 = vld [vmem:[%s3 + $0x3d0] sm:$0xff]
  %v298 = vld [vmem:[%s3 + $0x3d8] sm:$0xff]
  %v299 = vld [vmem:[%s3 + $0x3e0] sm:$0xff]
  %v300 = vld [vmem:[%s3 + $0x3e8] sm:$0xff]
  %v301 = vld [vmem:[%s3 + $0x3f0] sm:$0xff]
  %v302 = vld [vmem:[%s3 + $0x3f8] sm:$0xff]
  %v431 = vunpack.c.l.b16 %v175
  %v432 = vunpack.c.h.b16 %v175
  %v433 = vunpack.c.l.b16 %v176
  %v434 = vunpack.c.h.b16 %v176
  %v435 = vunpack.c.l.b16 %v177
  %v436 = vunpack.c.h.b16 %v177
  %v437 = vunpack.c.l.b16 %v178
  %v438 = vunpack.c.h.b16 %v178
  %v439 = vunpack.c.l.b16 %v179
  %v440 = vunpack.c.h.b16 %v179
  %v441 = vunpack.c.l.b16 %v180
  %v442 = vunpack.c.h.b16 %v180
  %v443 = vunpack.c.l.b16 %v181
  %v444 = vunpack.c.h.b16 %v181
  %v445 = vunpack.c.l.b16 %v182
  %v446 = vunpack.c.h.b16 %v182
  %v447 = vunpack.c.l.b16 %v183
  %v448 = vunpack.c.h.b16 %v183
  %v449 = vunpack.c.l.b16 %v184
  %v450 = vunpack.c.h.b16 %v184
  %v451 = vunpack.c.l.b16 %v185
  %v452 = vunpack.c.h.b16 %v185
  %v453 = vunpack.c.l.b16 %v186
  %v454 = vunpack.c.h.b16 %v186
  %v455 = vunpack.c.l.b16 %v187
  %v456 = vunpack.c.h.b16 %v187
  %v457 = vunpack.c.l.b16 %v188
  %v458 = vunpack.c.h.b16 %v188
  %v459 = vunpack.c.l.b16 %v189
  %v460 = vunpack.c.h.b16 %v189
  %v461 = vunpack.c.l.b16 %v190
  %v462 = vunpack.c.h.b16 %v190
  %v463 = vunpack.c.l.b16 %v191
  %v464 = vunpack.c.h.b16 %v191
  %v465 = vunpack.c.l.b16 %v192
  %v466 = vunpack.c.h.b16 %v192
  %v467 = vunpack.c.l.b16 %v193
  %v468 = vunpack.c.h.b16 %v193
  %v469 = vunpack.c.l.b16 %v194
  %v470 = vunpack.c.h.b16 %v194
  %v471 = vunpack.c.l.b16 %v195
  %v472 = vunpack.c.h.b16 %v195
  %v473 = vunpack.c.l.b16 %v196
  %v474 = vunpack.c.h.b16 %v196
  %v475 = vunpack.c.l.b16 %v197
  %v476 = vunpack.c.h.b16 %v197
  %v477 = vunpack.c.l.b16 %v198
  %v478 = vunpack.c.h.b16 %v198
  %v479 = vunpack.c.l.b16 %v199
  %v480 = vunpack.c.h.b16 %v199
  %v481 = vunpack.c.l.b16 %v200
  %v482 = vunpack.c.h.b16 %v200
  %v483 = vunpack.c.l.b16 %v201
  %v484 = vunpack.c.h.b16 %v201
  %v485 = vunpack.c.l.b16 %v202
  %v486 = vunpack.c.h.b16 %v202
  %v487 = vunpack.c.l.b16 %v203
  %v488 = vunpack.c.h.b16 %v203
  %v489 = vunpack.c.l.b16 %v204
  %v490 = vunpack.c.h.b16 %v204
  %v491 = vunpack.c.l.b16 %v205
  %v492 = vunpack.c.h.b16 %v205
  %v493 = vunpack.c.l.b16 %v206
  %v494 = vunpack.c.h.b16 %v206
  %v495 = vunpack.c.l.b16 %v207
  %v496 = vunpack.c.h.b16 %v207
  %v497 = vunpack.c.l.b16 %v208
  %v498 = vunpack.c.h.b16 %v208
  %v499 = vunpack.c.l.b16 %v209
  %v500 = vunpack.c.h.b16 %v209
  %v501 = vunpack.c.l.b16 %v210
  %v502 = vunpack.c.h.b16 %v210
  %v503 = vunpack.c.l.b16 %v211
  %v504 = vunpack.c.h.b16 %v211
  %v505 = vunpack.c.l.b16 %v212
  %v506 = vunpack.c.h.b16 %v212
  %v507 = vunpack.c.l.b16 %v213
  %v508 = vunpack.c.h.b16 %v213
  %v509 = vunpack.c.l.b16 %v214
  %v510 = vunpack.c.h.b16 %v214
  %v511 = vunpack.c.l.b16 %v215
  %v512 = vunpack.c.h.b16 %v215
  %v513 = vunpack.c.l.b16 %v216
  %v514 = vunpack.c.h.b16 %v216
  %v515 = vunpack.c.l.b16 %v217
  %v516 = vunpack.c.h.b16 %v217
  %v517 = vunpack.c.l.b16 %v218
  %v518 = vunpack.c.h.b16 %v218
  %v519 = vunpack.c.l.b16 %v219
  %v520 = vunpack.c.h.b16 %v219
  %v521 = vunpack.c.l.b16 %v220
  %v522 = vunpack.c.h.b16 %v220
  %v523 = vunpack.c.l.b16 %v221
  %v524 = vunpack.c.h.b16 %v221
  %v525 = vunpack.c.l.b16 %v222
  %v526 = vunpack.c.h.b16 %v222
  %v527 = vunpack.c.l.b16 %v223
  %v528 = vunpack.c.h.b16 %v223
  %v529 = vunpack.c.l.b16 %v224
  %v530 = vunpack.c.h.b16 %v224
  %v531 = vunpack.c.l.b16 %v225
  %v532 = vunpack.c.h.b16 %v225
  %v533 = vunpack.c.l.b16 %v226
  %v534 = vunpack.c.h.b16 %v226
  %v535 = vunpack.c.l.b16 %v227
  %v536 = vunpack.c.h.b16 %v227
  %v537 = vunpack.c.l.b16 %v228
  %v538 = vunpack.c.h.b16 %v228
  %v539 = vunpack.c.l.b16 %v229
  %v540 = vunpack.c.h.b16 %v229
  %v541 = vunpack.c.l.b16 %v230
  %v542 = vunpack.c.h.b16 %v230
  %v543 = vunpack.c.l.b16 %v231
  %v544 = vunpack.c.h.b16 %v231
  %v545 = vunpack.c.l.b16 %v232
  %v546 = vunpack.c.h.b16 %v232
  %v547 = vunpack.c.l.b16 %v233
  %v548 = vunpack.c.h.b16 %v233
  %v549 = vunpack.c.l.b16 %v234
  %v550 = vunpack.c.h.b16 %v234
  %v551 = vunpack.c.l.b16 %v235
  %v552 = vunpack.c.h.b16 %v235
  %v553 = vunpack.c.l.b16 %v236
  %v554 = vunpack.c.h.b16 %v236
  %v555 = vunpack.c.l.b16 %v237
  %v556 = vunpack.c.h.b16 %v237
  %v557 = vunpack.c.l.b16 %v238
  %v558 = vunpack.c.h.b16 %v238
  %v559 = vunpack.c.l.b16 %v239
  %v560 = vunpack.c.h.b16 %v239
  %v561 = vunpack.c.l.b16 %v240
  %v562 = vunpack.c.h.b16 %v240
  %v563 = vunpack.c.l.b16 %v241
  %v564 = vunpack.c.h.b16 %v241
  %v565 = vunpack.c.l.b16 %v242
  %v566 = vunpack.c.h.b16 %v242
  %v567 = vunpack.c.l.b16 %v243
  %v568 = vunpack.c.h.b16 %v243
  %v569 = vunpack.c.l.b16 %v244
  %v570 = vunpack.c.h.b16 %v244
  %v571 = vunpack.c.l.b16 %v245
  %v572 = vunpack.c.h.b16 %v245
  %v573 = vunpack.c.l.b16 %v246
  %v574 = vunpack.c.h.b16 %v246
  %v575 = vunpack.c.l.b16 %v247
  %v576 = vunpack.c.h.b16 %v247
  %v577 = vunpack.c.l.b16 %v248
  %v578 = vunpack.c.h.b16 %v248
  %v579 = vunpack.c.l.b16 %v249
  %v580 = vunpack.c.h.b16 %v249
  %v581 = vunpack.c.l.b16 %v250
  %v582 = vunpack.c.h.b16 %v250
  %v583 = vunpack.c.l.b16 %v251
  %v584 = vunpack.c.h.b16 %v251
  %v585 = vunpack.c.l.b16 %v252
  %v586 = vunpack.c.h.b16 %v252
  %v587 = vunpack.c.l.b16 %v253
  %v588 = vunpack.c.h.b16 %v253
  %v589 = vunpack.c.l.b16 %v254
  %v590 = vunpack.c.h.b16 %v254
  %v591 = vunpack.c.l.b16 %v255
  %v592 = vunpack.c.h.b16 %v255
  %v593 = vunpack.c.l.b16 %v256
  %v594 = vunpack.c.h.b16 %v256
  %v595 = vunpack.c.l.b16 %v257
  %v596 = vunpack.c.h.b16 %v257
  %v597 = vunpack.c.l.b16 %v258
  %v598 = vunpack.c.h.b16 %v258
  %v599 = vunpack.c.l.b16 %v259
  %v600 = vunpack.c.h.b16 %v259
  %v601 = vunpack.c.l.b16 %v260
  %v602 = vunpack.c.h.b16 %v260
  %v603 = vunpack.c.l.b16 %v261
  %v604 = vunpack.c.h.b16 %v261
  %v605 = vunpack.c.l.b16 %v262
  %v606 = vunpack.c.h.b16 %v262
  %v607 = vunpack.c.l.b16 %v263
  %v608 = vunpack.c.h.b16 %v263
  %v609 = vunpack.c.l.b16 %v264
  %v610 = vunpack.c.h.b16 %v264
  %v611 = vunpack.c.l.b16 %v265
  %v612 = vunpack.c.h.b16 %v265
  %v613 = vunpack.c.l.b16 %v266
  %v614 = vunpack.c.h.b16 %v266
  %v615 = vunpack.c.l.b16 %v267
  %v616 = vunpack.c.h.b16 %v267
  %v617 = vunpack.c.l.b16 %v268
  %v618 = vunpack.c.h.b16 %v268
  %v619 = vunpack.c.l.b16 %v269
  %v620 = vunpack.c.h.b16 %v269
  %v621 = vunpack.c.l.b16 %v270
  %v622 = vunpack.c.h.b16 %v270
  %v623 = vunpack.c.l.b16 %v271
  %v624 = vunpack.c.h.b16 %v271
  %v625 = vunpack.c.l.b16 %v272
  %v626 = vunpack.c.h.b16 %v272
  %v627 = vunpack.c.l.b16 %v273
  %v628 = vunpack.c.h.b16 %v273
  %v629 = vunpack.c.l.b16 %v274
  %v630 = vunpack.c.h.b16 %v274
  %v631 = vunpack.c.l.b16 %v275
  %v632 = vunpack.c.h.b16 %v275
  %v633 = vunpack.c.l.b16 %v276
  %v634 = vunpack.c.h.b16 %v276
  %v635 = vunpack.c.l.b16 %v277
  %v636 = vunpack.c.h.b16 %v277
  %v637 = vunpack.c.l.b16 %v278
  %v638 = vunpack.c.h.b16 %v278
  %v639 = vunpack.c.l.b16 %v279
  %v640 = vunpack.c.h.b16 %v279
  %v641 = vunpack.c.l.b16 %v280
  %v642 = vunpack.c.h.b16 %v280
  %v643 = vunpack.c.l.b16 %v281
  %v644 = vunpack.c.h.b16 %v281
  %v645 = vunpack.c.l.b16 %v282
  %v646 = vunpack.c.h.b16 %v282
  %v647 = vunpack.c.l.b16 %v283
  %v648 = vunpack.c.h.b16 %v283
  %v649 = vunpack.c.l.b16 %v284
  %v650 = vunpack.c.h.b16 %v284
  %v651 = vunpack.c.l.b16 %v285
  %v652 = vunpack.c.h.b16 %v285
  %v653 = vunpack.c.l.b16 %v286
  %v654 = vunpack.c.h.b16 %v286
  %v655 = vunpack.c.l.b16 %v287
  %v656 = vunpack.c.h.b16 %v287
  %v657 = vunpack.c.l.b16 %v288
  %v658 = vunpack.c.h.b16 %v288
  %v659 = vunpack.c.l.b16 %v289
  %v660 = vunpack.c.h.b16 %v289
  %v661 = vunpack.c.l.b16 %v290
  %v662 = vunpack.c.h.b16 %v290
  %v663 = vunpack.c.l.b16 %v291
  %v664 = vunpack.c.h.b16 %v291
  %v665 = vunpack.c.l.b16 %v292
  %v666 = vunpack.c.h.b16 %v292
  %v667 = vunpack.c.l.b16 %v293
  %v668 = vunpack.c.h.b16 %v293
  %v669 = vunpack.c.l.b16 %v294
  %v670 = vunpack.c.h.b16 %v294
  %v671 = vunpack.c.l.b16 %v295
  %v672 = vunpack.c.h.b16 %v295
  %v673 = vunpack.c.l.b16 %v296
  %v674 = vunpack.c.h.b16 %v296
  %v675 = vunpack.c.l.b16 %v297
  %v676 = vunpack.c.h.b16 %v297
  %v677 = vunpack.c.l.b16 %v298
  %v678 = vunpack.c.h.b16 %v298
  %v679 = vunpack.c.l.b16 %v299
  %v680 = vunpack.c.h.b16 %v299
  %v681 = vunpack.c.l.b16 %v300
  %v682 = vunpack.c.h.b16 %v300
  %v683 = vunpack.c.l.b16 %v301
  %v684 = vunpack.c.h.b16 %v301
  %v685 = vunpack.c.l.b16 %v302
  %v686 = vunpack.c.h.b16 %v302
  %v687 = vpack.c.b16 %v439, %v431
  %v688 = vpack.c.b16 %v440, %v432
  %v689 = vpack.c.b16 %v441, %v433
  %v690 = vpack.c.b16 %v442, %v434
  %v691 = vpack.c.b16 %v443, %v435
  %v692 = vpack.c.b16 %v444, %v436
  %v693 = vpack.c.b16 %v445, %v437
  %v694 = vpack.c.b16 %v446, %v438
  %v695 = vpack.c.b16 %v455, %v447
  %v696 = vpack.c.b16 %v456, %v448
  %v697 = vpack.c.b16 %v457, %v449
  %v698 = vpack.c.b16 %v458, %v450
  %v699 = vpack.c.b16 %v459, %v451
  %v700 = vpack.c.b16 %v460, %v452
  %v701 = vpack.c.b16 %v461, %v453
  %v702 = vpack.c.b16 %v462, %v454
  %v703 = vpack.c.b16 %v471, %v463
  %v704 = vpack.c.b16 %v472, %v464
  %v705 = vpack.c.b16 %v473, %v465
  %v706 = vpack.c.b16 %v474, %v466
  %v707 = vpack.c.b16 %v475, %v467
  %v708 = vpack.c.b16 %v476, %v468
  %v709 = vpack.c.b16 %v477, %v469
  %v710 = vpack.c.b16 %v478, %v470
  %v711 = vpack.c.b16 %v487, %v479
  %v712 = vpack.c.b16 %v488, %v480
  %v713 = vpack.c.b16 %v489, %v481
  %v714 = vpack.c.b16 %v490, %v482
  %v715 = vpack.c.b16 %v491, %v483
  %v716 = vpack.c.b16 %v492, %v484
  %v717 = vpack.c.b16 %v493, %v485
  %v718 = vpack.c.b16 %v494, %v486
  %v719 = vpack.c.b16 %v503, %v495
  %v720 = vpack.c.b16 %v504, %v496
  %v721 = vpack.c.b16 %v505, %v497
  %v722 = vpack.c.b16 %v506, %v498
  %v723 = vpack.c.b16 %v507, %v499
  %v724 = vpack.c.b16 %v508, %v500
  %v725 = vpack.c.b16 %v509, %v501
  %v726 = vpack.c.b16 %v510, %v502
  %v727 = vpack.c.b16 %v519, %v511
  %v728 = vpack.c.b16 %v520, %v512
  %v729 = vpack.c.b16 %v521, %v513
  %v730 = vpack.c.b16 %v522, %v514
  %v731 = vpack.c.b16 %v523, %v515
  %v732 = vpack.c.b16 %v524, %v516
  %v733 = vpack.c.b16 %v525, %v517
  %v734 = vpack.c.b16 %v526, %v518
  %v735 = vpack.c.b16 %v535, %v527
  %v736 = vpack.c.b16 %v536, %v528
  %v737 = vpack.c.b16 %v537, %v529
  %v738 = vpack.c.b16 %v538, %v530
  %v739 = vpack.c.b16 %v539, %v531
  %v740 = vpack.c.b16 %v540, %v532
  %v741 = vpack.c.b16 %v541, %v533
  %v742 = vpack.c.b16 %v542, %v534
  %v743 = vpack.c.b16 %v551, %v543
  %v744 = vpack.c.b16 %v552, %v544
  %v745 = vpack.c.b16 %v553, %v545
  %v746 = vpack.c.b16 %v554, %v546
  %v747 = vpack.c.b16 %v555, %v547
  %v748 = vpack.c.b16 %v556, %v548
  %v749 = vpack.c.b16 %v557, %v549
  %v750 = vpack.c.b16 %v558, %v550
  %v751 = vpack.c.b16 %v567, %v559
  %v752 = vpack.c.b16 %v568, %v560
  %v753 = vpack.c.b16 %v569, %v561
  %v754 = vpack.c.b16 %v570, %v562
  %v755 = vpack.c.b16 %v571, %v563
  %v756 = vpack.c.b16 %v572, %v564
  %v757 = vpack.c.b16 %v573, %v565
  %v758 = vpack.c.b16 %v574, %v566
  %v759 = vpack.c.b16 %v583, %v575
  %v760 = vpack.c.b16 %v584, %v576
  %v761 = vpack.c.b16 %v585, %v577
  %v762 = vpack.c.b16 %v586, %v578
  %v763 = vpack.c.b16 %v587, %v579
  %v764 = vpack.c.b16 %v588, %v580
  %v765 = vpack.c.b16 %v589, %v581
  %v766 = vpack.c.b16 %v590, %v582
  %v767 = vpack.c.b16 %v599, %v591
  %v768 = vpack.c.b16 %v600, %v592
  %v769 = vpack.c.b16 %v601, %v593
  %v770 = vpack.c.b16 %v602, %v594
  %v771 = vpack.c.b16 %v603, %v595
  %v772 = vpack.c.b16 %v604, %v596
  %v773 = vpack.c.b16 %v605, %v597
  %v774 = vpack.c.b16 %v606, %v598
  %v775 = vpack.c.b16 %v615, %v607
  %v776 = vpack.c.b16 %v616, %v608
  %v777 = vpack.c.b16 %v617, %v609
  %v778 = vpack.c.b16 %v618, %v610
  %v779 = vpack.c.b16 %v619, %v611
  %v780 = vpack.c.b16 %v620, %v612
  %v781 = vpack.c.b16 %v621, %v613
  %v782 = vpack.c.b16 %v622, %v614
  %v783 = vpack.c.b16 %v631, %v623
  %v784 = vpack.c.b16 %v632, %v624
  %v785 = vpack.c.b16 %v633, %v625
  %v786 = vpack.c.b16 %v634, %v626
  %v787 = vpack.c.b16 %v635, %v627
  %v788 = vpack.c.b16 %v636, %v628
  %v789 = vpack.c.b16 %v637, %v629
  %v790 = vpack.c.b16 %v638, %v630
  %v791 = vpack.c.b16 %v647, %v639
  %v792 = vpack.c.b16 %v648, %v640
  %v793 = vpack.c.b16 %v649, %v641
  %v794 = vpack.c.b16 %v650, %v642
  %v795 = vpack.c.b16 %v651, %v643
  %v796 = vpack.c.b16 %v652, %v644
  %v797 = vpack.c.b16 %v653, %v645
  %v798 = vpack.c.b16 %v654, %v646
  %v799 = vpack.c.b16 %v663, %v655
  %v800 = vpack.c.b16 %v664, %v656
  %v801 = vpack.c.b16 %v665, %v657
  %v802 = vpack.c.b16 %v666, %v658
  %v803 = vpack.c.b16 %v667, %v659
  %v804 = vpack.c.b16 %v668, %v660
  %v805 = vpack.c.b16 %v669, %v661
  %v806 = vpack.c.b16 %v670, %v662
  %v807 = vpack.c.b16 %v679, %v671
  %v808 = vpack.c.b16 %v680, %v672
  %v809 = vpack.c.b16 %v681, %v673
  %v810 = vpack.c.b16 %v682, %v674
  %v811 = vpack.c.b16 %v683, %v675
  %v812 = vpack.c.b16 %v684, %v676
  %v813 = vpack.c.b16 %v685, %v677
  %v814 = vpack.c.b16 %v686, %v678
  %943 = vmatprep.subr.bf16.mxu0 %v688
  %944 = vmatpush1.bf16.msra.mxu0 %v687
  %945 = vmatprep.subr.bf16.mxu0 %v696
  %946 = vmatpush1.bf16.msra.mxu0 %v695
  %947 = vmatprep.subr.bf16.mxu0 %v704
  %948 = vmatpush1.bf16.msra.mxu0 %v703
  %949 = vmatprep.subr.bf16.mxu0 %v712
  %950 = vmatpush1.bf16.msra.mxu0 %v711
  %951 = vmatprep.subr.bf16.mxu0 %v720
  %952 = vmatpush1.bf16.msra.mxu0 %v719
  %953 = vmatprep.subr.bf16.mxu0 %v728
  %954 = vmatpush1.bf16.msra.mxu0 %v727
  %955 = vmatprep.subr.bf16.mxu0 %v736
  %956 = vmatpush1.bf16.msra.mxu0 %v735
  %957 = vmatprep.subr.bf16.mxu0 %v744
  %958 = vmatpush1.bf16.msra.mxu0 %v743
  %959 = vmatprep.subr.bf16.mxu0 %v752
  %960 = vmatpush1.bf16.msra.mxu0 %v751
  %961 = vmatprep.subr.bf16.mxu0 %v760
  %962 = vmatpush1.bf16.msra.mxu0 %v759
  %963 = vmatprep.subr.bf16.mxu0 %v768
  %964 = vmatpush1.bf16.msra.mxu0 %v767
  %965 = vmatprep.subr.bf16.mxu0 %v776
  %966 = vmatpush1.bf16.msra.mxu0 %v775
  %967 = vmatprep.subr.bf16.mxu0 %v784
  %968 = vmatpush1.bf16.msra.mxu0 %v783
  %969 = vmatprep.subr.bf16.mxu0 %v792
  %970 = vmatpush1.bf16.msra.mxu0 %v791
  %971 = vmatprep.subr.bf16.mxu0 %v800
  %972 = vmatpush1.bf16.msra.mxu0 %v799
  %973 = vmatprep.subr.bf16.mxu0 %v808
  %974 = vmatpush1.bf16.msra.mxu0 %v807
  %975 = vmatprep.mubr.bf16.mxu0 %v40
  %976 = vmatmul.mubr.bf16.gmra.mrb[0].mxu0 %v39
  %v977 = vpop.f32.mrb[0].mxu0
  %v978 = vadd.f32 0.0, %v977
  %v979 = vpop.f32.mrb[0].mxu0
  %v980 = vadd.f32 0.0, %v979
  %v981 = vpop.f32.mrb[0].mxu0
  %v982 = vpop.f32.mrb[0].mxu0
  %983 = vdwg.mxu0
  %984 = vmatprep.subr.bf16.mxu0 %v690
  %985 = vmatpush1.bf16.msra.mxu0 %v689
  %986 = vmatprep.subr.bf16.mxu0 %v698
  %987 = vmatpush1.bf16.msra.mxu0 %v697
  %988 = vmatprep.subr.bf16.mxu0 %v706
  %989 = vmatpush1.bf16.msra.mxu0 %v705
  %990 = vmatprep.subr.bf16.mxu0 %v714
  %991 = vmatpush1.bf16.msra.mxu0 %v713
  %992 = vmatprep.subr.bf16.mxu0 %v722
  %993 = vmatpush1.bf16.msra.mxu0 %v721
  %994 = vmatprep.subr.bf16.mxu0 %v730
  %995 = vmatpush1.bf16.msra.mxu0 %v729
  %996 = vmatprep.subr.bf16.mxu0 %v738
  %997 = vmatpush1.bf16.msra.mxu0 %v737
  %998 = vmatprep.subr.bf16.mxu0 %v746
  %999 = vmatpush1.bf16.msra.mxu0 %v745
  %1000 = vmatprep.subr.bf16.mxu0 %v754
  %1001 = vmatpush1.bf16.msra.mxu0 %v753
  %1002 = vmatprep.subr.bf16.mxu0 %v762
  %1003 = vmatpush1.bf16.msra.mxu0 %v761
  %1004 = vmatprep.subr.bf16.mxu0 %v770
  %1005 = vmatpush1.bf16.msra.mxu0 %v769
  %1006 = vmatprep.subr.bf16.mxu0 %v778
  %1007 = vmatpush1.bf16.msra.mxu0 %v777
  %1008 = vmatprep.subr.bf16.mxu0 %v786
  %1009 = vmatpush1.bf16.msra.mxu0 %v785
  %1010 = vmatprep.subr.bf16.mxu0 %v794
  %1011 = vmatpush1.bf16.msra.mxu0 %v793
  %1012 = vmatprep.subr.bf16.mxu0 %v802
  %1013 = vmatpush1.bf16.msra.mxu0 %v801
  %1014 = vmatprep.subr.bf16.mxu0 %v810
  %1015 = vmatpush1.bf16.msra.mxu0 %v809
  %1016 = vmatprep.mubr.bf16.mxu0 %v40
  %1017 = vmatmul.mubr.bf16.gmra.mrb[0].mxu0 %v39
  %v1018 = vpop.f32.mrb[0].mxu0
  %v1019 = vadd.f32 0.0, %v1018
  %v1020 = vpop.f32.mrb[0].mxu0
  %v1021 = vadd.f32 0.0, %v1020
  %v1022 = vpop.f32.mrb[0].mxu0
  %v1023 = vpop.f32.mrb[0].mxu0
  %1024 = vdwg.mxu0
  %1025 = vmatprep.subr.bf16.mxu0 %v692
  %1026 = vmatpush1.bf16.msra.mxu0 %v691
  %1027 = vmatprep.subr.bf16.mxu0 %v700
  %1028 = vmatpush1.bf16.msra.mxu0 %v699
  %1029 = vmatprep.subr.bf16.mxu0 %v708
  %1030 = vmatpush1.bf16.msra.mxu0 %v707
  %1031 = vmatprep.subr.bf16.mxu0 %v716
  %1032 = vmatpush1.bf16.msra.mxu0 %v715
  %1033 = vmatprep.subr.bf16.mxu0 %v724
  %1034 = vmatpush1.bf16.msra.mxu0 %v723
  %1035 = vmatprep.subr.bf16.mxu0 %v732
  %1036 = vmatpush1.bf16.msra.mxu0 %v731
  %1037 = vmatprep.subr.bf16.mxu0 %v740
  %1038 = vmatpush1.bf16.msra.mxu0 %v739
  %1039 = vmatprep.subr.bf16.mxu0 %v748
  %1040 = vmatpush1.bf16.msra.mxu0 %v747
  %1041 = vmatprep.subr.bf16.mxu0 %v756
  %1042 = vmatpush1.bf16.msra.mxu0 %v755
  %1043 = vmatprep.subr.bf16.mxu0 %v764
  %1044 = vmatpush1.bf16.msra.mxu0 %v763
  %1045 = vmatprep.subr.bf16.mxu0 %v772
  %1046 = vmatpush1.bf16.msra.mxu0 %v771
  %1047 = vmatprep.subr.bf16.mxu0 %v780
  %1048 = vmatpush1.bf16.msra.mxu0 %v779
  %1049 = vmatprep.subr.bf16.mxu0 %v788
  %1050 = vmatpush1.bf16.msra.mxu0 %v787
  %1051 = vmatprep.subr.bf16.mxu0 %v796
  %1052 = vmatpush1.bf16.msra.mxu0 %v795
  %1053 = vmatprep.subr.bf16.mxu0 %v804
  %1054 = vmatpush1.bf16.msra.mxu0 %v803
  %1055 = vmatprep.subr.bf16.mxu0 %v812
  %1056 = vmatpush1.bf16.msra.mxu0 %v811
  %1057 = vmatprep.mubr.bf16.mxu0 %v40
  %1058 = vmatmul.mubr.bf16.gmra.mrb[0].mxu0 %v39
  %v1059 = vpop.f32.mrb[0].mxu0
  %v1060 = vadd.f32 0.0, %v1059
  %v1061 = vpop.f32.mrb[0].mxu0
  %v1062 = vadd.f32 0.0, %v1061
  %v1063 = vpop.f32.mrb[0].mxu0
  %v1064 = vpop.f32.mrb[0].mxu0
  %1065 = vdwg.mxu0
  %1066 = vmatprep.subr.bf16.mxu0 %v694
  %1067 = vmatpush1.bf16.msra.mxu0 %v693
  %1068 = vmatprep.subr.bf16.mxu0 %v702
  %1069 = vmatpush1.bf16.msra.mxu0 %v701
  %1070 = vmatprep.subr.bf16.mxu0 %v710
  %1071 = vmatpush1.bf16.msra.mxu0 %v709
  %1072 = vmatprep.subr.bf16.mxu0 %v718
  %1073 = vmatpush1.bf16.msra.mxu0 %v717
  %1074 = vmatprep.subr.bf16.mxu0 %v726
  %1075 = vmatpush1.bf16.msra.mxu0 %v725
  %1076 = vmatprep.subr.bf16.mxu0 %v734
  %1077 = vmatpush1.bf16.msra.mxu0 %v733
  %1078 = vmatprep.subr.bf16.mxu0 %v742
  %1079 = vmatpush1.bf16.msra.mxu0 %v741
  %1080 = vmatprep.subr.bf16.mxu0 %v750
  %1081 = vmatpush1.bf16.msra.mxu0 %v749
  %1082 = vmatprep.subr.bf16.mxu0 %v758
  %1083 = vmatpush1.bf16.msra.mxu0 %v757
  %1084 = vmatprep.subr.bf16.mxu0 %v766
  %1085 = vmatpush1.bf16.msra.mxu0 %v765
  %1086 = vmatprep.subr.bf16.mxu0 %v774
  %1087 = vmatpush1.bf16.msra.mxu0 %v773
  %1088 = vmatprep.subr.bf16.mxu0 %v782
  %1089 = vmatpush1.bf16.msra.mxu0 %v781
  %1090 = vmatprep.subr.bf16.mxu0 %v790
  %1091 = vmatpush1.bf16.msra.mxu0 %v789
  %1092 = vmatprep.subr.bf16.mxu0 %v798
  %1093 = vmatpush1.bf16.msra.mxu0 %v797
  %1094 = vmatprep.subr.bf16.mxu0 %v806
  %1095 = vmatpush1.bf16.msra.mxu0 %v805
  %1096 = vmatprep.subr.bf16.mxu0 %v814
  %1097 = vmatpush1.bf16.msra.mxu0 %v813
  %1098 = vmatprep.mubr.bf16.mxu0 %v40
  %1099 = vmatmul.mubr.bf16.gmra.mrb[0].mxu0 %v39
  %v1100 = vpop.f32.mrb[0].mxu0
  %v1101 = vadd.f32 0.0, %v1100
  %v1102 = vpop.f32.mrb[0].mxu0
  %v1103 = vadd.f32 0.0, %v1102
  %v1104 = vpop.f32.mrb[0].mxu0
  %v1105 = vpop.f32.mrb[0].mxu0
  %1106 = vdwg.mxu0
  %v1235 = vunpack.c.l.b16 %v47
  %v1236 = vunpack.c.h.b16 %v47
  %v1237 = vunpack.c.l.b16 %v48
  %v1238 = vunpack.c.h.b16 %v48
  %v1239 = vunpack.c.l.b16 %v49
  %v1240 = vunpack.c.h.b16 %v49
  %v1241 = vunpack.c.l.b16 %v50
  %v1242 = vunpack.c.h.b16 %v50
  %v1243 = vunpack.c.l.b16 %v51
  %v1244 = vunpack.c.h.b16 %v51
  %v1245 = vunpack.c.l.b16 %v52
  %v1246 = vunpack.c.h.b16 %v52
  %v1247 = vunpack.c.l.b16 %v53
  %v1248 = vunpack.c.h.b16 %v53
  %v1249 = vunpack.c.l.b16 %v54
  %v1250 = vunpack.c.h.b16 %v54
  %v1251 = vunpack.c.l.b16 %v55
  %v1252 = vunpack.c.h.b16 %v55
  %v1253 = vunpack.c.l.b16 %v56
  %v1254 = vunpack.c.h.b16 %v56
  %v1255 = vunpack.c.l.b16 %v57
  %v1256 = vunpack.c.h.b16 %v57
  %v1257 = vunpack.c.l.b16 %v58
  %v1258 = vunpack.c.h.b16 %v58
  %v1259 = vunpack.c.l.b16 %v59
  %v1260 = vunpack.c.h.b16 %v59
  %v1261 = vunpack.c.l.b16 %v60
  %v1262 = vunpack.c.h.b16 %v60
  %v1263 = vunpack.c.l.b16 %v61
  %v1264 = vunpack.c.h.b16 %v61
  %v1265 = vunpack.c.l.b16 %v62
  %v1266 = vunpack.c.h.b16 %v62
  %v1267 = vunpack.c.l.b16 %v63
  %v1268 = vunpack.c.h.b16 %v63
  %v1269 = vunpack.c.l.b16 %v64
  %v1270 = vunpack.c.h.b16 %v64
  %v1271 = vunpack.c.l.b16 %v65
  %v1272 = vunpack.c.h.b16 %v65
  %v1273 = vunpack.c.l.b16 %v66
  %v1274 = vunpack.c.h.b16 %v66
  %v1275 = vunpack.c.l.b16 %v67
  %v1276 = vunpack.c.h.b16 %v67
  %v1277 = vunpack.c.l.b16 %v68
  %v1278 = vunpack.c.h.b16 %v68
  %v1279 = vunpack.c.l.b16 %v69
  %v1280 = vunpack.c.h.b16 %v69
  %v1281 = vunpack.c.l.b16 %v70
  %v1282 = vunpack.c.h.b16 %v70
  %v1283 = vunpack.c.l.b16 %v71
  %v1284 = vunpack.c.h.b16 %v71
  %v1285 = vunpack.c.l.b16 %v72
  %v1286 = vunpack.c.h.b16 %v72
  %v1287 = vunpack.c.l.b16 %v73
  %v1288 = vunpack.c.h.b16 %v73
  %v1289 = vunpack.c.l.b16 %v74
  %v1290 = vunpack.c.h.b16 %v74
  %v1291 = vunpack.c.l.b16 %v75
  %v1292 = vunpack.c.h.b16 %v75
  %v1293 = vunpack.c.l.b16 %v76
  %v1294 = vunpack.c.h.b16 %v76
  %v1295 = vunpack.c.l.b16 %v77
  %v1296 = vunpack.c.h.b16 %v77
  %v1297 = vunpack.c.l.b16 %v78
  %v1298 = vunpack.c.h.b16 %v78
  %v1299 = vunpack.c.l.b16 %v79
  %v1300 = vunpack.c.h.b16 %v79
  %v1301 = vunpack.c.l.b16 %v80
  %v1302 = vunpack.c.h.b16 %v80
  %v1303 = vunpack.c.l.b16 %v81
  %v1304 = vunpack.c.h.b16 %v81
  %v1305 = vunpack.c.l.b16 %v82
  %v1306 = vunpack.c.h.b16 %v82
  %v1307 = vunpack.c.l.b16 %v83
  %v1308 = vunpack.c.h.b16 %v83
  %v1309 = vunpack.c.l.b16 %v84
  %v1310 = vunpack.c.h.b16 %v84
  %v1311 = vunpack.c.l.b16 %v85
  %v1312 = vunpack.c.h.b16 %v85
  %v1313 = vunpack.c.l.b16 %v86
  %v1314 = vunpack.c.h.b16 %v86
  %v1315 = vunpack.c.l.b16 %v87
  %v1316 = vunpack.c.h.b16 %v87
  %v1317 = vunpack.c.l.b16 %v88
  %v1318 = vunpack.c.h.b16 %v88
  %v1319 = vunpack.c.l.b16 %v89
  %v1320 = vunpack.c.h.b16 %v89
  %v1321 = vunpack.c.l.b16 %v90
  %v1322 = vunpack.c.h.b16 %v90
  %v1323 = vunpack.c.l.b16 %v91
  %v1324 = vunpack.c.h.b16 %v91
  %v1325 = vunpack.c.l.b16 %v92
  %v1326 = vunpack.c.h.b16 %v92
  %v1327 = vunpack.c.l.b16 %v93
  %v1328 = vunpack.c.h.b16 %v93
  %v1329 = vunpack.c.l.b16 %v94
  %v1330 = vunpack.c.h.b16 %v94
  %v1331 = vunpack.c.l.b16 %v95
  %v1332 = vunpack.c.h.b16 %v95
  %v1333 = vunpack.c.l.b16 %v96
  %v1334 = vunpack.c.h.b16 %v96
  %v1335 = vunpack.c.l.b16 %v97
  %v1336 = vunpack.c.h.b16 %v97
  %v1337 = vunpack.c.l.b16 %v98
  %v1338 = vunpack.c.h.b16 %v98
  %v1339 = vunpack.c.l.b16 %v99
  %v1340 = vunpack.c.h.b16 %v99
  %v1341 = vunpack.c.l.b16 %v100
  %v1342 = vunpack.c.h.b16 %v100
  %v1343 = vunpack.c.l.b16 %v101
  %v1344 = vunpack.c.h.b16 %v101
  %v1345 = vunpack.c.l.b16 %v102
  %v1346 = vunpack.c.h.b16 %v102
  %v1347 = vunpack.c.l.b16 %v103
  %v1348 = vunpack.c.h.b16 %v103
  %v1349 = vunpack.c.l.b16 %v104
  %v1350 = vunpack.c.h.b16 %v104
  %v1351 = vunpack.c.l.b16 %v105
  %v1352 = vunpack.c.h.b16 %v105
  %v1353 = vunpack.c.l.b16 %v106
  %v1354 = vunpack.c.h.b16 %v106
  %v1355 = vunpack.c.l.b16 %v107
  %v1356 = vunpack.c.h.b16 %v107
  %v1357 = vunpack.c.l.b16 %v108
  %v1358 = vunpack.c.h.b16 %v108
  %v1359 = vunpack.c.l.b16 %v109
  %v1360 = vunpack.c.h.b16 %v109
  %v1361 = vunpack.c.l.b16 %v110
  %v1362 = vunpack.c.h.b16 %v110
  %v1363 = vunpack.c.l.b16 %v111
  %v1364 = vunpack.c.h.b16 %v111
  %v1365 = vunpack.c.l.b16 %v112
  %v1366 = vunpack.c.h.b16 %v112
  %v1367 = vunpack.c.l.b16 %v113
  %v1368 = vunpack.c.h.b16 %v113
  %v1369 = vunpack.c.l.b16 %v114
  %v1370 = vunpack.c.h.b16 %v114
  %v1371 = vunpack.c.l.b16 %v115
  %v1372 = vunpack.c.h.b16 %v115
  %v1373 = vunpack.c.l.b16 %v116
  %v1374 = vunpack.c.h.b16 %v116
  %v1375 = vunpack.c.l.b16 %v117
  %v1376 = vunpack.c.h.b16 %v117
  %v1377 = vunpack.c.l.b16 %v118
  %v1378 = vunpack.c.h.b16 %v118
  %v1379 = vunpack.c.l.b16 %v119
  %v1380 = vunpack.c.h.b16 %v119
  %v1381 = vunpack.c.l.b16 %v120
  %v1382 = vunpack.c.h.b16 %v120
  %v1383 = vunpack.c.l.b16 %v121
  %v1384 = vunpack.c.h.b16 %v121
  %v1385 = vunpack.c.l.b16 %v122
  %v1386 = vunpack.c.h.b16 %v122
  %v1387 = vunpack.c.l.b16 %v123
  %v1388 = vunpack.c.h.b16 %v123
  %v1389 = vunpack.c.l.b16 %v124
  %v1390 = vunpack.c.h.b16 %v124
  %v1391 = vunpack.c.l.b16 %v125
  %v1392 = vunpack.c.h.b16 %v125
  %v1393 = vunpack.c.l.b16 %v126
  %v1394 = vunpack.c.h.b16 %v126
  %v1395 = vunpack.c.l.b16 %v127
  %v1396 = vunpack.c.h.b16 %v127
  %v1397 = vunpack.c.l.b16 %v128
  %v1398 = vunpack.c.h.b16 %v128
  %v1399 = vunpack.c.l.b16 %v129
  %v1400 = vunpack.c.h.b16 %v129
  %v1401 = vunpack.c.l.b16 %v130
  %v1402 = vunpack.c.h.b16 %v130
  %v1403 = vunpack.c.l.b16 %v131
  %v1404 = vunpack.c.h.b16 %v131
  %v1405 = vunpack.c.l.b16 %v132
  %v1406 = vunpack.c.h.b16 %v132
  %v1407 = vunpack.c.l.b16 %v133
  %v1408 = vunpack.c.h.b16 %v133
  %v1409 = vunpack.c.l.b16 %v134
  %v1410 = vunpack.c.h.b16 %v134
  %v1411 = vunpack.c.l.b16 %v135
  %v1412 = vunpack.c.h.b16 %v135
  %v1413 = vunpack.c.l.b16 %v136
  %v1414 = vunpack.c.h.b16 %v136
  %v1415 = vunpack.c.l.b16 %v137
  %v1416 = vunpack.c.h.b16 %v137
  %v1417 = vunpack.c.l.b16 %v138
  %v1418 = vunpack.c.h.b16 %v138
  %v1419 = vunpack.c.l.b16 %v139
  %v1420 = vunpack.c.h.b16 %v139
  %v1421 = vunpack.c.l.b16 %v140
  %v1422 = vunpack.c.h.b16 %v140
  %v1423 = vunpack.c.l.b16 %v141
  %v1424 = vunpack.c.h.b16 %v141
  %v1425 = vunpack.c.l.b16 %v142
  %v1426 = vunpack.c.h.b16 %v142
  %v1427 = vunpack.c.l.b16 %v143
  %v1428 = vunpack.c.h.b16 %v143
  %v1429 = vunpack.c.l.b16 %v144
  %v1430 = vunpack.c.h.b16 %v144
  %v1431 = vunpack.c.l.b16 %v145
  %v1432 = vunpack.c.h.b16 %v145
  %v1433 = vunpack.c.l.b16 %v146
  %v1434 = vunpack.c.h.b16 %v146
  %v1435 = vunpack.c.l.b16 %v147
  %v1436 = vunpack.c.h.b16 %v147
  %v1437 = vunpack.c.l.b16 %v148
  %v1438 = vunpack.c.h.b16 %v148
  %v1439 = vunpack.c.l.b16 %v149
  %v1440 = vunpack.c.h.b16 %v149
  %v1441 = vunpack.c.l.b16 %v150
  %v1442 = vunpack.c.h.b16 %v150
  %v1443 = vunpack.c.l.b16 %v151
  %v1444 = vunpack.c.h.b16 %v151
  %v1445 = vunpack.c.l.b16 %v152
  %v1446 = vunpack.c.h.b16 %v152
  %v1447 = vunpack.c.l.b16 %v153
  %v1448 = vunpack.c.h.b16 %v153
  %v1449 = vunpack.c.l.b16 %v154
  %v1450 = vunpack.c.h.b16 %v154
  %v1451 = vunpack.c.l.b16 %v155
  %v1452 = vunpack.c.h.b16 %v155
  %v1453 = vunpack.c.l.b16 %v156
  %v1454 = vunpack.c.h.b16 %v156
  %v1455 = vunpack.c.l.b16 %v157
  %v1456 = vunpack.c.h.b16 %v157
  %v1457 = vunpack.c.l.b16 %v158
  %v1458 = vunpack.c.h.b16 %v158
  %v1459 = vunpack.c.l.b16 %v159
  %v1460 = vunpack.c.h.b16 %v159
  %v1461 = vunpack.c.l.b16 %v160
  %v1462 = vunpack.c.h.b16 %v160
  %v1463 = vunpack.c.l.b16 %v161
  %v1464 = vunpack.c.h.b16 %v161
  %v1465 = vunpack.c.l.b16 %v162
  %v1466 = vunpack.c.h.b16 %v162
  %v1467 = vunpack.c.l.b16 %v163
  %v1468 = vunpack.c.h.b16 %v163
  %v1469 = vunpack.c.l.b16 %v164
  %v1470 = vunpack.c.h.b16 %v164
  %v1471 = vunpack.c.l.b16 %v165
  %v1472 = vunpack.c.h.b16 %v165
  %v1473 = vunpack.c.l.b16 %v166
  %v1474 = vunpack.c.h.b16 %v166
  %v1475 = vunpack.c.l.b16 %v167
  %v1476 = vunpack.c.h.b16 %v167
  %v1477 = vunpack.c.l.b16 %v168
  %v1478 = vunpack.c.h.b16 %v168
  %v1479 = vunpack.c.l.b16 %v169
  %v1480 = vunpack.c.h.b16 %v169
  %v1481 = vunpack.c.l.b16 %v170
  %v1482 = vunpack.c.h.b16 %v170
  %v1483 = vunpack.c.l.b16 %v171
  %v1484 = vunpack.c.h.b16 %v171
  %v1485 = vunpack.c.l.b16 %v172
  %v1486 = vunpack.c.h.b16 %v172
  %v1487 = vunpack.c.l.b16 %v173
  %v1488 = vunpack.c.h.b16 %v173
  %v1489 = vunpack.c.l.b16 %v174
  %v1490 = vunpack.c.h.b16 %v174
  %v1491 = vpack.c.b16 %v1243, %v1235
  %v1492 = vpack.c.b16 %v1244, %v1236
  %v1493 = vpack.c.b16 %v1245, %v1237
  %v1494 = vpack.c.b16 %v1246, %v1238
  %v1495 = vpack.c.b16 %v1247, %v1239
  %v1496 = vpack.c.b16 %v1248, %v1240
  %v1497 = vpack.c.b16 %v1249, %v1241
  %v1498 = vpack.c.b16 %v1250, %v1242
  %v1499 = vpack.c.b16 %v1259, %v1251
  %v1500 = vpack.c.b16 %v1260, %v1252
  %v1501 = vpack.c.b16 %v1261, %v1253
  %v1502 = vpack.c.b16 %v1262, %v1254
  %v1503 = vpack.c.b16 %v1263, %v1255
  %v1504 = vpack.c.b16 %v1264, %v1256
  %v1505 = vpack.c.b16 %v1265, %v1257
  %v1506 = vpack.c.b16 %v1266, %v1258
  %v1507 = vpack.c.b16 %v1275, %v1267
  %v1508 = vpack.c.b16 %v1276, %v1268
  %v1509 = vpack.c.b16 %v1277, %v1269
  %v1510 = vpack.c.b16 %v1278, %v1270
  %v1511 = vpack.c.b16 %v1279, %v1271
  %v1512 = vpack.c.b16 %v1280, %v1272
  %v1513 = vpack.c.b16 %v1281, %v1273
  %v1514 = vpack.c.b16 %v1282, %v1274
  %v1515 = vpack.c.b16 %v1291, %v1283
  %v1516 = vpack.c.b16 %v1292, %v1284
  %v1517 = vpack.c.b16 %v1293, %v1285
  %v1518 = vpack.c.b16 %v1294, %v1286
  %v1519 = vpack.c.b16 %v1295, %v1287
  %v1520 = vpack.c.b16 %v1296, %v1288
  %v1521 = vpack.c.b16 %v1297, %v1289
  %v1522 = vpack.c.b16 %v1298, %v1290
  %v1523 = vpack.c.b16 %v1307, %v1299
  %v1524 = vpack.c.b16 %v1308, %v1300
  %v1525 = vpack.c.b16 %v1309, %v1301
  %v1526 = vpack.c.b16 %v1310, %v1302
  %v1527 = vpack.c.b16 %v1311, %v1303
  %v1528 = vpack.c.b16 %v1312, %v1304
  %v1529 = vpack.c.b16 %v1313, %v1305
  %v1530 = vpack.c.b16 %v1314, %v1306
  %v1531 = vpack.c.b16 %v1323, %v1315
  %v1532 = vpack.c.b16 %v1324, %v1316
  %v1533 = vpack.c.b16 %v1325, %v1317
  %v1534 = vpack.c.b16 %v1326, %v1318
  %v1535 = vpack.c.b16 %v1327, %v1319
  %v1536 = vpack.c.b16 %v1328, %v1320
  %v1537 = vpack.c.b16 %v1329, %v1321
  %v1538 = vpack.c.b16 %v1330, %v1322
  %v1539 = vpack.c.b16 %v1339, %v1331
  %v1540 = vpack.c.b16 %v1340, %v1332
  %v1541 = vpack.c.b16 %v1341, %v1333
  %v1542 = vpack.c.b16 %v1342, %v1334
  %v1543 = vpack.c.b16 %v1343, %v1335
  %v1544 = vpack.c.b16 %v1344, %v1336
  %v1545 = vpack.c.b16 %v1345, %v1337
  %v1546 = vpack.c.b16 %v1346, %v1338
  %v1547 = vpack.c.b16 %v1355, %v1347
  %v1548 = vpack.c.b16 %v1356, %v1348
  %v1549 = vpack.c.b16 %v1357, %v1349
  %v1550 = vpack.c.b16 %v1358, %v1350
  %v1551 = vpack.c.b16 %v1359, %v1351
  %v1552 = vpack.c.b16 %v1360, %v1352
  %v1553 = vpack.c.b16 %v1361, %v1353
  %v1554 = vpack.c.b16 %v1362, %v1354
  %v1555 = vpack.c.b16 %v1371, %v1363
  %v1556 = vpack.c.b16 %v1372, %v1364
  %v1557 = vpack.c.b16 %v1373, %v1365
  %v1558 = vpack.c.b16 %v1374, %v1366
  %v1559 = vpack.c.b16 %v1375, %v1367
  %v1560 = vpack.c.b16 %v1376, %v1368
  %v1561 = vpack.c.b16 %v1377, %v1369
  %v1562 = vpack.c.b16 %v1378, %v1370
  %v1563 = vpack.c.b16 %v1387, %v1379
  %v1564 = vpack.c.b16 %v1388, %v1380
  %v1565 = vpack.c.b16 %v1389, %v1381
  %v1566 = vpack.c.b16 %v1390, %v1382
  %v1567 = vpack.c.b16 %v1391, %v1383
  %v1568 = vpack.c.b16 %v1392, %v1384
  %v1569 = vpack.c.b16 %v1393, %v1385
  %v1570 = vpack.c.b16 %v1394, %v1386
  %v1571 = vpack.c.b16 %v1403, %v1395
  %v1572 = vpack.c.b16 %v1404, %v1396
  %v1573 = vpack.c.b16 %v1405, %v1397
  %v1574 = vpack.c.b16 %v1406, %v1398
  %v1575 = vpack.c.b16 %v1407, %v1399
  %v1576 = vpack.c.b16 %v1408, %v1400
  %v1577 = vpack.c.b16 %v1409, %v1401
  %v1578 = vpack.c.b16 %v1410, %v1402
  %v1579 = vpack.c.b16 %v1419, %v1411
  %v1580 = vpack.c.b16 %v1420, %v1412
  %v1581 = vpack.c.b16 %v1421, %v1413
  %v1582 = vpack.c.b16 %v1422, %v1414
  %v1583 = vpack.c.b16 %v1423, %v1415
  %v1584 = vpack.c.b16 %v1424, %v1416
  %v1585 = vpack.c.b16 %v1425, %v1417
  %v1586 = vpack.c.b16 %v1426, %v1418
  %v1587 = vpack.c.b16 %v1435, %v1427
  %v1588 = vpack.c.b16 %v1436, %v1428
  %v1589 = vpack.c.b16 %v1437, %v1429
  %v1590 = vpack.c.b16 %v1438, %v1430
  %v1591 = vpack.c.b16 %v1439, %v1431
  %v1592 = vpack.c.b16 %v1440, %v1432
  %v1593 = vpack.c.b16 %v1441, %v1433
  %v1594 = vpack.c.b16 %v1442, %v1434
  %v1595 = vpack.c.b16 %v1451, %v1443
  %v1596 = vpack.c.b16 %v1452, %v1444
  %v1597 = vpack.c.b16 %v1453, %v1445
  %v1598 = vpack.c.b16 %v1454, %v1446
  %v1599 = vpack.c.b16 %v1455, %v1447
  %v1600 = vpack.c.b16 %v1456, %v1448
  %v1601 = vpack.c.b16 %v1457, %v1449
  %v1602 = vpack.c.b16 %v1458, %v1450
  %v1603 = vpack.c.b16 %v1467, %v1459
  %v1604 = vpack.c.b16 %v1468, %v1460
  %v1605 = vpack.c.b16 %v1469, %v1461
  %v1606 = vpack.c.b16 %v1470, %v1462
  %v1607 = vpack.c.b16 %v1471, %v1463
  %v1608 = vpack.c.b16 %v1472, %v1464
  %v1609 = vpack.c.b16 %v1473, %v1465
  %v1610 = vpack.c.b16 %v1474, %v1466
  %v1611 = vpack.c.b16 %v1483, %v1475
  %v1612 = vpack.c.b16 %v1484, %v1476
  %v1613 = vpack.c.b16 %v1485, %v1477
  %v1614 = vpack.c.b16 %v1486, %v1478
  %v1615 = vpack.c.b16 %v1487, %v1479
  %v1616 = vpack.c.b16 %v1488, %v1480
  %v1617 = vpack.c.b16 %v1489, %v1481
  %v1618 = vpack.c.b16 %v1490, %v1482
  %1747 = vmatprep.subr.bf16.mxu0 %v1492
  %1748 = vmatpush1.bf16.msra.mxu0 %v1491
  %1749 = vmatprep.subr.bf16.mxu0 %v1500
  %1750 = vmatpush1.bf16.msra.mxu0 %v1499
  %1751 = vmatprep.subr.bf16.mxu0 %v1508
  %1752 = vmatpush1.bf16.msra.mxu0 %v1507
  %1753 = vmatprep.subr.bf16.mxu0 %v1516
  %1754 = vmatpush1.bf16.msra.mxu0 %v1515
  %1755 = vmatprep.subr.bf16.mxu0 %v1524
  %1756 = vmatpush1.bf16.msra.mxu0 %v1523
  %1757 = vmatprep.subr.bf16.mxu0 %v1532
  %1758 = vmatpush1.bf16.msra.mxu0 %v1531
  %1759 = vmatprep.subr.bf16.mxu0 %v1540
  %1760 = vmatpush1.bf16.msra.mxu0 %v1539
  %1761 = vmatprep.subr.bf16.mxu0 %v1548
  %1762 = vmatpush1.bf16.msra.mxu0 %v1547
  %1763 = vmatprep.subr.bf16.mxu0 %v1556
  %1764 = vmatpush1.bf16.msra.mxu0 %v1555
  %1765 = vmatprep.subr.bf16.mxu0 %v1564
  %1766 = vmatpush1.bf16.msra.mxu0 %v1563
  %1767 = vmatprep.subr.bf16.mxu0 %v1572
  %1768 = vmatpush1.bf16.msra.mxu0 %v1571
  %1769 = vmatprep.subr.bf16.mxu0 %v1580
  %1770 = vmatpush1.bf16.msra.mxu0 %v1579
  %1771 = vmatprep.subr.bf16.mxu0 %v1588
  %1772 = vmatpush1.bf16.msra.mxu0 %v1587
  %1773 = vmatprep.subr.bf16.mxu0 %v1596
  %1774 = vmatpush1.bf16.msra.mxu0 %v1595
  %1775 = vmatprep.subr.bf16.mxu0 %v1604
  %1776 = vmatpush1.bf16.msra.mxu0 %v1603
  %1777 = vmatprep.subr.bf16.mxu0 %v1612
  %1778 = vmatpush1.bf16.msra.mxu0 %v1611
  %1779 = vmatprep.mubr.bf16.mxu0 %v40
  %1780 = vmatmul.mubr.bf16.gmra.mrb[0].mxu0 %v39
  %v1781 = vpop.f32.mrb[0].mxu0
  %v1782 = vadd.f32 %v978, %v1781
  %v1783 = vpop.f32.mrb[0].mxu0
  %v1784 = vadd.f32 %v980, %v1783
  %v1785 = vpop.f32.mrb[0].mxu0
  %v1786 = vpop.f32.mrb[0].mxu0
  %1787 = vdwg.mxu0
  %1788 = vmatprep.subr.bf16.mxu0 %v1494
  %1789 = vmatpush1.bf16.msra.mxu0 %v1493
  %1790 = vmatprep.subr.bf16.mxu0 %v1502
  %1791 = vmatpush1.bf16.msra.mxu0 %v1501
  %1792 = vmatprep.subr.bf16.mxu0 %v1510
  %1793 = vmatpush1.bf16.msra.mxu0 %v1509
  %1794 = vmatprep.subr.bf16.mxu0 %v1518
  %1795 = vmatpush1.bf16.msra.mxu0 %v1517
  %1796 = vmatprep.subr.bf16.mxu0 %v1526
  %1797 = vmatpush1.bf16.msra.mxu0 %v1525
  %1798 = vmatprep.subr.bf16.mxu0 %v1534
  %1799 = vmatpush1.bf16.msra.mxu0 %v1533
  %1800 = vmatprep.subr.bf16.mxu0 %v1542
  %1801 = vmatpush1.bf16.msra.mxu0 %v1541
  %1802 = vmatprep.subr.bf16.mxu0 %v1550
  %1803 = vmatpush1.bf16.msra.mxu0 %v1549
  %1804 = vmatprep.subr.bf16.mxu0 %v1558
  %1805 = vmatpush1.bf16.msra.mxu0 %v1557
  %1806 = vmatprep.subr.bf16.mxu0 %v1566
  %1807 = vmatpush1.bf16.msra.mxu0 %v1565
  %1808 = vmatprep.subr.bf16.mxu0 %v1574
  %1809 = vmatpush1.bf16.msra.mxu0 %v1573
  %1810 = vmatprep.subr.bf16.mxu0 %v1582
  %1811 = vmatpush1.bf16.msra.mxu0 %v1581
  %1812 = vmatprep.subr.bf16.mxu0 %v1590
  %1813 = vmatpush1.bf16.msra.mxu0 %v1589
  %1814 = vmatprep.subr.bf16.mxu0 %v1598
  %1815 = vmatpush1.bf16.msra.mxu0 %v1597
  %1816 = vmatprep.subr.bf16.mxu0 %v1606
  %1817 = vmatpush1.bf16.msra.mxu0 %v1605
  %1818 = vmatprep.subr.bf16.mxu0 %v1614
  %1819 = vmatpush1.bf16.msra.mxu0 %v1613
  %1820 = vmatprep.mubr.bf16.mxu0 %v40
  %1821 = vmatmul.mubr.bf16.gmra.mrb[0].mxu0 %v39
  %v1822 = vpop.f32.mrb[0].mxu0
  %v1823 = vadd.f32 %v1019, %v1822
  %v1824 = vpop.f32.mrb[0].mxu0
  %v1825 = vadd.f32 %v1021, %v1824
  %v1826 = vpop.f32.mrb[0].mxu0
  %v1827 = vpop.f32.mrb[0].mxu0
  %1828 = vdwg.mxu0
  %1829 = vmatprep.subr.bf16.mxu0 %v1496
  %1830 = vmatpush1.bf16.msra.mxu0 %v1495
  %1831 = vmatprep.subr.bf16.mxu0 %v1504
  %1832 = vmatpush1.bf16.msra.mxu0 %v1503
  %1833 = vmatprep.subr.bf16.mxu0 %v1512
  %1834 = vmatpush1.bf16.msra.mxu0 %v1511
  %1835 = vmatprep.subr.bf16.mxu0 %v1520
  %1836 = vmatpush1.bf16.msra.mxu0 %v1519
  %1837 = vmatprep.subr.bf16.mxu0 %v1528
  %1838 = vmatpush1.bf16.msra.mxu0 %v1527
  %1839 = vmatprep.subr.bf16.mxu0 %v1536
  %1840 = vmatpush1.bf16.msra.mxu0 %v1535
  %1841 = vmatprep.subr.bf16.mxu0 %v1544
  %1842 = vmatpush1.bf16.msra.mxu0 %v1543
  %1843 = vmatprep.subr.bf16.mxu0 %v1552
  %1844 = vmatpush1.bf16.msra.mxu0 %v1551
  %1845 = vmatprep.subr.bf16.mxu0 %v1560
  %1846 = vmatpush1.bf16.msra.mxu0 %v1559
  %1847 = vmatprep.subr.bf16.mxu0 %v1568
  %1848 = vmatpush1.bf16.msra.mxu0 %v1567
  %1849 = vmatprep.subr.bf16.mxu0 %v1576
  %1850 = vmatpush1.bf16.msra.mxu0 %v1575
  %1851 = vmatprep.subr.bf16.mxu0 %v1584
  %1852 = vmatpush1.bf16.msra.mxu0 %v1583
  %1853 = vmatprep.subr.bf16.mxu0 %v1592
  %1854 = vmatpush1.bf16.msra.mxu0 %v1591
  %1855 = vmatprep.subr.bf16.mxu0 %v1600
  %1856 = vmatpush1.bf16.msra.mxu0 %v1599
  %1857 = vmatprep.subr.bf16.mxu0 %v1608
  %1858 = vmatpush1.bf16.msra.mxu0 %v1607
  %1859 = vmatprep.subr.bf16.mxu0 %v1616
  %1860 = vmatpush1.bf16.msra.mxu0 %v1615
  %1861 = vmatprep.mubr.bf16.mxu0 %v40
  %1862 = vmatmul.mubr.bf16.gmra.mrb[0].mxu0 %v39
  %v1863 = vpop.f32.mrb[0].mxu0
  %v1864 = vadd.f32 %v1060, %v1863
  %v1865 = vpop.f32.mrb[0].mxu0
  %v1866 = vadd.f32 %v1062, %v1865
  %v1867 = vpop.f32.mrb[0].mxu0
  %v1868 = vpop.f32.mrb[0].mxu0
  %1869 = vdwg.mxu0
  %1870 = vmatprep.subr.bf16.mxu0 %v1498
  %1871 = vmatpush1.bf16.msra.mxu0 %v1497
  %1872 = vmatprep.subr.bf16.mxu0 %v1506
  %1873 = vmatpush1.bf16.msra.mxu0 %v1505
  %1874 = vmatprep.subr.bf16.mxu0 %v1514
  %1875 = vmatpush1.bf16.msra.mxu0 %v1513
  %1876 = vmatprep.subr.bf16.mxu0 %v1522
  %1877 = vmatpush1.bf16.msra.mxu0 %v1521
  %1878 = vmatprep.subr.bf16.mxu0 %v1530
  %1879 = vmatpush1.bf16.msra.mxu0 %v1529
  %1880 = vmatprep.subr.bf16.mxu0 %v1538
  %1881 = vmatpush1.bf16.msra.mxu0 %v1537
  %1882 = vmatprep.subr.bf16.mxu0 %v1546
  %1883 = vmatpush1.bf16.msra.mxu0 %v1545
  %1884 = vmatprep.subr.bf16.mxu0 %v1554
  %1885 = vmatpush1.bf16.msra.mxu0 %v1553
  %1886 = vmatprep.subr.bf16.mxu0 %v1562
  %1887 = vmatpush1.bf16.msra.mxu0 %v1561
  %1888 = vmatprep.subr.bf16.mxu0 %v1570
  %1889 = vmatpush1.bf16.msra.mxu0 %v1569
  %1890 = vmatprep.subr.bf16.mxu0 %v1578
  %1891 = vmatpush1.bf16.msra.mxu0 %v1577
  %1892 = vmatprep.subr.bf16.mxu0 %v1586
  %1893 = vmatpush1.bf16.msra.mxu0 %v1585
  %1894 = vmatprep.subr.bf16.mxu0 %v1594
  %1895 = vmatpush1.bf16.msra.mxu0 %v1593
  %1896 = vmatprep.subr.bf16.mxu0 %v1602
  %1897 = vmatpush1.bf16.msra.mxu0 %v1601
  %1898 = vmatprep.subr.bf16.mxu0 %v1610
  %1899 = vmatpush1.bf16.msra.mxu0 %v1609
  %1900 = vmatprep.subr.bf16.mxu0 %v1618
  %1901 = vmatpush1.bf16.msra.mxu0 %v1617
  %1902 = vmatprep.mubr.bf16.mxu0 %v40
  %1903 = vmatmul.mubr.bf16.gmra.mrb[0].mxu0 %v39
  %v1904 = vpop.f32.mrb[0].mxu0
  %v1905 = vadd.f32 %v1101, %v1904
  %v1906 = vpop.f32.mrb[0].mxu0
  %v1907 = vadd.f32 %v1103, %v1906
  %v1908 = vpop.f32.mrb[0].mxu0
  %v1909 = vpop.f32.mrb[0].mxu0
  %1910 = vdwg.mxu0
  %1911 = vmatprep.subr.bf16.mxu0 %v1492
  %1912 = vmatpush1.bf16.msra.mxu0 %v1491
  %1913 = vmatprep.subr.bf16.mxu0 %v1500
  %1914 = vmatpush1.bf16.msra.mxu0 %v1499
  %1915 = vmatprep.subr.bf16.mxu0 %v1508
  %1916 = vmatpush1.bf16.msra.mxu0 %v1507
  %1917 = vmatprep.subr.bf16.mxu0 %v1516
  %1918 = vmatpush1.bf16.msra.mxu0 %v1515
  %1919 = vmatprep.subr.bf16.mxu0 %v1524
  %1920 = vmatpush1.bf16.msra.mxu0 %v1523
  %1921 = vmatprep.subr.bf16.mxu0 %v1532
  %1922 = vmatpush1.bf16.msra.mxu0 %v1531
  %1923 = vmatprep.subr.bf16.mxu0 %v1540
  %1924 = vmatpush1.bf16.msra.mxu0 %v1539
  %1925 = vmatprep.subr.bf16.mxu0 %v1548
  %1926 = vmatpush1.bf16.msra.mxu0 %v1547
  %1927 = vmatprep.subr.bf16.mxu0 %v1556
  %1928 = vmatpush1.bf16.msra.mxu0 %v1555
  %1929 = vmatprep.subr.bf16.mxu0 %v1564
  %1930 = vmatpush1.bf16.msra.mxu0 %v1563
  %1931 = vmatprep.subr.bf16.mxu0 %v1572
  %1932 = vmatpush1.bf16.msra.mxu0 %v1571
  %1933 = vmatprep.subr.bf16.mxu0 %v1580
  %1934 = vmatpush1.bf16.msra.mxu0 %v1579
  %1935 = vmatprep.subr.bf16.mxu0 %v1588
  %1936 = vmatpush1.bf16.msra.mxu0 %v1587
  %1937 = vmatprep.subr.bf16.mxu0 %v1596
  %1938 = vmatpush1.bf16.msra.mxu0 %v1595
  %1939 = vmatprep.subr.bf16.mxu0 %v1604
  %1940 = vmatpush1.bf16.msra.mxu0 %v1603
  %1941 = vmatprep.subr.bf16.mxu0 %v1612
  %1942 = vmatpush1.bf16.msra.mxu0 %v1611
  %1943 = vmatprep.mubr.bf16.mxu0 %v46
  %1944 = vmatmul.mubr.bf16.gmra.mrb[0].mxu0 %v45
  %v1945 = vpop.f32.mrb[0].mxu0
  %v1946 = vadd.f32 0.0, %v1945
  %v1947 = vpop.f32.mrb[0].mxu0
  %v1948 = vadd.f32 0.0, %v1947
  %v1949 = vpop.f32.mrb[0].mxu0
  %v1950 = vpop.f32.mrb[0].mxu0
  %1951 = vdwg.mxu0
  %1952 = vmatprep.subr.bf16.mxu0 %v1494
  %1953 = vmatpush1.bf16.msra.mxu0 %v1493
  %1954 = vmatprep.subr.bf16.mxu0 %v1502
  %1955 = vmatpush1.bf16.msra.mxu0 %v1501
  %1956 = vmatprep.subr.bf16.mxu0 %v1510
  %1957 = vmatpush1.bf16.msra.mxu0 %v1509
  %1958 = vmatprep.subr.bf16.mxu0 %v1518
  %1959 = vmatpush1.bf16.msra.mxu0 %v1517
  %1960 = vmatprep.subr.bf16.mxu0 %v1526
  %1961 = vmatpush1.bf16.msra.mxu0 %v1525
  %1962 = vmatprep.subr.bf16.mxu0 %v1534
  %1963 = vmatpush1.bf16.msra.mxu0 %v1533
  %1964 = vmatprep.subr.bf16.mxu0 %v1542
  %1965 = vmatpush1.bf16.msra.mxu0 %v1541
  %1966 = vmatprep.subr.bf16.mxu0 %v1550
  %1967 = vmatpush1.bf16.msra.mxu0 %v1549
  %1968 = vmatprep.subr.bf16.mxu0 %v1558
  %1969 = vmatpush1.bf16.msra.mxu0 %v1557
  %1970 = vmatprep.subr.bf16.mxu0 %v1566
  %1971 = vmatpush1.bf16.msra.mxu0 %v1565
  %1972 = vmatprep.subr.bf16.mxu0 %v1574
  %1973 = vmatpush1.bf16.msra.mxu0 %v1573
  %1974 = vmatprep.subr.bf16.mxu0 %v1582
  %1975 = vmatpush1.bf16.msra.mxu0 %v1581
  %1976 = vmatprep.subr.bf16.mxu0 %v1590
  %1977 = vmatpush1.bf16.msra.mxu0 %v1589
  %1978 = vmatprep.subr.bf16.mxu0 %v1598
  %1979 = vmatpush1.bf16.msra.mxu0 %v1597
  %1980 = vmatprep.subr.bf16.mxu0 %v1606
  %1981 = vmatpush1.bf16.msra.mxu0 %v1605
  %1982 = vmatprep.subr.bf16.mxu0 %v1614
  %1983 = vmatpush1.bf16.msra.mxu0 %v1613
  %1984 = vmatprep.mubr.bf16.mxu0 %v46
  %1985 = vmatmul.mubr.bf16.gmra.mrb[0].mxu0 %v45
  %v1986 = vpop.f32.mrb[0].mxu0
  %v1987 = vadd.f32 0.0, %v1986
  %v1988 = vpop.f32.mrb[0].mxu0
  %v1989 = vadd.f32 0.0, %v1988
  %v1990 = vpop.f32.mrb[0].mxu0
  %v1991 = vpop.f32.mrb[0].mxu0
  %1992 = vdwg.mxu0
  %1993 = vmatprep.subr.bf16.mxu0 %v1496
  %1994 = vmatpush1.bf16.msra.mxu0 %v1495
  %1995 = vmatprep.subr.bf16.mxu0 %v1504
  %1996 = vmatpush1.bf16.msra.mxu0 %v1503
  %1997 = vmatprep.subr.bf16.mxu0 %v1512
  %1998 = vmatpush1.bf16.msra.mxu0 %v1511
  %1999 = vmatprep.subr.bf16.mxu0 %v1520
  %2000 = vmatpush1.bf16.msra.mxu0 %v1519
  %2001 = vmatprep.subr.bf16.mxu0 %v1528
  %2002 = vmatpush1.bf16.msra.mxu0 %v1527
  %2003 = vmatprep.subr.bf16.mxu0 %v1536
  %2004 = vmatpush1.bf16.msra.mxu0 %v1535
  %2005 = vmatprep.subr.bf16.mxu0 %v1544
  %2006 = vmatpush1.bf16.msra.mxu0 %v1543
  %2007 = vmatprep.subr.bf16.mxu0 %v1552
  %2008 = vmatpush1.bf16.msra.mxu0 %v1551
  %2009 = vmatprep.subr.bf16.mxu0 %v1560
  %2010 = vmatpush1.bf16.msra.mxu0 %v1559
  %2011 = vmatprep.subr.bf16.mxu0 %v1568
  %2012 = vmatpush1.bf16.msra.mxu0 %v1567
  %2013 = vmatprep.subr.bf16.mxu0 %v1576
  %2014 = vmatpush1.bf16.msra.mxu0 %v1575
  %2015 = vmatprep.subr.bf16.mxu0 %v1584
  %2016 = vmatpush1.bf16.msra.mxu0 %v1583
  %2017 = vmatprep.subr.bf16.mxu0 %v1592
  %2018 = vmatpush1.bf16.msra.mxu0 %v1591
  %2019 = vmatprep.subr.bf16.mxu0 %v1600
  %2020 = vmatpush1.bf16.msra.mxu0 %v1599
  %2021 = vmatprep.subr.bf16.mxu0 %v1608
  %2022 = vmatpush1.bf16.msra.mxu0 %v1607
  %2023 = vmatprep.subr.bf16.mxu0 %v1616
  %2024 = vmatpush1.bf16.msra.mxu0 %v1615
  %2025 = vmatprep.mubr.bf16.mxu0 %v46
  %2026 = vmatmul.mubr.bf16.gmra.mrb[0].mxu0 %v45
  %v2027 = vpop.f32.mrb[0].mxu0
  %v2028 = vadd.f32 0.0, %v2027
  %v2029 = vpop.f32.mrb[0].mxu0
  %v2030 = vadd.f32 0.0, %v2029
  %v2031 = vpop.f32.mrb[0].mxu0
  %v2032 = vpop.f32.mrb[0].mxu0
  %2033 = vdwg.mxu0
  %2034 = vmatprep.subr.bf16.mxu0 %v1498
  %2035 = vmatpush1.bf16.msra.mxu0 %v1497
  %2036 = vmatprep.subr.bf16.mxu0 %v1506
  %2037 = vmatpush1.bf16.msra.mxu0 %v1505
  %2038 = vmatprep.subr.bf16.mxu0 %v1514
  %2039 = vmatpush1.bf16.msra.mxu0 %v1513
  %2040 = vmatprep.subr.bf16.mxu0 %v1522
  %2041 = vmatpush1.bf16.msra.mxu0 %v1521
  %2042 = vmatprep.subr.bf16.mxu0 %v1530
  %2043 = vmatpush1.bf16.msra.mxu0 %v1529
  %2044 = vmatprep.subr.bf16.mxu0 %v1538
  %2045 = vmatpush1.bf16.msra.mxu0 %v1537
  %2046 = vmatprep.subr.bf16.mxu0 %v1546
  %2047 = vmatpush1.bf16.msra.mxu0 %v1545
  %2048 = vmatprep.subr.bf16.mxu0 %v1554
  %2049 = vmatpush1.bf16.msra.mxu0 %v1553
  %2050 = vmatprep.subr.bf16.mxu0 %v1562
  %2051 = vmatpush1.bf16.msra.mxu0 %v1561
  %2052 = vmatprep.subr.bf16.mxu0 %v1570
  %2053 = vmatpush1.bf16.msra.mxu0 %v1569
  %2054 = vmatprep.subr.bf16.mxu0 %v1578
  %2055 = vmatpush1.bf16.msra.mxu0 %v1577
  %2056 = vmatprep.subr.bf16.mxu0 %v1586
  %2057 = vmatpush1.bf16.msra.mxu0 %v1585
  %2058 = vmatprep.subr.bf16.mxu0 %v1594
  %2059 = vmatpush1.bf16.msra.mxu0 %v1593
  %2060 = vmatprep.subr.bf16.mxu0 %v1602
  %2061 = vmatpush1.bf16.msra.mxu0 %v1601
  %2062 = vmatprep.subr.bf16.mxu0 %v1610
  %2063 = vmatpush1.bf16.msra.mxu0 %v1609
  %2064 = vmatprep.subr.bf16.mxu0 %v1618
  %2065 = vmatpush1.bf16.msra.mxu0 %v1617
  %2066 = vmatprep.mubr.bf16.mxu0 %v46
  %2067 = vmatmul.mubr.bf16.gmra.mrb[0].mxu0 %v45
  %v2068 = vpop.f32.mrb[0].mxu0
  %v2069 = vadd.f32 0.0, %v2068
  %v2070 = vpop.f32.mrb[0].mxu0
  %v2071 = vadd.f32 0.0, %v2070
  %v2072 = vpop.f32.mrb[0].mxu0
  %v2073 = vpop.f32.mrb[0].mxu0
  %2074 = vdwg.mxu0
  %v2075 = vadd.f32 %v1782, %v1946
  %v2076 = vadd.f32 %v1784, %v1948
  %v2077 = vadd.f32 %v1823, %v1987
  %v2078 = vadd.f32 %v1825, %v1989
  %v2079 = vadd.f32 %v1864, %v2028
  %v2080 = vadd.f32 %v1866, %v2030
  %v2081 = vadd.f32 %v1905, %v2069
  %v2082 = vadd.f32 %v1907, %v2071
  %v2083 = vld [vmem:[%s1] sm:$0xff]
  %vm2084 = vcmp.eq.f32.partialorder %v2083, 0.0
  %v2085 = vsel %vm2084, 0.0, 1.0
  %v2086 = vmul.f32 %v2085, 0.125
  %2088 = vset.pattern.permute.xlu0 0
  %2089 = vperm.xlu0 %2088, %v2086
  %v2090 = vpop.permute.xlu0 %2089
  %v2092 = vmul.f32 %v2090, %v2075
  %2093 = vset.pattern.permute.xlu0 1
  %2094 = vperm.xlu0 %2093, %v2086
  %v2095 = vpop.permute.xlu0 %2094
  %v2097 = vmul.f32 %v2095, %v2076
  %v2098 = vadd.f32 %v2092, %v2097
  %2099 = vset.pattern.permute.xlu0 2
  %2100 = vperm.xlu0 %2099, %v2086
  %v2101 = vpop.permute.xlu0 %2100
  %v2103 = vmul.f32 %v2101, %v2077
  %v2104 = vadd.f32 %v2098, %v2103
  %2105 = vset.pattern.permute.xlu0 3
  %2106 = vperm.xlu0 %2105, %v2086
  %v2107 = vpop.permute.xlu0 %2106
  %v2109 = vmul.f32 %v2107, %v2078
  %v2110 = vadd.f32 %v2104, %v2109
  %2111 = vset.pattern.permute.xlu0 4
  %2112 = vperm.xlu0 %2111, %v2086
  %v2113 = vpop.permute.xlu0 %2112
  %v2115 = vmul.f32 %v2113, %v2079
  %v2116 = vadd.f32 %v2110, %v2115
  %2117 = vset.pattern.permute.xlu0 5
  %2118 = vperm.xlu0 %2117, %v2086
  %v2119 = vpop.permute.xlu0 %2118
  %v2121 = vmul.f32 %v2119, %v2080
  %v2122 = vadd.f32 %v2116, %v2121
  %2123 = vset.pattern.permute.xlu0 6
  %2124 = vperm.xlu0 %2123, %v2086
  %v2125 = vpop.permute.xlu0 %2124
  %v2127 = vmul.f32 %v2125, %v2081
  %v2128 = vadd.f32 %v2122, %v2127
  %2129 = vset.pattern.permute.xlu0 7
  %2130 = vperm.xlu0 %2129, %v2086
  %v2131 = vpop.permute.xlu0 %2130
  %v2133 = vmul.f32 %v2131, %v2082
  %v2134 = vadd.f32 %v2128, %v2133
  %v2135 = vmul.f32 %v2134, %v2134
  %v2136 = vpack.c.bf16 %v2135, %v2135
  %v2137 = vunpack.c.l.bf16 %v2136
  %v2138 = vsub.f32 %v2135, %v2137
  %v2139 = vpack.c.bf16 %v2138, %v2138
  %v2156 = vunpack.c.l.b16 %v21
  %v2157 = vunpack.c.l.b16 %v22
  %v2158 = vunpack.c.l.b16 %v23
  %v2159 = vunpack.c.l.b16 %v24
  %v2160 = vunpack.c.l.b16 %v25
  %v2161 = vunpack.c.l.b16 %v26
  %v2162 = vunpack.c.l.b16 %v27
  %v2163 = vunpack.c.l.b16 %v28
  %v2164 = vunpack.c.l.b16 %v29
  %v2165 = vunpack.c.l.b16 %v30
  %v2166 = vunpack.c.l.b16 %v31
  %v2167 = vunpack.c.l.b16 %v32
  %v2168 = vunpack.c.l.b16 %v33
  %v2169 = vunpack.c.l.b16 %v34
  %v2170 = vunpack.c.l.b16 %v35
  %v2171 = vunpack.c.l.b16 %v36
  %v2172 = vpack.c.b16 %v2157, %v2156
  %v2173 = vpack.c.b16 %v2159, %v2158
  %v2174 = vpack.c.b16 %v2161, %v2160
  %v2175 = vpack.c.b16 %v2163, %v2162
  %v2176 = vpack.c.b16 %v2165, %v2164
  %v2177 = vpack.c.b16 %v2167, %v2166
  %v2178 = vpack.c.b16 %v2169, %v2168
  %v2179 = vpack.c.b16 %v2171, %v2170
  %2188 = vmatprep.subr.bf16.mxu0 0
  %2189 = vmatpush1.bf16.msra.mxu0 %v2172
  %2190 = vmatprep.subr.bf16.mxu0 0
  %2191 = vmatpush1.bf16.msra.mxu0 %v2173
  %2192 = vmatprep.subr.bf16.mxu0 0
  %2193 = vmatpush1.bf16.msra.mxu0 %v2174
  %2194 = vmatprep.subr.bf16.mxu0 0
  %2195 = vmatpush1.bf16.msra.mxu0 %v2175
  %2196 = vmatprep.subr.bf16.mxu0 0
  %2197 = vmatpush1.bf16.msra.mxu0 %v2176
  %2198 = vmatprep.subr.bf16.mxu0 0
  %2199 = vmatpush1.bf16.msra.mxu0 %v2177
  %2200 = vmatprep.subr.bf16.mxu0 0
  %2201 = vmatpush1.bf16.msra.mxu0 %v2178
  %2202 = vmatprep.subr.bf16.mxu0 0
  %2203 = vmatpush1.bf16.msra.mxu0 %v2179
  %2204 = vmatprep.subr.bf16.mxu0 0
  %2205 = vmatpush1.bf16.msra.mxu0 0
  %2206 = vmatprep.subr.bf16.mxu0 0
  %2207 = vmatpush1.bf16.msra.mxu0 0
  %2208 = vmatprep.subr.bf16.mxu0 0
  %2209 = vmatpush1.bf16.msra.mxu0 0
  %2210 = vmatprep.subr.bf16.mxu0 0
  %2211 = vmatpush1.bf16.msra.mxu0 0
  %2212 = vmatprep.subr.bf16.mxu0 0
  %2213 = vmatpush1.bf16.msra.mxu0 0
  %2214 = vmatprep.subr.bf16.mxu0 0
  %2215 = vmatpush1.bf16.msra.mxu0 0
  %2216 = vmatprep.subr.bf16.mxu0 0
  %2217 = vmatpush1.bf16.msra.mxu0 0
  %2218 = vmatprep.subr.bf16.mxu0 0
  %2219 = vmatpush1.bf16.msra.mxu0 0
  %2220 = vmatprep.mubr.bf16.mxu0 0
  %2221 = vmatmul.mubr.bf16.gmra.mrb[0].mxu0 %v2139
  %v2222 = vpop.f32.mrb[0].mxu0
  %v2223 = vadd.f32 0.0, %v2222
  %v2224 = vpop.f32.mrb[0].mxu0
  %v2225 = vpop.f32.mrb[0].mxu0
  %v2226 = vpop.f32.mrb[0].mxu0
  %2227 = vdwg.mxu0
  %2228 = vmatprep.subr.bf16.mxu0 0
  %2229 = vmatpush1.bf16.msra.mxu0 %v2172
  %2230 = vmatprep.subr.bf16.mxu0 0
  %2231 = vmatpush1.bf16.msra.mxu0 %v2173
  %2232 = vmatprep.subr.bf16.mxu0 0
  %2233 = vmatpush1.bf16.msra.mxu0 %v2174
  %2234 = vmatprep.subr.bf16.mxu0 0
  %2235 = vmatpush1.bf16.msra.mxu0 %v2175
  %2236 = vmatprep.subr.bf16.mxu0 0
  %2237 = vmatpush1.bf16.msra.mxu0 %v2176
  %2238 = vmatprep.subr.bf16.mxu0 0
  %2239 = vmatpush1.bf16.msra.mxu0 %v2177
  %2240 = vmatprep.subr.bf16.mxu0 0
  %2241 = vmatpush1.bf16.msra.mxu0 %v2178
  %2242 = vmatprep.subr.bf16.mxu0 0
  %2243 = vmatpush1.bf16.msra.mxu0 %v2179
  %2244 = vmatprep.subr.bf16.mxu0 0
  %2245 = vmatpush1.bf16.msra.mxu0 0
  %2246 = vmatprep.subr.bf16.mxu0 0
  %2247 = vmatpush1.bf16.msra.mxu0 0
  %2248 = vmatprep.subr.bf16.mxu0 0
  %2249 = vmatpush1.bf16.msra.mxu0 0
  %2250 = vmatprep.subr.bf16.mxu0 0
  %2251 = vmatpush1.bf16.msra.mxu0 0
  %2252 = vmatprep.subr.bf16.mxu0 0
  %2253 = vmatpush1.bf16.msra.mxu0 0
  %2254 = vmatprep.subr.bf16.mxu0 0
  %2255 = vmatpush1.bf16.msra.mxu0 0
  %2256 = vmatprep.subr.bf16.mxu0 0
  %2257 = vmatpush1.bf16.msra.mxu0 0
  %2258 = vmatprep.subr.bf16.mxu0 0
  %2259 = vmatpush1.bf16.msra.mxu0 0
  %2260 = vmatprep.mubr.bf16.mxu0 0
  %2261 = vmatmul.mubr.bf16.gmra.mrb[0].mxu0 %v2136
  %v2262 = vpop.f32.mrb[0].mxu0
  %v2263 = vadd.f32 %v2223, %v2262
  %v2264 = vpop.f32.mrb[0].mxu0
  %v2265 = vpop.f32.mrb[0].mxu0
  %v2266 = vpop.f32.mrb[0].mxu0
  %2267 = vdwg.mxu0
  %v2268 = vadd.f32 %v2263, 1.0
  %v2269 = vrcp.pop %v2268
  %v2270 = vmul.f32 %v2263, %v2269
  %v2271 = vadd.f32 %v2263, 1e-09
  %v2272 = vrsqrt.pop %v2271
  %v2273 = vmul.f32 %v2270, %v2272
  %v2274 = vmul.f32 %v2273, %v2134
  %v2275 = vmul.f32 %v2075, %v2274
  %v2276 = vmul.f32 %v2076, %v2274
  %v2277 = vmul.f32 %v2077, %v2274
  %v2278 = vmul.f32 %v2078, %v2274
  %v2279 = vmul.f32 %v2079, %v2274
  %v2280 = vmul.f32 %v2080, %v2274
  %v2281 = vmul.f32 %v2081, %v2274
  %v2282 = vmul.f32 %v2082, %v2274
  %v2283 = vpack.c.bf16 %v2276, %v2275
  %v2284 = vpack.c.bf16 %v2278, %v2277
  %v2285 = vpack.c.bf16 %v2280, %v2279
  %v2286 = vpack.c.bf16 %v2282, %v2281
  %v2287 = vunpack.c.l.bf16 %v2283
  %v2288 = vunpack.c.h.bf16 %v2283
  %v2289 = vunpack.c.l.bf16 %v2284
  %v2290 = vunpack.c.h.bf16 %v2284
  %v2291 = vunpack.c.l.bf16 %v2285
  %v2292 = vunpack.c.h.bf16 %v2285
  %v2293 = vunpack.c.l.bf16 %v2286
  %v2294 = vunpack.c.h.bf16 %v2286
  %v2295 = vsub.f32 %v2275, %v2287
  %v2296 = vsub.f32 %v2276, %v2288
  %v2297 = vsub.f32 %v2277, %v2289
  %v2298 = vsub.f32 %v2278, %v2290
  %v2299 = vsub.f32 %v2279, %v2291
  %v2300 = vsub.f32 %v2280, %v2292
  %v2301 = vsub.f32 %v2281, %v2293
  %v2302 = vsub.f32 %v2282, %v2294
  %v2303 = vpack.c.bf16 %v2296, %v2295
  %v2304 = vpack.c.bf16 %v2298, %v2297
  %v2305 = vpack.c.bf16 %v2300, %v2299
  %v2306 = vpack.c.bf16 %v2302, %v2301
  %2307 = vmatprep.subr.bf16.mxu0 0
  %2308 = vmatpush1.bf16.msra.mxu0 %v2172
  %2309 = vmatprep.subr.bf16.mxu0 0
  %2310 = vmatpush1.bf16.msra.mxu0 %v2173
  %2311 = vmatprep.subr.bf16.mxu0 0
  %2312 = vmatpush1.bf16.msra.mxu0 %v2174
  %2313 = vmatprep.subr.bf16.mxu0 0
  %2314 = vmatpush1.bf16.msra.mxu0 %v2175
  %2315 = vmatprep.subr.bf16.mxu0 0
  %2316 = vmatpush1.bf16.msra.mxu0 %v2176
  %2317 = vmatprep.subr.bf16.mxu0 0
  %2318 = vmatpush1.bf16.msra.mxu0 %v2177
  %2319 = vmatprep.subr.bf16.mxu0 0
  %2320 = vmatpush1.bf16.msra.mxu0 %v2178
  %2321 = vmatprep.subr.bf16.mxu0 0
  %2322 = vmatpush1.bf16.msra.mxu0 %v2179
  %2323 = vmatprep.subr.bf16.mxu0 0
  %2324 = vmatpush1.bf16.msra.mxu0 0
  %2325 = vmatprep.subr.bf16.mxu0 0
  %2326 = vmatpush1.bf16.msra.mxu0 0
  %2327 = vmatprep.subr.bf16.mxu0 0
  %2328 = vmatpush1.bf16.msra.mxu0 0
  %2329 = vmatprep.subr.bf16.mxu0 0
  %2330 = vmatpush1.bf16.msra.mxu0 0
  %2331 = vmatprep.subr.bf16.mxu0 0
  %2332 = vmatpush1.bf16.msra.mxu0 0
  %2333 = vmatprep.subr.bf16.mxu0 0
  %2334 = vmatpush1.bf16.msra.mxu0 0
  %2335 = vmatprep.subr.bf16.mxu0 0
  %2336 = vmatpush1.bf16.msra.mxu0 0
  %2337 = vmatprep.subr.bf16.mxu0 0
  %2338 = vmatpush1.bf16.msra.mxu0 0
  %2339 = vmatprep.mubr.bf16.mxu0 0
  %2340 = vmatmul.mubr.bf16.gmra.mrb[0].mxu0 %v2303
  %v2341 = vpop.f32.mrb[0].mxu0
  %v2342 = vadd.f32 0.0, %v2341
  %v2343 = vpop.f32.mrb[0].mxu0
  %v2344 = vpop.f32.mrb[0].mxu0
  %v2345 = vadd.f32 0.0, %v2344
  %v2346 = vpop.f32.mrb[0].mxu0
  %2347 = vmatprep.mubr.bf16.mxu0 0
  %2348 = vmatmul.mubr.bf16.gmra.mrb[0].mxu0 %v2304
  %v2349 = vpop.f32.mrb[0].mxu0
  %v2350 = vadd.f32 0.0, %v2349
  %v2351 = vpop.f32.mrb[0].mxu0
  %v2352 = vpop.f32.mrb[0].mxu0
  %v2353 = vadd.f32 0.0, %v2352
  %v2354 = vpop.f32.mrb[0].mxu0
  %2355 = vmatprep.mubr.bf16.mxu0 0
  %2356 = vmatmul.mubr.bf16.gmra.mrb[0].mxu0 %v2305
  %v2357 = vpop.f32.mrb[0].mxu0
  %v2358 = vadd.f32 0.0, %v2357
  %v2359 = vpop.f32.mrb[0].mxu0
  %v2360 = vpop.f32.mrb[0].mxu0
  %v2361 = vadd.f32 0.0, %v2360
  %v2362 = vpop.f32.mrb[0].mxu0
  %2363 = vmatprep.mubr.bf16.mxu0 0
  %2364 = vmatmul.mubr.bf16.gmra.mrb[0].mxu0 %v2306
  %v2365 = vpop.f32.mrb[0].mxu0
  %v2366 = vadd.f32 0.0, %v2365
  %v2367 = vpop.f32.mrb[0].mxu0
  %v2368 = vpop.f32.mrb[0].mxu0
  %v2369 = vadd.f32 0.0, %v2368
  %v2370 = vpop.f32.mrb[0].mxu0
  %2371 = vdwg.mxu0
  %2372 = vmatprep.subr.bf16.mxu0 0
  %2373 = vmatpush1.bf16.msra.mxu0 %v2172
  %2374 = vmatprep.subr.bf16.mxu0 0
  %2375 = vmatpush1.bf16.msra.mxu0 %v2173
  %2376 = vmatprep.subr.bf16.mxu0 0
  %2377 = vmatpush1.bf16.msra.mxu0 %v2174
  %2378 = vmatprep.subr.bf16.mxu0 0
  %2379 = vmatpush1.bf16.msra.mxu0 %v2175
  %2380 = vmatprep.subr.bf16.mxu0 0
  %2381 = vmatpush1.bf16.msra.mxu0 %v2176
  %2382 = vmatprep.subr.bf16.mxu0 0
  %2383 = vmatpush1.bf16.msra.mxu0 %v2177
  %2384 = vmatprep.subr.bf16.mxu0 0
  %2385 = vmatpush1.bf16.msra.mxu0 %v2178
  %2386 = vmatprep.subr.bf16.mxu0 0
  %2387 = vmatpush1.bf16.msra.mxu0 %v2179
  %2388 = vmatprep.subr.bf16.mxu0 0
  %2389 = vmatpush1.bf16.msra.mxu0 0
  %2390 = vmatprep.subr.bf16.mxu0 0
  %2391 = vmatpush1.bf16.msra.mxu0 0
  %2392 = vmatprep.subr.bf16.mxu0 0
  %2393 = vmatpush1.bf16.msra.mxu0 0
  %2394 = vmatprep.subr.bf16.mxu0 0
  %2395 = vmatpush1.bf16.msra.mxu0 0
  %2396 = vmatprep.subr.bf16.mxu0 0
  %2397 = vmatpush1.bf16.msra.mxu0 0
  %2398 = vmatprep.subr.bf16.mxu0 0
  %2399 = vmatpush1.bf16.msra.mxu0 0
  %2400 = vmatprep.subr.bf16.mxu0 0
  %2401 = vmatpush1.bf16.msra.mxu0 0
  %2402 = vmatprep.subr.bf16.mxu0 0
  %2403 = vmatpush1.bf16.msra.mxu0 0
  %2404 = vmatprep.mubr.bf16.mxu0 0
  %2405 = vmatmul.mubr.bf16.gmra.mrb[0].mxu0 %v2283
  %v2406 = vpop.f32.mrb[0].mxu0
  %v2407 = vadd.f32 %v2342, %v2406
  %v2408 = vpop.f32.mrb[0].mxu0
  %v2409 = vpop.f32.mrb[0].mxu0
  %v2410 = vadd.f32 %v2345, %v2409
  %v2411 = vpop.f32.mrb[0].mxu0
  %2412 = vmatprep.mubr.bf16.mxu0 0
  %2413 = vmatmul.mubr.bf16.gmra.mrb[0].mxu0 %v2284
  %v2414 = vpop.f32.mrb[0].mxu0
  %v2415 = vadd.f32 %v2350, %v2414
  %v2416 = vpop.f32.mrb[0].mxu0
  %v2417 = vpop.f32.mrb[0].mxu0
  %v2418 = vadd.f32 %v2353, %v2417
  %v2419 = vpop.f32.mrb[0].mxu0
  %2420 = vmatprep.mubr.bf16.mxu0 0
  %2421 = vmatmul.mubr.bf16.gmra.mrb[0].mxu0 %v2285
  %v2422 = vpop.f32.mrb[0].mxu0
  %v2423 = vadd.f32 %v2358, %v2422
  %v2424 = vpop.f32.mrb[0].mxu0
  %v2425 = vpop.f32.mrb[0].mxu0
  %v2426 = vadd.f32 %v2361, %v2425
  %v2427 = vpop.f32.mrb[0].mxu0
  %2428 = vmatprep.mubr.bf16.mxu0 0
  %2429 = vmatmul.mubr.bf16.gmra.mrb[0].mxu0 %v2286
  %v2430 = vpop.f32.mrb[0].mxu0
  %v2431 = vadd.f32 %v2366, %v2430
  %v2432 = vpop.f32.mrb[0].mxu0
  %v2433 = vpop.f32.mrb[0].mxu0
  %v2434 = vadd.f32 %v2369, %v2433
  %v2435 = vpop.f32.mrb[0].mxu0
  %2436 = vdwg.mxu0
  %v2437 = vmax.f32 %v2407, %v2410
  %v2438 = vmax.f32 %v2437, %v2415
  %v2439 = vmax.f32 %v2438, %v2418
  %v2440 = vmax.f32 %v2439, %v2423
  %v2441 = vmax.f32 %v2440, %v2426
  %v2442 = vmax.f32 %v2441, %v2431
  %v2443 = vmax.f32 %v2442, %v2434
  %v2444 = vsub.f32 %v2407, %v2443
  %v2445 = vmul.f32 %v2444, 1.442695
  %v2446 = vpow.pop %v2445
  %v2447 = vsub.f32 %v2410, %v2443
  %v2448 = vmul.f32 %v2447, 1.442695
  %v2449 = vpow.pop %v2448
  %v2450 = vsub.f32 %v2415, %v2443
  %v2451 = vmul.f32 %v2450, 1.442695
  %v2452 = vpow.pop %v2451
  %v2453 = vsub.f32 %v2418, %v2443
  %v2454 = vmul.f32 %v2453, 1.442695
  %v2455 = vpow.pop %v2454
  %v2456 = vsub.f32 %v2423, %v2443
  %v2457 = vmul.f32 %v2456, 1.442695
  %v2458 = vpow.pop %v2457
  %v2459 = vsub.f32 %v2426, %v2443
  %v2460 = vmul.f32 %v2459, 1.442695
  %v2461 = vpow.pop %v2460
  %v2462 = vsub.f32 %v2431, %v2443
  %v2463 = vmul.f32 %v2462, 1.442695
  %v2464 = vpow.pop %v2463
  %v2465 = vsub.f32 %v2434, %v2443
  %v2466 = vmul.f32 %v2465, 1.442695
  %v2467 = vpow.pop %v2466
  %v2468 = vadd.f32 %v2446, %v2449
  %v2469 = vadd.f32 %v2468, %v2452
  %v2470 = vadd.f32 %v2469, %v2455
  %v2471 = vadd.f32 %v2470, %v2458
  %v2472 = vadd.f32 %v2471, %v2461
  %v2473 = vadd.f32 %v2472, %v2464
  %v2474 = vadd.f32 %v2473, %v2467
  %v2475 = vrcp.pop %v2474
  %v2476 = vmul.f32 %v2474, %v2475
  %v2477 = vsub.f32 2.0, %v2476
  %v2478 = vmul.f32 %v2475, %v2477
  %v2479 = vmul.f32 %v2446, %v2478
  %2481 = vset.pattern.permute.xlu0 0
  %2482 = vperm.xlu0 %2481, %v2085
  %v2483 = vpop.permute.xlu0 %2482
  %v2485 = vmul.f32 %v2479, %v2483
  %v2486 = vmul.f32 %v2449, %v2478
  %2487 = vset.pattern.permute.xlu0 1
  %2488 = vperm.xlu0 %2487, %v2085
  %v2489 = vpop.permute.xlu0 %2488
  %v2491 = vmul.f32 %v2486, %v2489
  %v2492 = vmul.f32 %v2452, %v2478
  %2493 = vset.pattern.permute.xlu0 2
  %2494 = vperm.xlu0 %2493, %v2085
  %v2495 = vpop.permute.xlu0 %2494
  %v2497 = vmul.f32 %v2492, %v2495
  %v2498 = vmul.f32 %v2455, %v2478
  %2499 = vset.pattern.permute.xlu0 3
  %2500 = vperm.xlu0 %2499, %v2085
  %v2501 = vpop.permute.xlu0 %2500
  %v2503 = vmul.f32 %v2498, %v2501
  %v2504 = vmul.f32 %v2458, %v2478
  %2505 = vset.pattern.permute.xlu0 4
  %2506 = vperm.xlu0 %2505, %v2085
  %v2507 = vpop.permute.xlu0 %2506
  %v2509 = vmul.f32 %v2504, %v2507
  %v2510 = vmul.f32 %v2461, %v2478
  %2511 = vset.pattern.permute.xlu0 5
  %2512 = vperm.xlu0 %2511, %v2085
  %v2513 = vpop.permute.xlu0 %2512
  %v2515 = vmul.f32 %v2510, %v2513
  %v2516 = vmul.f32 %v2464, %v2478
  %2517 = vset.pattern.permute.xlu0 6
  %2518 = vperm.xlu0 %2517, %v2085
  %v2519 = vpop.permute.xlu0 %2518
  %v2521 = vmul.f32 %v2516, %v2519
  %v2522 = vmul.f32 %v2467, %v2478
  %2523 = vset.pattern.permute.xlu0 7
  %2524 = vperm.xlu0 %2523, %v2085
  %v2525 = vpop.permute.xlu0 %2524
  %v2527 = vmul.f32 %v2522, %v2525
  %v2528 = vmul.f32 %v2485, %v2075
  %v2529 = vmul.f32 %v2491, %v2076
  %v2530 = vadd.f32 %v2528, %v2529
  %v2531 = vmul.f32 %v2497, %v2077
  %v2532 = vadd.f32 %v2530, %v2531
  %v2533 = vmul.f32 %v2503, %v2078
  %v2534 = vadd.f32 %v2532, %v2533
  %v2535 = vmul.f32 %v2509, %v2079
  %v2536 = vadd.f32 %v2534, %v2535
  %v2537 = vmul.f32 %v2515, %v2080
  %v2538 = vadd.f32 %v2536, %v2537
  %v2539 = vmul.f32 %v2521, %v2081
  %v2540 = vadd.f32 %v2538, %v2539
  %v2541 = vmul.f32 %v2527, %v2082
  %v2542 = vadd.f32 %v2540, %v2541
  %v2543 = vmul.f32 %v2542, %v2542
  %v2544 = vpack.c.bf16 %v2543, %v2543
  %v2545 = vunpack.c.l.bf16 %v2544
  %v2546 = vsub.f32 %v2543, %v2545
  %v2547 = vpack.c.bf16 %v2546, %v2546
  %2548 = vmatprep.subr.bf16.mxu0 0
  %2549 = vmatpush1.bf16.msra.mxu0 %v2172
  %2550 = vmatprep.subr.bf16.mxu0 0
  %2551 = vmatpush1.bf16.msra.mxu0 %v2173
  %2552 = vmatprep.subr.bf16.mxu0 0
  %2553 = vmatpush1.bf16.msra.mxu0 %v2174
  %2554 = vmatprep.subr.bf16.mxu0 0
  %2555 = vmatpush1.bf16.msra.mxu0 %v2175
  %2556 = vmatprep.subr.bf16.mxu0 0
  %2557 = vmatpush1.bf16.msra.mxu0 %v2176
  %2558 = vmatprep.subr.bf16.mxu0 0
  %2559 = vmatpush1.bf16.msra.mxu0 %v2177
  %2560 = vmatprep.subr.bf16.mxu0 0
  %2561 = vmatpush1.bf16.msra.mxu0 %v2178
  %2562 = vmatprep.subr.bf16.mxu0 0
  %2563 = vmatpush1.bf16.msra.mxu0 %v2179
  %2564 = vmatprep.subr.bf16.mxu0 0
  %2565 = vmatpush1.bf16.msra.mxu0 0
  %2566 = vmatprep.subr.bf16.mxu0 0
  %2567 = vmatpush1.bf16.msra.mxu0 0
  %2568 = vmatprep.subr.bf16.mxu0 0
  %2569 = vmatpush1.bf16.msra.mxu0 0
  %2570 = vmatprep.subr.bf16.mxu0 0
  %2571 = vmatpush1.bf16.msra.mxu0 0
  %2572 = vmatprep.subr.bf16.mxu0 0
  %2573 = vmatpush1.bf16.msra.mxu0 0
  %2574 = vmatprep.subr.bf16.mxu0 0
  %2575 = vmatpush1.bf16.msra.mxu0 0
  %2576 = vmatprep.subr.bf16.mxu0 0
  %2577 = vmatpush1.bf16.msra.mxu0 0
  %2578 = vmatprep.subr.bf16.mxu0 0
  %2579 = vmatpush1.bf16.msra.mxu0 0
  %2580 = vmatprep.mubr.bf16.mxu0 0
  %2581 = vmatmul.mubr.bf16.gmra.mrb[0].mxu0 %v2547
  %v2582 = vpop.f32.mrb[0].mxu0
  %v2583 = vadd.f32 0.0, %v2582
  %v2584 = vpop.f32.mrb[0].mxu0
  %v2585 = vpop.f32.mrb[0].mxu0
  %v2586 = vpop.f32.mrb[0].mxu0
  %2587 = vdwg.mxu0
  %2588 = vmatprep.subr.bf16.mxu0 0
  %2589 = vmatpush1.bf16.msra.mxu0 %v2172
  %2590 = vmatprep.subr.bf16.mxu0 0
  %2591 = vmatpush1.bf16.msra.mxu0 %v2173
  %2592 = vmatprep.subr.bf16.mxu0 0
  %2593 = vmatpush1.bf16.msra.mxu0 %v2174
  %2594 = vmatprep.subr.bf16.mxu0 0
  %2595 = vmatpush1.bf16.msra.mxu0 %v2175
  %2596 = vmatprep.subr.bf16.mxu0 0
  %2597 = vmatpush1.bf16.msra.mxu0 %v2176
  %2598 = vmatprep.subr.bf16.mxu0 0
  %2599 = vmatpush1.bf16.msra.mxu0 %v2177
  %2600 = vmatprep.subr.bf16.mxu0 0
  %2601 = vmatpush1.bf16.msra.mxu0 %v2178
  %2602 = vmatprep.subr.bf16.mxu0 0
  %2603 = vmatpush1.bf16.msra.mxu0 %v2179
  %2604 = vmatprep.subr.bf16.mxu0 0
  %2605 = vmatpush1.bf16.msra.mxu0 0
  %2606 = vmatprep.subr.bf16.mxu0 0
  %2607 = vmatpush1.bf16.msra.mxu0 0
  %2608 = vmatprep.subr.bf16.mxu0 0
  %2609 = vmatpush1.bf16.msra.mxu0 0
  %2610 = vmatprep.subr.bf16.mxu0 0
  %2611 = vmatpush1.bf16.msra.mxu0 0
  %2612 = vmatprep.subr.bf16.mxu0 0
  %2613 = vmatpush1.bf16.msra.mxu0 0
  %2614 = vmatprep.subr.bf16.mxu0 0
  %2615 = vmatpush1.bf16.msra.mxu0 0
  %2616 = vmatprep.subr.bf16.mxu0 0
  %2617 = vmatpush1.bf16.msra.mxu0 0
  %2618 = vmatprep.subr.bf16.mxu0 0
  %2619 = vmatpush1.bf16.msra.mxu0 0
  %2620 = vmatprep.mubr.bf16.mxu0 0
  %2621 = vmatmul.mubr.bf16.gmra.mrb[0].mxu0 %v2544
  %v2622 = vpop.f32.mrb[0].mxu0
  %v2623 = vadd.f32 %v2583, %v2622
  %v2624 = vpop.f32.mrb[0].mxu0
  %v2625 = vpop.f32.mrb[0].mxu0
  %v2626 = vpop.f32.mrb[0].mxu0
  %2627 = vdwg.mxu0
  %v2628 = vadd.f32 %v2623, 1.0
  %v2629 = vrcp.pop %v2628
  %v2630 = vmul.f32 %v2623, %v2629
  %v2631 = vadd.f32 %v2623, 1e-09
  %v2632 = vrsqrt.pop %v2631
  %v2633 = vmul.f32 %v2630, %v2632
  %v2634 = vmul.f32 %v2633, %v2542
  %v2635 = vmul.f32 %v2075, %v2634
  %v2636 = vmul.f32 %v2076, %v2634
  %v2637 = vmul.f32 %v2077, %v2634
  %v2638 = vmul.f32 %v2078, %v2634
  %v2639 = vmul.f32 %v2079, %v2634
  %v2640 = vmul.f32 %v2080, %v2634
  %v2641 = vmul.f32 %v2081, %v2634
  %v2642 = vmul.f32 %v2082, %v2634
  %v2643 = vpack.c.bf16 %v2636, %v2635
  %v2644 = vpack.c.bf16 %v2638, %v2637
  %v2645 = vpack.c.bf16 %v2640, %v2639
  %v2646 = vpack.c.bf16 %v2642, %v2641
  %v2647 = vunpack.c.l.bf16 %v2643
  %v2648 = vunpack.c.h.bf16 %v2643
  %v2649 = vunpack.c.l.bf16 %v2644
  %v2650 = vunpack.c.h.bf16 %v2644
  %v2651 = vunpack.c.l.bf16 %v2645
  %v2652 = vunpack.c.h.bf16 %v2645
  %v2653 = vunpack.c.l.bf16 %v2646
  %v2654 = vunpack.c.h.bf16 %v2646
  %v2655 = vsub.f32 %v2635, %v2647
  %v2656 = vsub.f32 %v2636, %v2648
  %v2657 = vsub.f32 %v2637, %v2649
  %v2658 = vsub.f32 %v2638, %v2650
  %v2659 = vsub.f32 %v2639, %v2651
  %v2660 = vsub.f32 %v2640, %v2652
  %v2661 = vsub.f32 %v2641, %v2653
  %v2662 = vsub.f32 %v2642, %v2654
  %v2663 = vpack.c.bf16 %v2656, %v2655
  %v2664 = vpack.c.bf16 %v2658, %v2657
  %v2665 = vpack.c.bf16 %v2660, %v2659
  %v2666 = vpack.c.bf16 %v2662, %v2661
  %2667 = vmatprep.subr.bf16.mxu0 0
  %2668 = vmatpush1.bf16.msra.mxu0 %v2172
  %2669 = vmatprep.subr.bf16.mxu0 0
  %2670 = vmatpush1.bf16.msra.mxu0 %v2173
  %2671 = vmatprep.subr.bf16.mxu0 0
  %2672 = vmatpush1.bf16.msra.mxu0 %v2174
  %2673 = vmatprep.subr.bf16.mxu0 0
  %2674 = vmatpush1.bf16.msra.mxu0 %v2175
  %2675 = vmatprep.subr.bf16.mxu0 0
  %2676 = vmatpush1.bf16.msra.mxu0 %v2176
  %2677 = vmatprep.subr.bf16.mxu0 0
  %2678 = vmatpush1.bf16.msra.mxu0 %v2177
  %2679 = vmatprep.subr.bf16.mxu0 0
  %2680 = vmatpush1.bf16.msra.mxu0 %v2178
  %2681 = vmatprep.subr.bf16.mxu0 0
  %2682 = vmatpush1.bf16.msra.mxu0 %v2179
  %2683 = vmatprep.subr.bf16.mxu0 0
  %2684 = vmatpush1.bf16.msra.mxu0 0
  %2685 = vmatprep.subr.bf16.mxu0 0
  %2686 = vmatpush1.bf16.msra.mxu0 0
  %2687 = vmatprep.subr.bf16.mxu0 0
  %2688 = vmatpush1.bf16.msra.mxu0 0
  %2689 = vmatprep.subr.bf16.mxu0 0
  %2690 = vmatpush1.bf16.msra.mxu0 0
  %2691 = vmatprep.subr.bf16.mxu0 0
  %2692 = vmatpush1.bf16.msra.mxu0 0
  %2693 = vmatprep.subr.bf16.mxu0 0
  %2694 = vmatpush1.bf16.msra.mxu0 0
  %2695 = vmatprep.subr.bf16.mxu0 0
  %2696 = vmatpush1.bf16.msra.mxu0 0
  %2697 = vmatprep.subr.bf16.mxu0 0
  %2698 = vmatpush1.bf16.msra.mxu0 0
  %2699 = vmatprep.mubr.bf16.mxu0 0
  %2700 = vmatmul.mubr.bf16.gmra.mrb[0].mxu0 %v2663
  %v2701 = vpop.f32.mrb[0].mxu0
  %v2702 = vadd.f32 0.0, %v2701
  %v2703 = vpop.f32.mrb[0].mxu0
  %v2704 = vpop.f32.mrb[0].mxu0
  %v2705 = vadd.f32 0.0, %v2704
  %v2706 = vpop.f32.mrb[0].mxu0
  %2707 = vmatprep.mubr.bf16.mxu0 0
  %2708 = vmatmul.mubr.bf16.gmra.mrb[0].mxu0 %v2664
  %v2709 = vpop.f32.mrb[0].mxu0
  %v2710 = vadd.f32 0.0, %v2709
  %v2711 = vpop.f32.mrb[0].mxu0
  %v2712 = vpop.f32.mrb[0].mxu0
  %v2713 = vadd.f32 0.0, %v2712
  %v2714 = vpop.f32.mrb[0].mxu0
  %2715 = vmatprep.mubr.bf16.mxu0 0
  %2716 = vmatmul.mubr.bf16.gmra.mrb[0].mxu0 %v2665
  %v2717 = vpop.f32.mrb[0].mxu0
  %v2718 = vadd.f32 0.0, %v2717
  %v2719 = vpop.f32.mrb[0].mxu0
  %v2720 = vpop.f32.mrb[0].mxu0
  %v2721 = vadd.f32 0.0, %v2720
  %v2722 = vpop.f32.mrb[0].mxu0
  %2723 = vmatprep.mubr.bf16.mxu0 0
  %2724 = vmatmul.mubr.bf16.gmra.mrb[0].mxu0 %v2666
  %v2725 = vpop.f32.mrb[0].mxu0
  %v2726 = vadd.f32 0.0, %v2725
  %v2727 = vpop.f32.mrb[0].mxu0
  %v2728 = vpop.f32.mrb[0].mxu0
  %v2729 = vadd.f32 0.0, %v2728
  %v2730 = vpop.f32.mrb[0].mxu0
  %2731 = vdwg.mxu0
  %2732 = vmatprep.subr.bf16.mxu0 0
  %2733 = vmatpush1.bf16.msra.mxu0 %v2172
  %2734 = vmatprep.subr.bf16.mxu0 0
  %2735 = vmatpush1.bf16.msra.mxu0 %v2173
  %2736 = vmatprep.subr.bf16.mxu0 0
  %2737 = vmatpush1.bf16.msra.mxu0 %v2174
  %2738 = vmatprep.subr.bf16.mxu0 0
  %2739 = vmatpush1.bf16.msra.mxu0 %v2175
  %2740 = vmatprep.subr.bf16.mxu0 0
  %2741 = vmatpush1.bf16.msra.mxu0 %v2176
  %2742 = vmatprep.subr.bf16.mxu0 0
  %2743 = vmatpush1.bf16.msra.mxu0 %v2177
  %2744 = vmatprep.subr.bf16.mxu0 0
  %2745 = vmatpush1.bf16.msra.mxu0 %v2178
  %2746 = vmatprep.subr.bf16.mxu0 0
  %2747 = vmatpush1.bf16.msra.mxu0 %v2179
  %2748 = vmatprep.subr.bf16.mxu0 0
  %2749 = vmatpush1.bf16.msra.mxu0 0
  %2750 = vmatprep.subr.bf16.mxu0 0
  %2751 = vmatpush1.bf16.msra.mxu0 0
  %2752 = vmatprep.subr.bf16.mxu0 0
  %2753 = vmatpush1.bf16.msra.mxu0 0
  %2754 = vmatprep.subr.bf16.mxu0 0
  %2755 = vmatpush1.bf16.msra.mxu0 0
  %2756 = vmatprep.subr.bf16.mxu0 0
  %2757 = vmatpush1.bf16.msra.mxu0 0
  %2758 = vmatprep.subr.bf16.mxu0 0
  %2759 = vmatpush1.bf16.msra.mxu0 0
  %2760 = vmatprep.subr.bf16.mxu0 0
  %2761 = vmatpush1.bf16.msra.mxu0 0
  %2762 = vmatprep.subr.bf16.mxu0 0
  %2763 = vmatpush1.bf16.msra.mxu0 0
  %2764 = vmatprep.mubr.bf16.mxu0 0
  %2765 = vmatmul.mubr.bf16.gmra.mrb[0].mxu0 %v2643
  %v2766 = vpop.f32.mrb[0].mxu0
  %v2767 = vadd.f32 %v2702, %v2766
  %v2768 = vpop.f32.mrb[0].mxu0
  %v2769 = vpop.f32.mrb[0].mxu0
  %v2770 = vadd.f32 %v2705, %v2769
  %v2771 = vpop.f32.mrb[0].mxu0
  %2772 = vmatprep.mubr.bf16.mxu0 0
  %2773 = vmatmul.mubr.bf16.gmra.mrb[0].mxu0 %v2644
  %v2774 = vpop.f32.mrb[0].mxu0
  %v2775 = vadd.f32 %v2710, %v2774
  %v2776 = vpop.f32.mrb[0].mxu0
  %v2777 = vpop.f32.mrb[0].mxu0
  %v2778 = vadd.f32 %v2713, %v2777
  %v2779 = vpop.f32.mrb[0].mxu0
  %2780 = vmatprep.mubr.bf16.mxu0 0
  %2781 = vmatmul.mubr.bf16.gmra.mrb[0].mxu0 %v2645
  %v2782 = vpop.f32.mrb[0].mxu0
  %v2783 = vadd.f32 %v2718, %v2782
  %v2784 = vpop.f32.mrb[0].mxu0
  %v2785 = vpop.f32.mrb[0].mxu0
  %v2786 = vadd.f32 %v2721, %v2785
  %v2787 = vpop.f32.mrb[0].mxu0
  %2788 = vmatprep.mubr.bf16.mxu0 0
  %2789 = vmatmul.mubr.bf16.gmra.mrb[0].mxu0 %v2646
  %v2790 = vpop.f32.mrb[0].mxu0
  %v2791 = vadd.f32 %v2726, %v2790
  %v2792 = vpop.f32.mrb[0].mxu0
  %v2793 = vpop.f32.mrb[0].mxu0
  %v2794 = vadd.f32 %v2729, %v2793
  %v2795 = vpop.f32.mrb[0].mxu0
  %2796 = vdwg.mxu0
  %v2797 = vadd.f32 %v2407, %v2767
  %v2798 = vadd.f32 %v2410, %v2770
  %v2799 = vadd.f32 %v2415, %v2775
  %v2800 = vadd.f32 %v2418, %v2778
  %v2801 = vadd.f32 %v2423, %v2783
  %v2802 = vadd.f32 %v2426, %v2786
  %v2803 = vadd.f32 %v2431, %v2791
  %v2804 = vadd.f32 %v2434, %v2794
  %v2805 = vmax.f32 %v2797, %v2798
  %v2806 = vmax.f32 %v2805, %v2799
  %v2807 = vmax.f32 %v2806, %v2800
  %v2808 = vmax.f32 %v2807, %v2801
  %v2809 = vmax.f32 %v2808, %v2802
  %v2810 = vmax.f32 %v2809, %v2803
  %v2811 = vmax.f32 %v2810, %v2804
  %v2812 = vsub.f32 %v2797, %v2811
  %v2813 = vmul.f32 %v2812, 1.442695
  %v2814 = vpow.pop %v2813
  %v2815 = vsub.f32 %v2798, %v2811
  %v2816 = vmul.f32 %v2815, 1.442695
  %v2817 = vpow.pop %v2816
  %v2818 = vsub.f32 %v2799, %v2811
  %v2819 = vmul.f32 %v2818, 1.442695
  %v2820 = vpow.pop %v2819
  %v2821 = vsub.f32 %v2800, %v2811
  %v2822 = vmul.f32 %v2821, 1.442695
  %v2823 = vpow.pop %v2822
  %v2824 = vsub.f32 %v2801, %v2811
  %v2825 = vmul.f32 %v2824, 1.442695
  %v2826 = vpow.pop %v2825
  %v2827 = vsub.f32 %v2802, %v2811
  %v2828 = vmul.f32 %v2827, 1.442695
  %v2829 = vpow.pop %v2828
  %v2830 = vsub.f32 %v2803, %v2811
  %v2831 = vmul.f32 %v2830, 1.442695
  %v2832 = vpow.pop %v2831
  %v2833 = vsub.f32 %v2804, %v2811
  %v2834 = vmul.f32 %v2833, 1.442695
  %v2835 = vpow.pop %v2834
  %v2836 = vadd.f32 %v2814, %v2817
  %v2837 = vadd.f32 %v2836, %v2820
  %v2838 = vadd.f32 %v2837, %v2823
  %v2839 = vadd.f32 %v2838, %v2826
  %v2840 = vadd.f32 %v2839, %v2829
  %v2841 = vadd.f32 %v2840, %v2832
  %v2842 = vadd.f32 %v2841, %v2835
  %v2843 = vrcp.pop %v2842
  %v2844 = vmul.f32 %v2842, %v2843
  %v2845 = vsub.f32 2.0, %v2844
  %v2846 = vmul.f32 %v2843, %v2845
  %v2847 = vmul.f32 %v2814, %v2846
  %v2848 = vmul.f32 %v2847, %v2483
  %v2849 = vmul.f32 %v2817, %v2846
  %v2850 = vmul.f32 %v2849, %v2489
  %v2851 = vmul.f32 %v2820, %v2846
  %v2852 = vmul.f32 %v2851, %v2495
  %v2853 = vmul.f32 %v2823, %v2846
  %v2854 = vmul.f32 %v2853, %v2501
  %v2855 = vmul.f32 %v2826, %v2846
  %v2856 = vmul.f32 %v2855, %v2507
  %v2857 = vmul.f32 %v2829, %v2846
  %v2858 = vmul.f32 %v2857, %v2513
  %v2859 = vmul.f32 %v2832, %v2846
  %v2860 = vmul.f32 %v2859, %v2519
  %v2861 = vmul.f32 %v2835, %v2846
  %v2862 = vmul.f32 %v2861, %v2525
  %v2863 = vmul.f32 %v2848, %v2075
  %v2864 = vmul.f32 %v2850, %v2076
  %v2865 = vadd.f32 %v2863, %v2864
  %v2866 = vmul.f32 %v2852, %v2077
  %v2867 = vadd.f32 %v2865, %v2866
  %v2868 = vmul.f32 %v2854, %v2078
  %v2869 = vadd.f32 %v2867, %v2868
  %v2870 = vmul.f32 %v2856, %v2079
  %v2871 = vadd.f32 %v2869, %v2870
  %v2872 = vmul.f32 %v2858, %v2080
  %v2873 = vadd.f32 %v2871, %v2872
  %v2874 = vmul.f32 %v2860, %v2081
  %v2875 = vadd.f32 %v2873, %v2874
  %v2876 = vmul.f32 %v2862, %v2082
  %v2877 = vadd.f32 %v2875, %v2876
  %v2878 = vmul.f32 %v2877, %v2877
  %v2879 = vpack.c.bf16 %v2878, %v2878
  %v2880 = vunpack.c.l.bf16 %v2879
  %v2881 = vsub.f32 %v2878, %v2880
  %v2882 = vpack.c.bf16 %v2881, %v2881
  %2883 = vmatprep.subr.bf16.mxu0 0
  %2884 = vmatpush1.bf16.msra.mxu0 %v2172
  %2885 = vmatprep.subr.bf16.mxu0 0
  %2886 = vmatpush1.bf16.msra.mxu0 %v2173
  %2887 = vmatprep.subr.bf16.mxu0 0
  %2888 = vmatpush1.bf16.msra.mxu0 %v2174
  %2889 = vmatprep.subr.bf16.mxu0 0
  %2890 = vmatpush1.bf16.msra.mxu0 %v2175
  %2891 = vmatprep.subr.bf16.mxu0 0
  %2892 = vmatpush1.bf16.msra.mxu0 %v2176
  %2893 = vmatprep.subr.bf16.mxu0 0
  %2894 = vmatpush1.bf16.msra.mxu0 %v2177
  %2895 = vmatprep.subr.bf16.mxu0 0
  %2896 = vmatpush1.bf16.msra.mxu0 %v2178
  %2897 = vmatprep.subr.bf16.mxu0 0
  %2898 = vmatpush1.bf16.msra.mxu0 %v2179
  %2899 = vmatprep.subr.bf16.mxu0 0
  %2900 = vmatpush1.bf16.msra.mxu0 0
  %2901 = vmatprep.subr.bf16.mxu0 0
  %2902 = vmatpush1.bf16.msra.mxu0 0
  %2903 = vmatprep.subr.bf16.mxu0 0
  %2904 = vmatpush1.bf16.msra.mxu0 0
  %2905 = vmatprep.subr.bf16.mxu0 0
  %2906 = vmatpush1.bf16.msra.mxu0 0
  %2907 = vmatprep.subr.bf16.mxu0 0
  %2908 = vmatpush1.bf16.msra.mxu0 0
  %2909 = vmatprep.subr.bf16.mxu0 0
  %2910 = vmatpush1.bf16.msra.mxu0 0
  %2911 = vmatprep.subr.bf16.mxu0 0
  %2912 = vmatpush1.bf16.msra.mxu0 0
  %2913 = vmatprep.subr.bf16.mxu0 0
  %2914 = vmatpush1.bf16.msra.mxu0 0
  %2915 = vmatprep.mubr.bf16.mxu0 0
  %2916 = vmatmul.mubr.bf16.gmra.mrb[0].mxu0 %v2882
  %v2917 = vpop.f32.mrb[0].mxu0
  %v2918 = vadd.f32 0.0, %v2917
  %v2919 = vpop.f32.mrb[0].mxu0
  %v2920 = vpop.f32.mrb[0].mxu0
  %v2921 = vpop.f32.mrb[0].mxu0
  %2922 = vdwg.mxu0
  %2923 = vmatprep.subr.bf16.mxu0 0
  %2924 = vmatpush1.bf16.msra.mxu0 %v2172
  %2925 = vmatprep.subr.bf16.mxu0 0
  %2926 = vmatpush1.bf16.msra.mxu0 %v2173
  %2927 = vmatprep.subr.bf16.mxu0 0
  %2928 = vmatpush1.bf16.msra.mxu0 %v2174
  %2929 = vmatprep.subr.bf16.mxu0 0
  %2930 = vmatpush1.bf16.msra.mxu0 %v2175
  %2931 = vmatprep.subr.bf16.mxu0 0
  %2932 = vmatpush1.bf16.msra.mxu0 %v2176
  %2933 = vmatprep.subr.bf16.mxu0 0
  %2934 = vmatpush1.bf16.msra.mxu0 %v2177
  %2935 = vmatprep.subr.bf16.mxu0 0
  %2936 = vmatpush1.bf16.msra.mxu0 %v2178
  %2937 = vmatprep.subr.bf16.mxu0 0
  %2938 = vmatpush1.bf16.msra.mxu0 %v2179
  %2939 = vmatprep.subr.bf16.mxu0 0
  %2940 = vmatpush1.bf16.msra.mxu0 0
  %2941 = vmatprep.subr.bf16.mxu0 0
  %2942 = vmatpush1.bf16.msra.mxu0 0
  %2943 = vmatprep.subr.bf16.mxu0 0
  %2944 = vmatpush1.bf16.msra.mxu0 0
  %2945 = vmatprep.subr.bf16.mxu0 0
  %2946 = vmatpush1.bf16.msra.mxu0 0
  %2947 = vmatprep.subr.bf16.mxu0 0
  %2948 = vmatpush1.bf16.msra.mxu0 0
  %2949 = vmatprep.subr.bf16.mxu0 0
  %2950 = vmatpush1.bf16.msra.mxu0 0
  %2951 = vmatprep.subr.bf16.mxu0 0
  %2952 = vmatpush1.bf16.msra.mxu0 0
  %2953 = vmatprep.subr.bf16.mxu0 0
  %2954 = vmatpush1.bf16.msra.mxu0 0
  %2955 = vmatprep.mubr.bf16.mxu0 0
  %2956 = vmatmul.mubr.bf16.gmra.mrb[0].mxu0 %v2879
  %v2957 = vpop.f32.mrb[0].mxu0
  %v2958 = vadd.f32 %v2918, %v2957
  %v2959 = vpop.f32.mrb[0].mxu0
  %v2960 = vpop.f32.mrb[0].mxu0
  %v2961 = vpop.f32.mrb[0].mxu0
  %2962 = vdwg.mxu0
  %v2963 = vadd.f32 %v2958, 1.0
  %v2964 = vrcp.pop %v2963
  %v2965 = vmul.f32 %v2958, %v2964
  %v2966 = vadd.f32 %v2958, 1e-09
  %v2967 = vrsqrt.pop %v2966
  %v2968 = vmul.f32 %v2965, %v2967
  %v2969 = vmul.f32 %v2968, %v2877
  %2970 = vst [vmem:[%s5] sm:$0xff] %v2969
  // Predicated region
  $region22: #{capsule_network.1} parent=0 // pred_check
    _
  $region23: #{capsule_network.1} parent=0 // pred_check_branch
    %2972 = sbr.rel (0) target = $region25
  $region24: #{capsule_network.1} parent=0 // pred_region
    _
  $region25: #{capsule_network.1} parent=0 // pred_fallthru
    _
  // Predicated region
  $region26: #{capsule_network.1} parent=0 // pred_check
    _
  $region27: #{capsule_network.1} parent=0 // pred_check_branch
    %2974 = sbr.rel (0) target = $region29
  $region28: #{capsule_network.1} parent=0 // pred_region
    _
  $region29: #{capsule_network.1} parent=0 // pred_fallthru
    _

</llo_original>
